<compile_context>
chip_gen: v7x
topology: tpu7x:2x2x1
jax: 0.10.0
libtpu: 0.0.40
codegen_flags: <defaults>
</compile_context>

<pallas_src>
import functools
import math

import jax
import jax.numpy as jnp
from jax import lax
from jax.experimental import pallas as pl
from jax.experimental.pallas import tpu as pltpu

_LANE = 128
_HPAD = 8                          # sublane-padded head axis
_VMEM_LIMIT = 32 * 1024 * 1024     # fits v5e/v6e (128 MiB) and v7x (64 MiB)


def _round_up(x, m):
    return (x + m - 1) // m * m


# ----------------------------------------------------------------------------
# Stage 1: fc projection + folded attention-logit projections (row-tiled)
# ----------------------------------------------------------------------------
def _gat_project_kernel(x_ref, w_ref, alT_ref, ar_ref,
                        feat_ref, elt_ref, er_ref):
    # x:    (TM, Dpad)       padded node features (pad lanes are zero)
    # w:    (Dpad, HFpad)    zero-padded fc weight
    # alT:  (HPAD, Dpad)     attn_l folded into W, transposed (head-major rows)
    # ar:   (Dpad, HPAD)     attn_r folded into W
    # feat: (TM, HFpad)      projected source/dst features
    # elt:  (HPAD, TM)       el laid out head-major (row per head, lane = node)
    # er:   (TM, HPAD)       er laid out node-major
    x = x_ref[...]
    feat_ref[...] = jnp.dot(x, w_ref[...], preferred_element_type=jnp.float32)
    er_ref[...] = jnp.dot(x, ar_ref[...], preferred_element_type=jnp.float32)
    # (HPAD, Dpad) . (TM, Dpad)^T  ->  (HPAD, TM)   (A @ B^T, contract Dpad)
    elt_ref[...] = lax.dot_general(
        alT_ref[...], x, (((1,), (1,)), ((), ())),
        preferred_element_type=jnp.float32)


# ----------------------------------------------------------------------------
# Stage 2: masked edge softmax + attention-weighted aggregation (dst-tiled)
# ----------------------------------------------------------------------------
def _gat_attention_kernel(adj_ref, feat_ref, elt_ref, er_ref, b_ref, out_ref,
                          *, num_heads, out_feats, negative_slope,
                          apply_relu, concat_out):
    # adj:  (TM, N) int8     adj[dst, src] != 0 iff edge src -> dst
    # feat: (N, HFpad)       projected features of ALL source nodes
    # elt:  (HPAD, N)        <feat_src, attn_l> per head (row per head)
    # er:   (TM, HPAD)       <feat_dst, attn_r> per head for this dst tile
    # bias: (1, HFpad)
    # out:  (TM, OUTpad)
    H, F = num_heads, out_feats
    hf = H * F
    tm = out_ref.shape[0]
    out_pad = out_ref.shape[1]

    edge = adj_ref[...] != 0                       # (TM, N) bool
    bias = b_ref[...]                              # (1, HFpad)
    neg_big = jnp.float32(-1e30)
    neg_slope = jnp.float32(negative_slope)

    def head_out(h):
        fh = feat_ref[:, h * F:(h + 1) * F]        # (N, F) source features
        el_row = elt_ref[h:h + 1, :]               # (1, N)
        er_col = er_ref[:, h:h + 1]                # (TM, 1)
        s = er_col + el_row                        # (TM, N) raw logits
        s = jnp.where(s >= 0.0, s, neg_slope * s)  # LeakyReLU
        s = jnp.where(edge, s, neg_big)            # mask non-edges
        m = jnp.max(s, axis=-1, keepdims=True)
        p = jnp.exp(s - m)                         # masked entries underflow->0
        denom = jnp.sum(p, axis=-1, keepdims=True)
        # Aggregate un-normalized on the MXU, then rescale (N*F VPU work
        # instead of N*N); reciprocal on the (otherwise idle) EUP slot.
        o = jnp.dot(p, fh, preferred_element_type=jnp.float32)   # (TM, F)
        return o * pl.reciprocal(denom, approx=True)

    if concat_out:
        if out_pad > hf:   # zero the lane padding once so layers can chain
            out_ref[:, hf:] = jnp.zeros((tm, out_pad - hf), out_ref.dtype)
        for h in range(H):  # H is small & static -> unrolled; direct stores
            o = head_out(h) + bias[:, h * F:(h + 1) * F]
            if apply_relu:
                o = jnp.maximum(o, 0.0)
            out_ref[:, h * F:(h + 1) * F] = o.astype(out_ref.dtype)
    else:
        acc = jnp.zeros((tm, F), jnp.float32)
        for h in range(H):
            acc = acc + head_out(h) + bias[:, h * F:(h + 1) * F]
        rst = acc * jnp.float32(1.0 / H)           # mean over heads
        if apply_relu:
            rst = jnp.maximum(rst, 0.0)
        if out_pad > F:
            out_ref[:, F:] = jnp.zeros((tm, out_pad - F), out_ref.dtype)
        out_ref[:, :F] = rst.astype(out_ref.dtype)


# ----------------------------------------------------------------------------
# One GATConv layer (feat_drop / attn_drop identity; residual/norm disabled)
# ----------------------------------------------------------------------------
def gat_conv(x_pad, in_width, w, attn_l, attn_r, bias, adj, *, num_heads,
             out_feats, negative_slope=0.2, apply_relu=False, concat_out=True):
    N = adj.shape[0]
    H, F = num_heads, out_feats
    HF = H * F
    d_pad = x_pad.shape[1]
    hf_pad = _round_up(HF, _LANE)
    out_width = HF if concat_out else F
    out_pad = _round_up(out_width, _LANE)
    f32 = jnp.float32

    tm = N if N < _LANE else _LANE
    assert N % tm == 0, "N must be < 128 or a multiple of 128"
    grid = (N // tm,)

    # Zero-padded fc weight / bias: pad rows/cols are exact zeros, so padded
    # activations can be chained between layers without slicing.
    w_pad = jnp.zeros((d_pad, hf_pad), f32).at[:in_width, :HF].set(w)
    bias_pad = jnp.zeros((1, hf_pad), f32).at[:, :HF].set(bias)
    # Fold attn_l / attn_r into the fc weight:  el = x @ a_l,  er = x @ a_r.
    w3 = w.reshape(in_width, H, F)
    a_l = jnp.einsum("dhf,hf->dh", w3, attn_l)              # (Din, H)
    a_r = jnp.einsum("dhf,hf->dh", w3, attn_r)              # (Din, H)
    a_lT = jnp.zeros((_HPAD, d_pad), f32).at[:H, :in_width].set(a_l.T)
    a_r_pad = jnp.zeros((d_pad, _HPAD), f32).at[:in_width, :H].set(a_r)

    compiler_params = pltpu.CompilerParams(
        dimension_semantics=("parallel",),
        vmem_limit_bytes=_VMEM_LIMIT)

    # ---- stage 1: projection ------------------------------------------------
    proj_cost = pl.CostEstimate(
        flops=2 * N * d_pad * (hf_pad + 2 * _HPAD),
        transcendentals=0,
        bytes_accessed=4 * (N * d_pad + d_pad * hf_pad + 3 * d_pad * _HPAD
                            + N * hf_pad + 2 * N * _HPAD))
    feat, el_t, er = pl.pallas_call(
        _gat_project_kernel,
        grid=grid,
        in_specs=[
            pl.BlockSpec((tm, d_pad), lambda i: (i, 0)),
            pl.BlockSpec((d_pad, hf_pad), lambda i: (0, 0)),
            pl.BlockSpec((_HPAD, d_pad), lambda i: (0, 0)),
            pl.BlockSpec((d_pad, _HPAD), lambda i: (0, 0)),
        ],
        out_specs=(
            pl.BlockSpec((tm, hf_pad), lambda i: (i, 0)),
            pl.BlockSpec((_HPAD, tm), lambda i: (0, i)),
            pl.BlockSpec((tm, _HPAD), lambda i: (i, 0)),
        ),
        out_shape=(
            jax.ShapeDtypeStruct((N, hf_pad), f32),
            jax.ShapeDtypeStruct((_HPAD, N), f32),
            jax.ShapeDtypeStruct((N, _HPAD), f32),
        ),
        compiler_params=compiler_params,
        cost_estimate=proj_cost,
    )(x_pad, w_pad, a_lT, a_r_pad)

    # ---- stage 2: edge softmax + aggregation --------------------------------
    attn_cost = pl.CostEstimate(
        flops=2 * H * N * N * F + 8 * H * N * N,
        transcendentals=H * N * N,
        bytes_accessed=N * N + 4 * (N * hf_pad + 2 * N * _HPAD
                                    + hf_pad + N * out_pad))
    kernel = functools.partial(
        _gat_attention_kernel, num_heads=H, out_feats=F,
        negative_slope=negative_slope, apply_relu=apply_relu,
        concat_out=concat_out)
    out = pl.pallas_call(
        kernel,
        grid=grid,
        in_specs=[
            pl.BlockSpec((tm, N), lambda i: (i, 0)),       # adj tile (int8)
            pl.BlockSpec((N, hf_pad), lambda i: (0, 0)),   # all source feats
            pl.BlockSpec((_HPAD, N), lambda i: (0, 0)),    # el (head-major)
            pl.BlockSpec((tm, _HPAD), lambda i: (i, 0)),   # er dst tile
            pl.BlockSpec((1, hf_pad), lambda i: (0, 0)),   # bias
        ],
        out_specs=pl.BlockSpec((tm, out_pad), lambda i: (i, 0)),
        out_shape=jax.ShapeDtypeStruct((N, out_pad), f32),
        compiler_params=compiler_params,
        cost_estimate=attn_cost,
    )(adj, feat, el_t, er, bias_pad)

    return out, out_width


# ----------------------------------------------------------------------------
# GAT model: stack of GATConv layers
# ----------------------------------------------------------------------------
def _xavier_normal(key, shape, fan_in, fan_out, gain):
    std = gain * math.sqrt(2.0 / (fan_in + fan_out))
    return std * jax.random.normal(key, shape, dtype=jnp.float32)


def init_gat_params(key, in_dim, num_hidden, out_dim, num_layers, nhead,
                    nhead_out):
    gain = math.sqrt(2.0)  # calculate_gain('relu')
    if num_layers == 1:
        layer_dims = [(in_dim, out_dim, nhead_out)]
    else:
        layer_dims = [(in_dim, num_hidden, nhead)]
        for _ in range(1, num_layers - 1):
            layer_dims.append((num_hidden * nhead, num_hidden, nhead))
        layer_dims.append((num_hidden * nhead, out_dim, nhead_out))

    params, cfg = [], []
    for (din, dout, h) in layer_dims:
        key, k_w, k_al, k_ar = jax.random.split(key, 4)
        hf = h * dout
        # torch Linear weight is (hf, din); stored transposed (din, hf)
        w = _xavier_normal(k_w, (din, hf), fan_in=din, fan_out=hf, gain=gain)
        attn_l = _xavier_normal(k_al, (h, dout), fan_in=h * dout,
                                fan_out=dout, gain=gain)
        attn_r = _xavier_normal(k_ar, (h, dout), fan_in=h * dout,
                                fan_out=dout, gain=gain)
        bias = jnp.zeros((1, hf), dtype=jnp.float32)  # nn.init.constant_(0)
        params.append(dict(w=w, attn_l=attn_l, attn_r=attn_r, bias=bias))
        cfg.append((h, dout))
    return params, tuple(cfg)


def gat_forward(params, adj, x, *, layer_cfg, negative_slope=0.2,
                concat_out=True):
    """GAT.forward: sequential GATConv layers (eval mode).

    Intermediate layers use ReLU (create_activation('relu')); the last layer
    has no activation/norm/residual (encoding=False).  feat_drop/attn_drop=0.
    """
    N, in_dim = x.shape
    d_pad = _round_up(in_dim, _LANE)
    h = jnp.zeros((N, d_pad), jnp.float32).at[:, :in_dim].set(x)
    width = in_dim
    n_layers = len(params)
    for l, (p, (nh, dout)) in enumerate(zip(params, layer_cfg)):
        is_last = (l == n_layers - 1)
        h, width = gat_conv(h, width, p["w"], p["attn_l"], p["attn_r"],
                            p["bias"], adj,
                            num_heads=nh, out_feats=dout,
                            negative_slope=negative_slope,
                            apply_relu=not is_last,
                            concat_out=concat_out)
    return h[:, :width]  # head = nn.Identity(); drop lane padding once


# ----------------------------------------------------------------------------
# main
# ----------------------------------------------------------------------------
if __name__ == "__main__":
    key = jax.random.PRNGKey(0)

    # GraphMAE2-style encoder config (concat_out=True so layer dims compose).
    N = 256            # number of graph nodes (multiple of the 128 dst tile)
    in_dim = 16
    num_hidden = 32
    out_dim = 16
    num_layers = 2
    nhead = 2
    nhead_out = 1
    negative_slope = 0.2

    key, k_feat, k_adj, k_param = jax.random.split(key, 4)

    # Node features (N, in_dim)
    x = jax.random.normal(k_feat, (N, in_dim), dtype=jnp.float32)

    # Dense int8 adjacency mask adj[dst, src]: ring + random edges + self-loops
    eye = jnp.eye(N, dtype=jnp.float32)
    ring = jnp.roll(eye, shift=1, axis=0)                 # u -> u+1
    rnd = jax.random.bernoulli(k_adj, p=0.05, shape=(N, N)).astype(jnp.float32)
    adj = ((eye + ring + rnd) > 0).astype(jnp.int8)       # self-loops => in-deg>=1

    params, cfg = init_gat_params(k_param, in_dim, num_hidden, out_dim,
                                  num_layers, nhead, nhead_out)

    # TODO(synk): dropout (feat_drop/attn_drop), residual and norm are identity
    # or disabled in this config and are not implemented in the kernels.
    fwd = jax.jit(functools.partial(gat_forward, layer_cfg=cfg,
                                    negative_slope=negative_slope,
                                    concat_out=True))
    out = jax.block_until_ready(fwd(params, adj, x))

    assert out.shape == (N, nhead_out * out_dim), out.shape
    assert bool(jnp.all(jnp.isfinite(out)))
    print("KERNEL_OK")
</pallas_src>

<mosaic_0001>
module attributes {stable_mosaic.version = 11 : i64} {
  func.func @_gat_project_kernel(%arg0: i32, %arg1: memref<128x128xf32, #tpu.memory_space<vmem>>, %arg2: memref<128x128xf32, #tpu.memory_space<vmem>>, %arg3: memref<8x128xf32, #tpu.memory_space<vmem>>, %arg4: memref<128x8xf32, #tpu.memory_space<vmem>>, %arg5: memref<128x128xf32, #tpu.memory_space<vmem>>, %arg6: memref<8x128xf32, #tpu.memory_space<vmem>>, %arg7: memref<128x8xf32, #tpu.memory_space<vmem>>) attributes {dimension_semantics = [#tpu.dimension_semantics<parallel>], iteration_bounds = array<i64: 2>, scalar_prefetch = 0 : i64, scratch_operands = 0 : i64, tpu.core_type = #tpu.core_type<tc>, window_params = [{transform_indices = @transform_0, window_bounds = array<i64: 128, 128>}, {pipeline_mode = #tpu.pipeline_mode<synchronous>, transform_indices = @transform_1, window_bounds = array<i64: 128, 128>}, {pipeline_mode = #tpu.pipeline_mode<synchronous>, transform_indices = @transform_2, window_bounds = array<i64: 8, 128>}, {pipeline_mode = #tpu.pipeline_mode<synchronous>, transform_indices = @transform_3, window_bounds = array<i64: 128, 8>}, {transform_indices = @transform_4, window_bounds = array<i64: 128, 128>}, {transform_indices = @transform_5, window_bounds = array<i64: 8, 128>}, {transform_indices = @transform_6, window_bounds = array<i64: 128, 8>}]} {
    %c0 = arith.constant 0 : index
    %c0_0 = arith.constant 0 : index
    %0 = vector.load %arg1[%c0, %c0_0] : memref<128x128xf32, #tpu.memory_space<vmem>>, vector<128x128xf32>
    %c0_1 = arith.constant 0 : index
    %c0_2 = arith.constant 0 : index
    %1 = vector.load %arg2[%c0_1, %c0_2] : memref<128x128xf32, #tpu.memory_space<vmem>>, vector<128x128xf32>
    %cst = arith.constant dense<0.000000e+00> : vector<128x128xf32>
    %2 = tpu.matmul %0, %1, %cst {dimension_numbers = #tpu.dot_dimension_numbers<[1], [0], [0], [1], [0, 0, 1, 1], [], []>} : vector<128x128xf32>, vector<128x128xf32>, vector<128x128xf32> -> vector<128x128xf32>
    %c0_3 = arith.constant 0 : index
    %c0_4 = arith.constant 0 : index
    %3 = vector.load %arg5[%c0_3, %c0_4] : memref<128x128xf32, #tpu.memory_space<vmem>>, vector<128x128xf32>
    tpu.vector_store %arg5[%c0_3, %c0_4], %2 {strides = array<i32>} : memref<128x128xf32, #tpu.memory_space<vmem>>, vector<128x128xf32>,
    %c0_5 = arith.constant 0 : index
    %c0_6 = arith.constant 0 : index
    %4 = vector.load %arg4[%c0_5, %c0_6] : memref<128x8xf32, #tpu.memory_space<vmem>>, vector<128x8xf32>
    %cst_7 = arith.constant dense<0.000000e+00> : vector<128x8xf32>
    %5 = tpu.matmul %0, %4, %cst_7 {dimension_numbers = #tpu.dot_dimension_numbers<[1], [0], [0], [1], [0, 0, 1, 1], [], []>} : vector<128x128xf32>, vector<128x8xf32>, vector<128x8xf32> -> vector<128x8xf32>
    %c0_8 = arith.constant 0 : index
    %c0_9 = arith.constant 0 : index
    %6 = vector.load %arg7[%c0_8, %c0_9] : memref<128x8xf32, #tpu.memory_space<vmem>>, vector<128x8xf32>
    tpu.vector_store %arg7[%c0_8, %c0_9], %5 {strides = array<i32>} : memref<128x8xf32, #tpu.memory_space<vmem>>, vector<128x8xf32>,
    %c0_10 = arith.constant 0 : index
    %c0_11 = arith.constant 0 : index
    %7 = vector.load %arg3[%c0_10, %c0_11] : memref<8x128xf32, #tpu.memory_space<vmem>>, vector<8x128xf32>
    %cst_12 = arith.constant dense<0.000000e+00> : vector<8x128xf32>
    %8 = tpu.matmul %7, %0, %cst_12 {dimension_numbers = #tpu.dot_dimension_numbers<[1], [1], [0], [0], [0, 0, 1, 0], [], []>} : vector<8x128xf32>, vector<128x128xf32>, vector<8x128xf32> -> vector<8x128xf32>
    %c0_13 = arith.constant 0 : index
    %c0_14 = arith.constant 0 : index
    %9 = vector.load %arg6[%c0_13, %c0_14] : memref<8x128xf32, #tpu.memory_space<vmem>>, vector<8x128xf32>
    tpu.vector_store %arg6[%c0_13, %c0_14], %8 {strides = array<i32>} : memref<8x128xf32, #tpu.memory_space<vmem>>, vector<8x128xf32>,
    return
  }
  func.func @transform_0(%arg0: i32) -> (i32, i32) {
    %c0_i32 = arith.constant 0 : i32
    %c0_i32_0 = arith.constant 0 : i32
    return %arg0, %c0_i32 : i32, i32
  }
  func.func @transform_1(%arg0: i32) -> (i32, i32) {
    %c0_i32 = arith.constant 0 : i32
    %c0_i32_0 = arith.constant 0 : i32
    %c0_i32_1 = arith.constant 0 : i32
    return %c0_i32, %c0_i32_0 : i32, i32
  }
  func.func @transform_2(%arg0: i32) -> (i32, i32) {
    %c0_i32 = arith.constant 0 : i32
    %c0_i32_0 = arith.constant 0 : i32
    %c0_i32_1 = arith.constant 0 : i32
    return %c0_i32, %c0_i32_0 : i32, i32
  }
  func.func @transform_3(%arg0: i32) -> (i32, i32) {
    %c0_i32 = arith.constant 0 : i32
    %c0_i32_0 = arith.constant 0 : i32
    %c0_i32_1 = arith.constant 0 : i32
    return %c0_i32, %c0_i32_0 : i32, i32
  }
  func.func @transform_4(%arg0: i32) -> (i32, i32) {
    %c0_i32 = arith.constant 0 : i32
    %c0_i32_0 = arith.constant 0 : i32
    return %arg0, %c0_i32 : i32, i32
  }
  func.func @transform_5(%arg0: i32) -> (i32, i32) {
    %c0_i32 = arith.constant 0 : i32
    %c0_i32_0 = arith.constant 0 : i32
    return %c0_i32, %arg0 : i32, i32
  }
  func.func @transform_6(%arg0: i32) -> (i32, i32) {
    %c0_i32 = arith.constant 0 : i32
    %c0_i32_0 = arith.constant 0 : i32
    return %arg0, %c0_i32 : i32, i32
  }
}

module attributes {stable_mosaic.version = 11 : i64} {
  func.func @_gat_attention_kernel(%arg0: i32, %arg1: memref<128x256xi8, #tpu.memory_space<vmem>>, %arg2: memref<256x128xf32, #tpu.memory_space<vmem>>, %arg3: memref<8x256xf32, #tpu.memory_space<vmem>>, %arg4: memref<128x8xf32, #tpu.memory_space<vmem>>, %arg5: memref<1x128xf32, #tpu.memory_space<vmem>>, %arg6: memref<128x128xf32, #tpu.memory_space<vmem>>) attributes {dimension_semantics = [#tpu.dimension_semantics<parallel>], iteration_bounds = array<i64: 2>, scalar_prefetch = 0 : i64, scratch_operands = 0 : i64, tpu.core_type = #tpu.core_type<tc>, window_params = [{transform_indices = @transform_0, window_bounds = array<i64: 128, 256>}, {pipeline_mode = #tpu.pipeline_mode<synchronous>, transform_indices = @transform_1, window_bounds = array<i64: 256, 128>}, {pipeline_mode = #tpu.pipeline_mode<synchronous>, transform_indices = @transform_2, window_bounds = array<i64: 8, 256>}, {transform_indices = @transform_3, window_bounds = array<i64: 128, 8>}, {pipeline_mode = #tpu.pipeline_mode<synchronous>, transform_indices = @transform_4, window_bounds = array<i64: 1, 128>}, {transform_indices = @transform_5, window_bounds = array<i64: 128, 128>}]} {
    %c0 = arith.constant 0 : index
    %c0_0 = arith.constant 0 : index
    %0 = vector.load %arg1[%c0, %c0_0] : memref<128x256xi8, #tpu.memory_space<vmem>>, vector<128x256xi8>
    %c0_i8 = arith.constant 0 : i8
    %1 = vector.broadcast %c0_i8 : i8 to vector<128x256xi8>
    %2 = arith.cmpi ne, %0, %1 : vector<128x256xi8>
    %c0_1 = arith.constant 0 : index
    %c0_2 = arith.constant 0 : index
    %3 = vector.load %arg5[%c0_1, %c0_2] : memref<1x128xf32, #tpu.memory_space<vmem>>, vector<1x128xf32>
    %cst = arith.constant 0.000000e+00 : f32
    %4 = vector.broadcast %cst : f32 to vector<128x64xf32>
    %c0_3 = arith.constant 0 : index
    %c64 = arith.constant 64 : index
    %5 = vector.load %arg6[%c0_3, %c64] : memref<128x128xf32, #tpu.memory_space<vmem>>, vector<128x64xf32>
    tpu.vector_store %arg6[%c0_3, %c64], %4 {strides = array<i32>} : memref<128x128xf32, #tpu.memory_space<vmem>>, vector<128x64xf32>,
    %c0_4 = arith.constant 0 : index
    %c0_5 = arith.constant 0 : index
    %6 = vector.load %arg2[%c0_4, %c0_5] : memref<256x128xf32, #tpu.memory_space<vmem>>, vector<256x32xf32>
    %c0_6 = arith.constant 0 : index
    %c0_7 = arith.constant 0 : index
    %7 = vector.load %arg3[%c0_6, %c0_7] : memref<8x256xf32, #tpu.memory_space<vmem>>, vector<1x256xf32>
    %c0_8 = arith.constant 0 : index
    %c0_9 = arith.constant 0 : index
    %8 = vector.load %arg4[%c0_8, %c0_9] : memref<128x8xf32, #tpu.memory_space<vmem>>, vector<128x1xf32>
    %9 = vector.broadcast %8 : vector<128x1xf32> to vector<128x256xf32>
    %10 = vector.broadcast %7 : vector<1x256xf32> to vector<128x256xf32>
    %11 = arith.addf %9, %10 : vector<128x256xf32>
    %cst_10 = arith.constant 0.000000e+00 : f32
    %12 = vector.broadcast %cst_10 : f32 to vector<128x256xf32>
    %13 = arith.cmpf oge, %11, %12 : vector<128x256xf32>
    %cst_11 = arith.constant 2.000000e-01 : f32
    %14 = vector.broadcast %cst_11 : f32 to vector<128x256xf32>
    %15 = arith.mulf %14, %11 : vector<128x256xf32>
    %16 = arith.select %13, %11, %15 : vector<128x256xi1>, vector<128x256xf32>
    %cst_12 = arith.constant -1.000000e+30 : f32
    %17 = vector.broadcast %cst_12 : f32 to vector<128x256xf32>
    %18 = arith.select %2, %16, %17 : vector<128x256xi1>, vector<128x256xf32>
    %cst_13 = arith.constant dense<0xFF800000> : vector<128xf32>
    %19 = vector.multi_reduction <maximumf>, %18, %cst_13 [1] : vector<128x256xf32> to vector<128xf32>
    %20 = vector.shape_cast %19 : vector<128xf32> to vector<128x1xf32>
    %21 = vector.broadcast %20 : vector<128x1xf32> to vector<128x256xf32>
    %22 = arith.subf %18, %21 : vector<128x256xf32>
    %23 = math.exp %22 : vector<128x256xf32>
    %cst_14 = arith.constant dense<0.000000e+00> : vector<128xf32>
    %24 = vector.multi_reduction <add>, %23, %cst_14 [1] : vector<128x256xf32> to vector<128xf32>
    %25 = vector.shape_cast %24 : vector<128xf32> to vector<128x1xf32>
    %cst_15 = arith.constant dense<0.000000e+00> : vector<128x32xf32>
    %26 = tpu.matmul %23, %6, %cst_15 {dimension_numbers = #tpu.dot_dimension_numbers<[1], [0], [0], [1], [0, 0, 1, 1], [], []>} : vector<128x256xf32>, vector<256x32xf32>, vector<128x32xf32> -> vector<128x32xf32>
    %27 = tpu.reciprocal %25 {approx = true} : vector<128x1xf32> -> vector<128x1xf32>
    %28 = vector.broadcast %27 : vector<128x1xf32> to vector<128x32xf32>
    %29 = arith.mulf %26, %28 : vector<128x32xf32>
    %30 = vector.extract_strided_slice %3 {offsets = [0, 0], sizes = [1, 32], strides = [1, 1]} : vector<1x128xf32> to vector<1x32xf32>
    %31 = vector.broadcast %30 : vector<1x32xf32> to vector<128x32xf32>
    %32 = arith.addf %29, %31 : vector<128x32xf32>
    %cst_16 = arith.constant 0.000000e+00 : f32
    %33 = vector.broadcast %cst_16 : f32 to vector<128x32xf32>
    %34 = arith.maximumf %32, %33 : vector<128x32xf32>
    %c0_17 = arith.constant 0 : index
    %c0_18 = arith.constant 0 : index
    %35 = vector.load %arg6[%c0_17, %c0_18] : memref<128x128xf32, #tpu.memory_space<vmem>>, vector<128x32xf32>
    tpu.vector_store %arg6[%c0_17, %c0_18], %34 {strides = array<i32>} : memref<128x128xf32, #tpu.memory_space<vmem>>, vector<128x32xf32>,
    %c0_19 = arith.constant 0 : index
    %c32 = arith.constant 32 : index
    %36 = vector.load %arg2[%c0_19, %c32] : memref<256x128xf32, #tpu.memory_space<vmem>>, vector<256x32xf32>
    %c1 = arith.constant 1 : index
    %c0_20 = arith.constant 0 : index
    %37 = vector.load %arg3[%c1, %c0_20] : memref<8x256xf32, #tpu.memory_space<vmem>>, vector<1x256xf32>
    %c0_21 = arith.constant 0 : index
    %c1_22 = arith.constant 1 : index
    %38 = vector.load %arg4[%c0_21, %c1_22] : memref<128x8xf32, #tpu.memory_space<vmem>>, vector<128x1xf32>
    %39 = vector.broadcast %38 : vector<128x1xf32> to vector<128x256xf32>
    %40 = vector.broadcast %37 : vector<1x256xf32> to vector<128x256xf32>
    %41 = arith.addf %39, %40 : vector<128x256xf32>
    %cst_23 = arith.constant 0.000000e+00 : f32
    %42 = vector.broadcast %cst_23 : f32 to vector<128x256xf32>
    %43 = arith.cmpf oge, %41, %42 : vector<128x256xf32>
    %cst_24 = arith.constant 2.000000e-01 : f32
    %44 = vector.broadcast %cst_24 : f32 to vector<128x256xf32>
    %45 = arith.mulf %44, %41 : vector<128x256xf32>
    %46 = arith.select %43, %41, %45 : vector<128x256xi1>, vector<128x256xf32>
    %cst_25 = arith.constant -1.000000e+30 : f32
    %47 = vector.broadcast %cst_25 : f32 to vector<128x256xf32>
    %48 = arith.select %2, %46, %47 : vector<128x256xi1>, vector<128x256xf32>
    %cst_26 = arith.constant dense<0xFF800000> : vector<128xf32>
    %49 = vector.multi_reduction <maximumf>, %48, %cst_26 [1] : vector<128x256xf32> to vector<128xf32>
    %50 = vector.shape_cast %49 : vector<128xf32> to vector<128x1xf32>
    %51 = vector.broadcast %50 : vector<128x1xf32> to vector<128x256xf32>
    %52 = arith.subf %48, %51 : vector<128x256xf32>
    %53 = math.exp %52 : vector<128x256xf32>
    %cst_27 = arith.constant dense<0.000000e+00> : vector<128xf32>
    %54 = vector.multi_reduction <add>, %53, %cst_27 [1] : vector<128x256xf32> to vector<128xf32>
    %55 = vector.shape_cast %54 : vector<128xf32> to vector<128x1xf32>
    %cst_28 = arith.constant dense<0.000000e+00> : vector<128x32xf32>
    %56 = tpu.matmul %53, %36, %cst_28 {dimension_numbers = #tpu.dot_dimension_numbers<[1], [0], [0], [1], [0, 0, 1, 1], [], []>} : vector<128x256xf32>, vector<256x32xf32>, vector<128x32xf32> -> vector<128x32xf32>
    %57 = tpu.reciprocal %55 {approx = true} : vector<128x1xf32> -> vector<128x1xf32>
    %58 = vector.broadcast %57 : vector<128x1xf32> to vector<128x32xf32>
    %59 = arith.mulf %56, %58 : vector<128x32xf32>
    %60 = vector.extract_strided_slice %3 {offsets = [0, 32], sizes = [1, 32], strides = [1, 1]} : vector<1x128xf32> to vector<1x32xf32>
    %61 = vector.broadcast %60 : vector<1x32xf32> to vector<128x32xf32>
    %62 = arith.addf %59, %61 : vector<128x32xf32>
    %cst_29 = arith.constant 0.000000e+00 : f32
    %63 = vector.broadcast %cst_29 : f32 to vector<128x32xf32>
    %64 = arith.maximumf %62, %63 : vector<128x32xf32>
    %c0_30 = arith.constant 0 : index
    %c32_31 = arith.constant 32 : index
    %65 = vector.load %arg6[%c0_30, %c32_31] : memref<128x128xf32, #tpu.memory_space<vmem>>, vector<128x32xf32>
    tpu.vector_store %arg6[%c0_30, %c32_31], %64 {strides = array<i32>} : memref<128x128xf32, #tpu.memory_space<vmem>>, vector<128x32xf32>,
    return
  }
  func.func @transform_0(%arg0: i32) -> (i32, i32) {
    %c0_i32 = arith.constant 0 : i32
    %c0_i32_0 = arith.constant 0 : i32
    return %arg0, %c0_i32 : i32, i32
  }
  func.func @transform_1(%arg0: i32) -> (i32, i32) {
    %c0_i32 = arith.constant 0 : i32
    %c0_i32_0 = arith.constant 0 : i32
    %c0_i32_1 = arith.constant 0 : i32
    return %c0_i32, %c0_i32_0 : i32, i32
  }
  func.func @transform_2(%arg0: i32) -> (i32, i32) {
    %c0_i32 = arith.constant 0 : i32
    %c0_i32_0 = arith.constant 0 : i32
    %c0_i32_1 = arith.constant 0 : i32
    return %c0_i32, %c0_i32_0 : i32, i32
  }
  func.func @transform_3(%arg0: i32) -> (i32, i32) {
    %c0_i32 = arith.constant 0 : i32
    %c0_i32_0 = arith.constant 0 : i32
    return %arg0, %c0_i32 : i32, i32
  }
  func.func @transform_4(%arg0: i32) -> (i32, i32) {
    %c0_i32 = arith.constant 0 : i32
    %c0_i32_0 = arith.constant 0 : i32
    %c0_i32_1 = arith.constant 0 : i32
    return %c0_i32, %c0_i32_0 : i32, i32
  }
  func.func @transform_5(%arg0: i32) -> (i32, i32) {
    %c0_i32 = arith.constant 0 : i32
    %c0_i32_0 = arith.constant 0 : i32
    return %arg0, %c0_i32 : i32, i32
  }
}

module attributes {stable_mosaic.version = 11 : i64} {
  func.func @_gat_attention_kernel(%arg0: i32, %arg1: memref<128x256xi8, #tpu.memory_space<vmem>>, %arg2: memref<256x128xf32, #tpu.memory_space<vmem>>, %arg3: memref<8x256xf32, #tpu.memory_space<vmem>>, %arg4: memref<128x8xf32, #tpu.memory_space<vmem>>, %arg5: memref<1x128xf32, #tpu.memory_space<vmem>>, %arg6: memref<128x128xf32, #tpu.memory_space<vmem>>) attributes {dimension_semantics = [#tpu.dimension_semantics<parallel>], iteration_bounds = array<i64: 2>, scalar_prefetch = 0 : i64, scratch_operands = 0 : i64, tpu.core_type = #tpu.core_type<tc>, window_params = [{transform_indices = @transform_0, window_bounds = array<i64: 128, 256>}, {pipeline_mode = #tpu.pipeline_mode<synchronous>, transform_indices = @transform_1, window_bounds = array<i64: 256, 128>}, {pipeline_mode = #tpu.pipeline_mode<synchronous>, transform_indices = @transform_2, window_bounds = array<i64: 8, 256>}, {transform_indices = @transform_3, window_bounds = array<i64: 128, 8>}, {pipeline_mode = #tpu.pipeline_mode<synchronous>, transform_indices = @transform_4, window_bounds = array<i64: 1, 128>}, {transform_indices = @transform_5, window_bounds = array<i64: 128, 128>}]} {
    %c0 = arith.constant 0 : index
    %c0_0 = arith.constant 0 : index
    %0 = vector.load %arg1[%c0, %c0_0] : memref<128x256xi8, #tpu.memory_space<vmem>>, vector<128x256xi8>
    %c0_i8 = arith.constant 0 : i8
    %1 = vector.broadcast %c0_i8 : i8 to vector<128x256xi8>
    %2 = arith.cmpi ne, %0, %1 : vector<128x256xi8>
    %c0_1 = arith.constant 0 : index
    %c0_2 = arith.constant 0 : index
    %3 = vector.load %arg5[%c0_1, %c0_2] : memref<1x128xf32, #tpu.memory_space<vmem>>, vector<1x128xf32>
    %cst = arith.constant 0.000000e+00 : f32
    %4 = vector.broadcast %cst : f32 to vector<128x112xf32>
    %c0_3 = arith.constant 0 : index
    %c16 = arith.constant 16 : index
    %5 = vector.load %arg6[%c0_3, %c16] : memref<128x128xf32, #tpu.memory_space<vmem>>, vector<128x112xf32>
    tpu.vector_store %arg6[%c0_3, %c16], %4 {strides = array<i32>} : memref<128x128xf32, #tpu.memory_space<vmem>>, vector<128x112xf32>,
    %c0_4 = arith.constant 0 : index
    %c0_5 = arith.constant 0 : index
    %6 = vector.load %arg2[%c0_4, %c0_5] : memref<256x128xf32, #tpu.memory_space<vmem>>, vector<256x16xf32>
    %c0_6 = arith.constant 0 : index
    %c0_7 = arith.constant 0 : index
    %7 = vector.load %arg3[%c0_6, %c0_7] : memref<8x256xf32, #tpu.memory_space<vmem>>, vector<1x256xf32>
    %c0_8 = arith.constant 0 : index
    %c0_9 = arith.constant 0 : index
    %8 = vector.load %arg4[%c0_8, %c0_9] : memref<128x8xf32, #tpu.memory_space<vmem>>, vector<128x1xf32>
    %9 = vector.broadcast %8 : vector<128x1xf32> to vector<128x256xf32>
    %10 = vector.broadcast %7 : vector<1x256xf32> to vector<128x256xf32>
    %11 = arith.addf %9, %10 : vector<128x256xf32>
    %cst_10 = arith.constant 0.000000e+00 : f32
    %12 = vector.broadcast %cst_10 : f32 to vector<128x256xf32>
    %13 = arith.cmpf oge, %11, %12 : vector<128x256xf32>
    %cst_11 = arith.constant 2.000000e-01 : f32
    %14 = vector.broadcast %cst_11 : f32 to vector<128x256xf32>
    %15 = arith.mulf %14, %11 : vector<128x256xf32>
    %16 = arith.select %13, %11, %15 : vector<128x256xi1>, vector<128x256xf32>
    %cst_12 = arith.constant -1.000000e+30 : f32
    %17 = vector.broadcast %cst_12 : f32 to vector<128x256xf32>
    %18 = arith.select %2, %16, %17 : vector<128x256xi1>, vector<128x256xf32>
    %cst_13 = arith.constant dense<0xFF800000> : vector<128xf32>
    %19 = vector.multi_reduction <maximumf>, %18, %cst_13 [1] : vector<128x256xf32> to vector<128xf32>
    %20 = vector.shape_cast %19 : vector<128xf32> to vector<128x1xf32>
    %21 = vector.broadcast %20 : vector<128x1xf32> to vector<128x256xf32>
    %22 = arith.subf %18, %21 : vector<128x256xf32>
    %23 = math.exp %22 : vector<128x256xf32>
    %cst_14 = arith.constant dense<0.000000e+00> : vector<128xf32>
    %24 = vector.multi_reduction <add>, %23, %cst_14 [1] : vector<128x256xf32> to vector<128xf32>
    %25 = vector.shape_cast %24 : vector<128xf32> to vector<128x1xf32>
    %cst_15 = arith.constant dense<0.000000e+00> : vector<128x16xf32>
    %26 = tpu.matmul %23, %6, %cst_15 {dimension_numbers = #tpu.dot_dimension_numbers<[1], [0], [0], [1], [0, 0, 1, 1], [], []>} : vector<128x256xf32>, vector<256x16xf32>, vector<128x16xf32> -> vector<128x16xf32>
    %27 = tpu.reciprocal %25 {approx = true} : vector<128x1xf32> -> vector<128x1xf32>
    %28 = vector.broadcast %27 : vector<128x1xf32> to vector<128x16xf32>
    %29 = arith.mulf %26, %28 : vector<128x16xf32>
    %30 = vector.extract_strided_slice %3 {offsets = [0, 0], sizes = [1, 16], strides = [1, 1]} : vector<1x128xf32> to vector<1x16xf32>
    %31 = vector.broadcast %30 : vector<1x16xf32> to vector<128x16xf32>
    %32 = arith.addf %29, %31 : vector<128x16xf32>
    %c0_16 = arith.constant 0 : index
    %c0_17 = arith.constant 0 : index
    %33 = vector.load %arg6[%c0_16, %c0_17] : memref<128x128xf32, #tpu.memory_space<vmem>>, vector<128x16xf32>
    tpu.vector_store %arg6[%c0_16, %c0_17], %32 {strides = array<i32>} : memref<128x128xf32, #tpu.memory_space<vmem>>, vector<128x16xf32>,
    return
  }
  func.func @transform_0(%arg0: i32) -> (i32, i32) {
    %c0_i32 = arith.constant 0 : i32
    %c0_i32_0 = arith.constant 0 : i32
    return %arg0, %c0_i32 : i32, i32
  }
  func.func @transform_1(%arg0: i32) -> (i32, i32) {
    %c0_i32 = arith.constant 0 : i32
    %c0_i32_0 = arith.constant 0 : i32
    %c0_i32_1 = arith.constant 0 : i32
    return %c0_i32, %c0_i32_0 : i32, i32
  }
  func.func @transform_2(%arg0: i32) -> (i32, i32) {
    %c0_i32 = arith.constant 0 : i32
    %c0_i32_0 = arith.constant 0 : i32
    %c0_i32_1 = arith.constant 0 : i32
    return %c0_i32, %c0_i32_0 : i32, i32
  }
  func.func @transform_3(%arg0: i32) -> (i32, i32) {
    %c0_i32 = arith.constant 0 : i32
    %c0_i32_0 = arith.constant 0 : i32
    return %arg0, %c0_i32 : i32, i32
  }
  func.func @transform_4(%arg0: i32) -> (i32, i32) {
    %c0_i32 = arith.constant 0 : i32
    %c0_i32_0 = arith.constant 0 : i32
    %c0_i32_1 = arith.constant 0 : i32
    return %c0_i32, %c0_i32_0 : i32, i32
  }
  func.func @transform_5(%arg0: i32) -> (i32, i32) {
    %c0_i32 = arith.constant 0 : i32
    %c0_i32_0 = arith.constant 0 : i32
    return %arg0, %c0_i32 : i32, i32
  }
}

</mosaic_0001>

<llo_original>
// kernel: gat_forward.4
$region0: #{gat_forward.4}
  #allocation0 [shape = 'u32[]', space=smem, size = 0x4, offset = 0x4, fixed_abs, tag = 'smem constant byte address 0x4 - core index']
  #allocation1 [shape = 'u32[144,128]{1,0:T(1,128)}', space=vmem, size = 0x12000, scoped, tag = 'internal scratch']
  %s0 = inlined_call_operand.vmem [shape: f32[256,128], index: 0, kind: input, shape index: {}]
  %s1 = inlined_call_operand.vmem [shape: f32[128,128], index: 1, kind: input, shape index: {}]
  %s2 = inlined_call_operand.vmem [shape: f32[8,128], index: 2, kind: input, shape index: {}]
  %s3 = inlined_call_operand.vmem [shape: f32[128,8], index: 3, kind: input, shape index: {}]
  %s4 = inlined_call_operand.vmem [shape: f32[256,128], index: 4, kind: output, shape index: {0}]
  %s5 = inlined_call_operand.vmem [shape: f32[8,256], index: 5, kind: output, shape index: {1}]
  %s6 = inlined_call_operand.vmem [shape: f32[256,8], index: 6, kind: output, shape index: {2}]
  %7 = xla_tuple %s4, %s5, %s6
  %s8 = sld [smem:[#allocation0]]
  $region65: #{gat_forward.4} parent=0
    _
  %s10 = ssub.s32 1, %s8
  %s11 = scalar_select 0, %s10, %s8
  loop: start=0, step=1, limit=4
  $region2: #{gat_forward.4} parent=0 // loop_pre_header
    _
  $region3: #{gat_forward.4} parent=0 // loop_header
    %s13 = sphi 0, %s17
    %p14 = scmp.ge.s32.totalorder %s13, 4
    %s23 = sphi 0, %s25
    %s26 = sphi 0, %s23
    %s27 = sphi 0, %s26
    %s43 = sphi 0, %s27
    %s47 = sphi 0, %s47
    %s49 = sphi 0, %s47
    %s50 = sphi 0, %s49
    %s64 = sphi 0, %s50
    %s68 = sphi 0, %s68
    %s70 = sphi 0, %s68
    %s71 = sphi 0, %s70
    %s85 = sphi 0, %s71
    %s89 = sphi 0, %s89
    %s91 = sphi 0, %s89
    %s92 = sphi 0, %s91
    %s106 = sphi 0, %s92
    %s112 = sphi 0, %s114
    %s115 = sphi 0, %s112
    %s116 = sphi 0, %s115
    %s132 = sphi 0, %s116
    %s138 = sphi 0, %s140
    %s141 = sphi 0, %s138
    %s142 = sphi 0, %s141
    %s158 = sphi 0, %s142
    %s164 = sphi 0, %s166
    %s167 = sphi 0, %s164
    %s168 = sphi 0, %s167
    %s184 = sphi 0, %s168
  $region4: #{gat_forward.4} parent=0 // loop_header_branch
    %16 = sbr.rel (%p14) target = $region8
  $region5: #{gat_forward.4} parent=0 // loop_body
    %s18 = ssub.s32 %s13, 1
    %s19 = ssub.s32 %s13, 2
    %s20 = sadd.s32 %s13, 1
    %s21 = ssub.s32 %s13, %s20
    %p22 = scmp.eq.s32.totalorder %s21, 0
    %s24 = sadd.s32 %s23, 1
    %s25 = scalar_select %p22, %s23, %s24
    %p28 = pneg %p22
    %p29 = scmp.eq.s32.totalorder %s13, 1
    %p30 = por %p28, %p29
    %p31 = scmp.ne.s32.totalorder %s23, %s26
    %p32 = scmp.eq.s32.totalorder %s13, 0
    %p33 = por %p31, %p32
    %p34 = scmp.ne.s32.totalorder %s23, %s26
    %p35 = scmp.eq.s32.totalorder %s18, 1
    %p36 = por %p34, %p35
    %p37 = scmp.ne.s32.totalorder %s26, %s27
    %p38 = scmp.eq.s32.totalorder %s18, 0
    %p39 = por %p37, %p38
    %p40 = scmp.ne.s32.totalorder %s26, %s27
    %p41 = scmp.eq.s32.totalorder %s19, 1
    %p42 = por %p40, %p41
    %p44 = scmp.ne.s32.totalorder %s27, %s43
    %p45 = scmp.eq.s32.totalorder %s19, 0
    %p46 = por %p44, %p45
    %s48 = sadd.s32 %s47, 1
    %p51 = scmp.eq.s32.totalorder %s13, 1
    %p52 = scmp.ne.s32.totalorder %s47, %s49
    %p53 = scmp.eq.s32.totalorder %s13, 0
    %p54 = por %p52, %p53
    %p55 = scmp.ne.s32.totalorder %s47, %s49
    %p56 = scmp.eq.s32.totalorder %s18, 1
    %p57 = por %p55, %p56
    %p58 = scmp.ne.s32.totalorder %s49, %s50
    %p59 = scmp.eq.s32.totalorder %s18, 0
    %p60 = por %p58, %p59
    %p61 = scmp.ne.s32.totalorder %s49, %s50
    %p62 = scmp.eq.s32.totalorder %s19, 1
    %p63 = por %p61, %p62
    %p65 = scmp.ne.s32.totalorder %s50, %s64
    %p66 = scmp.eq.s32.totalorder %s19, 0
    %p67 = por %p65, %p66
    %s69 = sadd.s32 %s68, 1
    %p72 = scmp.eq.s32.totalorder %s13, 1
    %p73 = scmp.ne.s32.totalorder %s68, %s70
    %p74 = scmp.eq.s32.totalorder %s13, 0
    %p75 = por %p73, %p74
    %p76 = scmp.ne.s32.totalorder %s68, %s70
    %p77 = scmp.eq.s32.totalorder %s18, 1
    %p78 = por %p76, %p77
    %p79 = scmp.ne.s32.totalorder %s70, %s71
    %p80 = scmp.eq.s32.totalorder %s18, 0
    %p81 = por %p79, %p80
    %p82 = scmp.ne.s32.totalorder %s70, %s71
    %p83 = scmp.eq.s32.totalorder %s19, 1
    %p84 = por %p82, %p83
    %p86 = scmp.ne.s32.totalorder %s71, %s85
    %p87 = scmp.eq.s32.totalorder %s19, 0
    %p88 = por %p86, %p87
    %s90 = sadd.s32 %s89, 1
    %p93 = scmp.eq.s32.totalorder %s13, 1
    %p94 = scmp.ne.s32.totalorder %s89, %s91
    %p95 = scmp.eq.s32.totalorder %s13, 0
    %p96 = por %p94, %p95
    %p97 = scmp.ne.s32.totalorder %s89, %s91
    %p98 = scmp.eq.s32.totalorder %s18, 1
    %p99 = por %p97, %p98
    %p100 = scmp.ne.s32.totalorder %s91, %s92
    %p101 = scmp.eq.s32.totalorder %s18, 0
    %p102 = por %p100, %p101
    %p103 = scmp.ne.s32.totalorder %s91, %s92
    %p104 = scmp.eq.s32.totalorder %s19, 1
    %p105 = por %p103, %p104
    %p107 = scmp.ne.s32.totalorder %s92, %s106
    %p108 = scmp.eq.s32.totalorder %s19, 0
    %p109 = por %p107, %p108
    %s110 = ssub.s32 %s13, %s20
    %p111 = scmp.eq.s32.totalorder %s110, 0
    %s113 = sadd.s32 %s112, 1
    %s114 = scalar_select %p111, %s112, %s113
    %p117 = pneg %p111
    %p118 = scmp.eq.s32.totalorder %s13, 1
    %p119 = por %p117, %p118
    %p120 = scmp.ne.s32.totalorder %s112, %s115
    %p121 = scmp.eq.s32.totalorder %s13, 0
    %p122 = por %p120, %p121
    %p123 = scmp.ne.s32.totalorder %s112, %s115
    %p124 = scmp.eq.s32.totalorder %s18, 1
    %p125 = por %p123, %p124
    %p126 = scmp.ne.s32.totalorder %s115, %s116
    %p127 = scmp.eq.s32.totalorder %s18, 0
    %p128 = por %p126, %p127
    %p129 = scmp.ne.s32.totalorder %s115, %s116
    %p130 = scmp.eq.s32.totalorder %s19, 1
    %p131 = por %p129, %p130
    %p133 = scmp.ne.s32.totalorder %s116, %s132
    %p134 = scmp.eq.s32.totalorder %s19, 0
    %p135 = por %p133, %p134
    %s136 = ssub.s32 %s13, %s20
    %p137 = scmp.eq.s32.totalorder %s136, 0
    %s139 = sadd.s32 %s138, 1
    %s140 = scalar_select %p137, %s138, %s139
    %p143 = pneg %p137
    %p144 = scmp.eq.s32.totalorder %s13, 1
    %p145 = por %p143, %p144
    %p146 = scmp.ne.s32.totalorder %s138, %s141
    %p147 = scmp.eq.s32.totalorder %s13, 0
    %p148 = por %p146, %p147
    %p149 = scmp.ne.s32.totalorder %s138, %s141
    %p150 = scmp.eq.s32.totalorder %s18, 1
    %p151 = por %p149, %p150
    %p152 = scmp.ne.s32.totalorder %s141, %s142
    %p153 = scmp.eq.s32.totalorder %s18, 0
    %p154 = por %p152, %p153
    %p155 = scmp.ne.s32.totalorder %s141, %s142
    %p156 = scmp.eq.s32.totalorder %s19, 1
    %p157 = por %p155, %p156
    %p159 = scmp.ne.s32.totalorder %s142, %s158
    %p160 = scmp.eq.s32.totalorder %s19, 0
    %p161 = por %p159, %p160
    %s162 = ssub.s32 %s13, %s20
    %p163 = scmp.eq.s32.totalorder %s162, 0
    %s165 = sadd.s32 %s164, 1
    %s166 = scalar_select %p163, %s164, %s165
    %p169 = pneg %p163
    %p170 = scmp.eq.s32.totalorder %s13, 1
    %p171 = por %p169, %p170
    %p172 = scmp.ne.s32.totalorder %s164, %s167
    %p173 = scmp.eq.s32.totalorder %s13, 0
    %p174 = por %p172, %p173
    %p175 = scmp.ne.s32.totalorder %s164, %s167
    %p176 = scmp.eq.s32.totalorder %s18, 1
    %p177 = por %p175, %p176
    %p178 = scmp.ne.s32.totalorder %s167, %s168
    %p179 = scmp.eq.s32.totalorder %s18, 0
    %p180 = por %p178, %p179
    %p181 = scmp.ne.s32.totalorder %s167, %s168
    %p182 = scmp.eq.s32.totalorder %s19, 1
    %p183 = por %p181, %p182
    %p185 = scmp.ne.s32.totalorder %s168, %s184
    %p186 = scmp.eq.s32.totalorder %s19, 0
    %p187 = por %p185, %p186
    %p188 = scmp.le.s32.totalorder 1, %s13
    %p189 = scmp.lt.s32.totalorder %s13, 3
    %p190 = pnand %p188, %p189
    %p191 = pneg %p190
    // Predicated region
    $region9: #{gat_forward.4} parent=5 // pred_check
      _
    $region10: #{gat_forward.4} parent=5 // pred_check_branch
      %193 = sbr.rel (%p190) target = $region12
    $region11: #{gat_forward.4} parent=5 // pred_region
      %s194 = ssub.s32 %s13, 1
      // Predicated region
      $region13: #{gat_forward.4} parent=11 // pred_check
        %p195 = pneg %p60
      $region14: #{gat_forward.4} parent=11 // pred_check_branch
        %197 = sbr.rel (%p195) target = $region16
      $region15: #{gat_forward.4} parent=11 // pred_region
        _
      $region16: #{gat_forward.4} parent=11 // pred_fallthru
        _
      // Predicated region
      $region17: #{gat_forward.4} parent=11 // pred_check
        %p198 = pneg %p81
      $region18: #{gat_forward.4} parent=11 // pred_check_branch
        %200 = sbr.rel (%p198) target = $region20
      $region19: #{gat_forward.4} parent=11 // pred_region
        _
      $region20: #{gat_forward.4} parent=11 // pred_fallthru
        _
      // Predicated region
      $region21: #{gat_forward.4} parent=11 // pred_check
        %p201 = pneg %p102
      $region22: #{gat_forward.4} parent=11 // pred_check_branch
        %203 = sbr.rel (%p201) target = $region24
      $region23: #{gat_forward.4} parent=11 // pred_region
        _
      $region24: #{gat_forward.4} parent=11 // pred_fallthru
        _
    $region12: #{gat_forward.4} parent=5 // pred_fallthru
      _
    %p204 = scmp.lt.s32.totalorder %s13, 2
    // Predicated region
    $region25: #{gat_forward.4} parent=5 // pred_check
      %p205 = pneg %p204
    $region26: #{gat_forward.4} parent=5 // pred_check_branch
      %207 = sbr.rel (%p205) target = $region28
    $region27: #{gat_forward.4} parent=5 // pred_region
      // Predicated region
      $region29: #{gat_forward.4} parent=27 // pred_check
        %p208 = pneg %p33
      $region30: #{gat_forward.4} parent=27 // pred_check_branch
        %210 = sbr.rel (%p208) target = $region32
      $region31: #{gat_forward.4} parent=27 // pred_region
        %s211 = smul.u32 16, %s13
        %p212 = scmp.lt.s32.totalorder %s211, 31
        %s213 = scalar_select %p212, %s211, 31
        %s214 = smul.addr %s213, 8
        %s215 = scalar_lea.vmem %s0, %s214
        %s216 = smul.u32 16, %s13
      $region32: #{gat_forward.4} parent=27 // pred_fallthru
        _
    $region28: #{gat_forward.4} parent=5 // pred_fallthru
      _
    %p217 = scmp.le.s32.totalorder 1, %s13
    %p218 = scmp.lt.s32.totalorder %s13, 3
    %p219 = pnand %p217, %p218
    %p220 = pneg %p219
    // Predicated region
    $region33: #{gat_forward.4} parent=5 // pred_check
      _
    $region34: #{gat_forward.4} parent=5 // pred_check_branch
      %222 = sbr.rel (%p219) target = $region36
    $region35: #{gat_forward.4} parent=5 // pred_region
      %s223 = ssub.s32 %s13, 1
      %s224 = smul.u32 16, %s18
      %p225 = scmp.lt.s32.totalorder %s224, 31
      %s226 = scalar_select %p225, %s224, 31
      %s227 = smul.addr %s226, 8
      %s228 = scalar_lea.vmem %s0, %s227
      %p229 = pneg %p39
      %p230 = pneg %p36
      %p231 = pneg %p60
      %p232 = pneg %p57
      %p233 = pneg %p81
      %p234 = pneg %p78
      %p235 = pneg %p102
      %p236 = pneg %p99
      %p237 = pneg %p128
      %p238 = pneg %p125
      %s239 = smul.u32 16, %s18
      %p240 = scmp.lt.s32.totalorder %s239, 31
      %s241 = scalar_select %p240, %s239, 31
      %s242 = smul.addr %s241, 8
      %s243 = scalar_lea.vmem %s4, %s242
      %p244 = pneg %p154
      %p245 = pneg %p151
      %p246 = scmp.lt.s32.totalorder %s18, 1
      %s247 = scalar_select %p246, %s18, 1
      %s248 = smul.addr %s247, 8
      %s249 = scalar_lea.vmem %s5, %s248
      %p250 = pneg %p180
      %p251 = pneg %p177
      %s252 = smul.u32 16, %s18
      %p253 = scmp.lt.s32.totalorder %s252, 31
      %s254 = scalar_select %p253, %s252, 31
      %s255 = smul.addr %s254, 8
      %s256 = scalar_lea.vmem %s6, %s255
      %s257 = smul.u32 16, %s18
      %p258 = scmp.lt.s32.totalorder %s257, 31
      %s259 = scalar_select %p258, %s257, 31
      %s260 = smul.addr %s259, 8
      %s261 = scalar_lea.vmem %s0, %s260
      %s262 = smul.u32 16, %s18
      %s263 = smul.u32 16, %s18
      %p264 = scmp.lt.s32.totalorder %s263, 31
      %s265 = scalar_select %p264, %s263, 31
      %s266 = smul.addr %s265, 8
      %s267 = scalar_lea.vmem %s4, %s266
      %s268 = smul.u32 16, %s18
      %p269 = scmp.lt.s32.totalorder %s18, 1
      %s270 = scalar_select %p269, %s18, 1
      %s271 = smul.addr %s270, 8
      %s272 = scalar_lea.vmem %s5, %s271
      %s273 = smul.u32 16, %s18
      %p274 = scmp.lt.s32.totalorder %s273, 31
      %s275 = scalar_select %p274, %s273, 31
      %s276 = smul.addr %s275, 8
      %s277 = scalar_lea.vmem %s6, %s276
      %s278 = smul.u32 16, %s18
      %v279 = vld [vmem:[%s261] sm:$0xff]
      %v280 = vld [vmem:[%s261 + $0x8] sm:$0xff]
      %v281 = vld [vmem:[%s261 + $0x10] sm:$0xff]
      %v282 = vld [vmem:[%s261 + $0x18] sm:$0xff]
      %v283 = vld [vmem:[%s261 + $0x20] sm:$0xff]
      %v284 = vld [vmem:[%s261 + $0x28] sm:$0xff]
      %v285 = vld [vmem:[%s261 + $0x30] sm:$0xff]
      %v286 = vld [vmem:[%s261 + $0x38] sm:$0xff]
      %v287 = vld [vmem:[%s261 + $0x40] sm:$0xff]
      %v288 = vld [vmem:[%s261 + $0x48] sm:$0xff]
      %v289 = vld [vmem:[%s261 + $0x50] sm:$0xff]
      %v290 = vld [vmem:[%s261 + $0x58] sm:$0xff]
      %v291 = vld [vmem:[%s261 + $0x60] sm:$0xff]
      %v292 = vld [vmem:[%s261 + $0x68] sm:$0xff]
      %v293 = vld [vmem:[%s261 + $0x70] sm:$0xff]
      %v294 = vld [vmem:[%s261 + $0x78] sm:$0xff]
      %v295 = vld [vmem:[%s1] sm:$0xff]
      %v296 = vld [vmem:[%s1 + $0x8] sm:$0xff]
      %v297 = vld [vmem:[%s1 + $0x10] sm:$0xff]
      %v298 = vld [vmem:[%s1 + $0x18] sm:$0xff]
      %v299 = vld [vmem:[%s1 + $0x20] sm:$0xff]
      %v300 = vld [vmem:[%s1 + $0x28] sm:$0xff]
      %v301 = vld [vmem:[%s1 + $0x30] sm:$0xff]
      %v302 = vld [vmem:[%s1 + $0x38] sm:$0xff]
      %v303 = vld [vmem:[%s1 + $0x40] sm:$0xff]
      %v304 = vld [vmem:[%s1 + $0x48] sm:$0xff]
      %v305 = vld [vmem:[%s1 + $0x50] sm:$0xff]
      %v306 = vld [vmem:[%s1 + $0x58] sm:$0xff]
      %v307 = vld [vmem:[%s1 + $0x60] sm:$0xff]
      %v308 = vld [vmem:[%s1 + $0x68] sm:$0xff]
      %v309 = vld [vmem:[%s1 + $0x70] sm:$0xff]
      %v310 = vld [vmem:[%s1 + $0x78] sm:$0xff]
      %311 = vmatprep.subr.mxu0 0.0
      %312 = vmatpush1.msra.mxu0 %v295
      %313 = vmatprep.subr.mxu0 0.0
      %314 = vmatpush1.msra.mxu0 %v296
      %315 = vmatprep.subr.mxu0 0.0
      %316 = vmatpush1.msra.mxu0 %v297
      %317 = vmatprep.subr.mxu0 0.0
      %318 = vmatpush1.msra.mxu0 %v298
      %319 = vmatprep.subr.mxu0 0.0
      %320 = vmatpush1.msra.mxu0 %v299
      %321 = vmatprep.subr.mxu0 0.0
      %322 = vmatpush1.msra.mxu0 %v300
      %323 = vmatprep.subr.mxu0 0.0
      %324 = vmatpush1.msra.mxu0 %v301
      %325 = vmatprep.subr.mxu0 0.0
      %326 = vmatpush1.msra.mxu0 %v302
      %327 = vmatprep.subr.mxu0 0.0
      %328 = vmatpush1.msra.mxu0 %v303
      %329 = vmatprep.subr.mxu0 0.0
      %330 = vmatpush1.msra.mxu0 %v304
      %331 = vmatprep.subr.mxu0 0.0
      %332 = vmatpush1.msra.mxu0 %v305
      %333 = vmatprep.subr.mxu0 0.0
      %334 = vmatpush1.msra.mxu0 %v306
      %335 = vmatprep.subr.mxu0 0.0
      %336 = vmatpush1.msra.mxu0 %v307
      %337 = vmatprep.subr.mxu0 0.0
      %338 = vmatpush1.msra.mxu0 %v308
      %339 = vmatprep.subr.mxu0 0.0
      %340 = vmatpush1.msra.mxu0 %v309
      %341 = vmatprep.subr.mxu0 0.0
      %342 = vmatpush1.msra.mxu0 %v310
      %343 = vmatprep.subr.mxu0 0.0
      %344 = vmatpush1.msra.mxu0 0.0
      %345 = vmatprep.subr.mxu0 0.0
      %346 = vmatpush1.msra.mxu0 0.0
      %347 = vmatprep.subr.mxu0 0.0
      %348 = vmatpush1.msra.mxu0 0.0
      %349 = vmatprep.subr.mxu0 0.0
      %350 = vmatpush1.msra.mxu0 0.0
      %351 = vmatprep.subr.mxu0 0.0
      %352 = vmatpush1.msra.mxu0 0.0
      %353 = vmatprep.subr.mxu0 0.0
      %354 = vmatpush1.msra.mxu0 0.0
      %355 = vmatprep.subr.mxu0 0.0
      %356 = vmatpush1.msra.mxu0 0.0
      %357 = vmatprep.subr.mxu0 0.0
      %358 = vmatpush1.msra.mxu0 0.0
      %359 = vmatprep.subr.mxu0 0.0
      %360 = vmatpush1.msra.mxu0 0.0
      %361 = vmatprep.subr.mxu0 0.0
      %362 = vmatpush1.msra.mxu0 0.0
      %363 = vmatprep.subr.mxu0 0.0
      %364 = vmatpush1.msra.mxu0 0.0
      %365 = vmatprep.subr.mxu0 0.0
      %366 = vmatpush1.msra.mxu0 0.0
      %367 = vmatprep.subr.mxu0 0.0
      %368 = vmatpush1.msra.mxu0 0.0
      %369 = vmatprep.subr.mxu0 0.0
      %370 = vmatpush1.msra.mxu0 0.0
      %371 = vmatprep.subr.mxu0 0.0
      %372 = vmatpush1.msra.mxu0 0.0
      %373 = vmatprep.subr.mxu0 0.0
      %374 = vmatpush1.msra.mxu0 0.0
      %375 = vmatprep.mubr.f32.mxu0 0.0
      %376 = vmatmul.mubr.f32.gmra.mrb[0].mxu0 %v279
      %v377 = vpop.f32.mrb[0].mxu0
      %v378 = vadd.f32 0.0, %v377
      %v379 = vpop.f32.mrb[0].mxu0
      %380 = vmatprep.mubr.f32.mxu0 0.0
      %381 = vmatmul.mubr.f32.gmra.mrb[0].mxu0 %v280
      %v382 = vpop.f32.mrb[0].mxu0
      %v383 = vadd.f32 0.0, %v382
      %v384 = vpop.f32.mrb[0].mxu0
      %385 = vmatprep.mubr.f32.mxu0 0.0
      %386 = vmatmul.mubr.f32.gmra.mrb[0].mxu0 %v281
      %v387 = vpop.f32.mrb[0].mxu0
      %v388 = vadd.f32 0.0, %v387
      %v389 = vpop.f32.mrb[0].mxu0
      %390 = vmatprep.mubr.f32.mxu0 0.0
      %391 = vmatmul.mubr.f32.gmra.mrb[0].mxu0 %v282
      %v392 = vpop.f32.mrb[0].mxu0
      %v393 = vadd.f32 0.0, %v392
      %v394 = vpop.f32.mrb[0].mxu0
      %395 = vmatprep.mubr.f32.mxu0 0.0
      %396 = vmatmul.mubr.f32.gmra.mrb[0].mxu0 %v283
      %v397 = vpop.f32.mrb[0].mxu0
      %v398 = vadd.f32 0.0, %v397
      %v399 = vpop.f32.mrb[0].mxu0
      %400 = vmatprep.mubr.f32.mxu0 0.0
      %401 = vmatmul.mubr.f32.gmra.mrb[0].mxu0 %v284
      %v402 = vpop.f32.mrb[0].mxu0
      %v403 = vadd.f32 0.0, %v402
      %v404 = vpop.f32.mrb[0].mxu0
      %405 = vmatprep.mubr.f32.mxu0 0.0
      %406 = vmatmul.mubr.f32.gmra.mrb[0].mxu0 %v285
      %v407 = vpop.f32.mrb[0].mxu0
      %v408 = vadd.f32 0.0, %v407
      %v409 = vpop.f32.mrb[0].mxu0
      %410 = vmatprep.mubr.f32.mxu0 0.0
      %411 = vmatmul.mubr.f32.gmra.mrb[0].mxu0 %v286
      %v412 = vpop.f32.mrb[0].mxu0
      %v413 = vadd.f32 0.0, %v412
      %v414 = vpop.f32.mrb[0].mxu0
      %415 = vmatprep.mubr.f32.mxu0 0.0
      %416 = vmatmul.mubr.f32.gmra.mrb[0].mxu0 %v287
      %v417 = vpop.f32.mrb[0].mxu0
      %v418 = vadd.f32 0.0, %v417
      %v419 = vpop.f32.mrb[0].mxu0
      %420 = vmatprep.mubr.f32.mxu0 0.0
      %421 = vmatmul.mubr.f32.gmra.mrb[0].mxu0 %v288
      %v422 = vpop.f32.mrb[0].mxu0
      %v423 = vadd.f32 0.0, %v422
      %v424 = vpop.f32.mrb[0].mxu0
      %425 = vmatprep.mubr.f32.mxu0 0.0
      %426 = vmatmul.mubr.f32.gmra.mrb[0].mxu0 %v289
      %v427 = vpop.f32.mrb[0].mxu0
      %v428 = vadd.f32 0.0, %v427
      %v429 = vpop.f32.mrb[0].mxu0
      %430 = vmatprep.mubr.f32.mxu0 0.0
      %431 = vmatmul.mubr.f32.gmra.mrb[0].mxu0 %v290
      %v432 = vpop.f32.mrb[0].mxu0
      %v433 = vadd.f32 0.0, %v432
      %v434 = vpop.f32.mrb[0].mxu0
      %435 = vmatprep.mubr.f32.mxu0 0.0
      %436 = vmatmul.mubr.f32.gmra.mrb[0].mxu0 %v291
      %v437 = vpop.f32.mrb[0].mxu0
      %v438 = vadd.f32 0.0, %v437
      %v439 = vpop.f32.mrb[0].mxu0
      %440 = vmatprep.mubr.f32.mxu0 0.0
      %441 = vmatmul.mubr.f32.gmra.mrb[0].mxu0 %v292
      %v442 = vpop.f32.mrb[0].mxu0
      %v443 = vadd.f32 0.0, %v442
      %v444 = vpop.f32.mrb[0].mxu0
      %445 = vmatprep.mubr.f32.mxu0 0.0
      %446 = vmatmul.mubr.f32.gmra.mrb[0].mxu0 %v293
      %v447 = vpop.f32.mrb[0].mxu0
      %v448 = vadd.f32 0.0, %v447
      %v449 = vpop.f32.mrb[0].mxu0
      %450 = vmatprep.mubr.f32.mxu0 0.0
      %451 = vmatmul.mubr.f32.gmra.mrb[0].mxu0 %v294
      %v452 = vpop.f32.mrb[0].mxu0
      %v453 = vadd.f32 0.0, %v452
      %v454 = vpop.f32.mrb[0].mxu0
      %455 = vdwg.mxu0
      %456 = vst [vmem:[%s267] sm:$0xff] %v378
      %457 = vst [vmem:[%s267 + $0x8] sm:$0xff] %v383
      %458 = vst [vmem:[%s267 + $0x10] sm:$0xff] %v388
      %459 = vst [vmem:[%s267 + $0x18] sm:$0xff] %v393
      %460 = vst [vmem:[%s267 + $0x20] sm:$0xff] %v398
      %461 = vst [vmem:[%s267 + $0x28] sm:$0xff] %v403
      %462 = vst [vmem:[%s267 + $0x30] sm:$0xff] %v408
      %463 = vst [vmem:[%s267 + $0x38] sm:$0xff] %v413
      %464 = vst [vmem:[%s267 + $0x40] sm:$0xff] %v418
      %465 = vst [vmem:[%s267 + $0x48] sm:$0xff] %v423
      %466 = vst [vmem:[%s267 + $0x50] sm:$0xff] %v428
      %467 = vst [vmem:[%s267 + $0x58] sm:$0xff] %v433
      %468 = vst [vmem:[%s267 + $0x60] sm:$0xff] %v438
      %469 = vst [vmem:[%s267 + $0x68] sm:$0xff] %v443
      %470 = vst [vmem:[%s267 + $0x70] sm:$0xff] %v448
      %471 = vst [vmem:[%s267 + $0x78] sm:$0xff] %v453
      %v472 = vld [vmem:[%s3] sm:$0xff]
      %v473 = vld [vmem:[%s3 + $0x8] sm:$0xff]
      %v474 = vld [vmem:[%s3 + $0x10] sm:$0xff]
      %v475 = vld [vmem:[%s3 + $0x18] sm:$0xff]
      %v476 = vld [vmem:[%s3 + $0x20] sm:$0xff]
      %v477 = vld [vmem:[%s3 + $0x28] sm:$0xff]
      %v478 = vld [vmem:[%s3 + $0x30] sm:$0xff]
      %v479 = vld [vmem:[%s3 + $0x38] sm:$0xff]
      %v480 = vld [vmem:[%s3 + $0x40] sm:$0xff]
      %v481 = vld [vmem:[%s3 + $0x48] sm:$0xff]
      %v482 = vld [vmem:[%s3 + $0x50] sm:$0xff]
      %v483 = vld [vmem:[%s3 + $0x58] sm:$0xff]
      %v484 = vld [vmem:[%s3 + $0x60] sm:$0xff]
      %v485 = vld [vmem:[%s3 + $0x68] sm:$0xff]
      %v486 = vld [vmem:[%s3 + $0x70] sm:$0xff]
      %v487 = vld [vmem:[%s3 + $0x78] sm:$0xff]
      %488 = vmatprep.subr.mxu0 0.0
      %489 = vmatpush1.msra.mxu0 %v472
      %490 = vmatprep.subr.mxu0 0.0
      %491 = vmatpush1.msra.mxu0 %v473
      %492 = vmatprep.subr.mxu0 0.0
      %493 = vmatpush1.msra.mxu0 %v474
      %494 = vmatprep.subr.mxu0 0.0
      %495 = vmatpush1.msra.mxu0 %v475
      %496 = vmatprep.subr.mxu0 0.0
      %497 = vmatpush1.msra.mxu0 %v476
      %498 = vmatprep.subr.mxu0 0.0
      %499 = vmatpush1.msra.mxu0 %v477
      %500 = vmatprep.subr.mxu0 0.0
      %501 = vmatpush1.msra.mxu0 %v478
      %502 = vmatprep.subr.mxu0 0.0
      %503 = vmatpush1.msra.mxu0 %v479
      %504 = vmatprep.subr.mxu0 0.0
      %505 = vmatpush1.msra.mxu0 %v480
      %506 = vmatprep.subr.mxu0 0.0
      %507 = vmatpush1.msra.mxu0 %v481
      %508 = vmatprep.subr.mxu0 0.0
      %509 = vmatpush1.msra.mxu0 %v482
      %510 = vmatprep.subr.mxu0 0.0
      %511 = vmatpush1.msra.mxu0 %v483
      %512 = vmatprep.subr.mxu0 0.0
      %513 = vmatpush1.msra.mxu0 %v484
      %514 = vmatprep.subr.mxu0 0.0
      %515 = vmatpush1.msra.mxu0 %v485
      %516 = vmatprep.subr.mxu0 0.0
      %517 = vmatpush1.msra.mxu0 %v486
      %518 = vmatprep.subr.mxu0 0.0
      %519 = vmatpush1.msra.mxu0 %v487
      %520 = vmatprep.subr.mxu0 0.0
      %521 = vmatpush1.msra.mxu0 0.0
      %522 = vmatprep.subr.mxu0 0.0
      %523 = vmatpush1.msra.mxu0 0.0
      %524 = vmatprep.subr.mxu0 0.0
      %525 = vmatpush1.msra.mxu0 0.0
      %526 = vmatprep.subr.mxu0 0.0
      %527 = vmatpush1.msra.mxu0 0.0
      %528 = vmatprep.subr.mxu0 0.0
      %529 = vmatpush1.msra.mxu0 0.0
      %530 = vmatprep.subr.mxu0 0.0
      %531 = vmatpush1.msra.mxu0 0.0
      %532 = vmatprep.subr.mxu0 0.0
      %533 = vmatpush1.msra.mxu0 0.0
      %534 = vmatprep.subr.mxu0 0.0
      %535 = vmatpush1.msra.mxu0 0.0
      %536 = vmatprep.subr.mxu0 0.0
      %537 = vmatpush1.msra.mxu0 0.0
      %538 = vmatprep.subr.mxu0 0.0
      %539 = vmatpush1.msra.mxu0 0.0
      %540 = vmatprep.subr.mxu0 0.0
      %541 = vmatpush1.msra.mxu0 0.0
      %542 = vmatprep.subr.mxu0 0.0
      %543 = vmatpush1.msra.mxu0 0.0
      %544 = vmatprep.subr.mxu0 0.0
      %545 = vmatpush1.msra.mxu0 0.0
      %546 = vmatprep.subr.mxu0 0.0
      %547 = vmatpush1.msra.mxu0 0.0
      %548 = vmatprep.subr.mxu0 0.0
      %549 = vmatpush1.msra.mxu0 0.0
      %550 = vmatprep.subr.mxu0 0.0
      %551 = vmatpush1.msra.mxu0 0.0
      %552 = vmatprep.mubr.f32.mxu0 0.0
      %553 = vmatmul.mubr.f32.gmra.mrb[0].mxu0 %v279
      %v554 = vpop.f32.mrb[0].mxu0
      %v555 = vadd.f32 0.0, %v554
      %v556 = vpop.f32.mrb[0].mxu0
      %557 = vmatprep.mubr.f32.mxu0 0.0
      %558 = vmatmul.mubr.f32.gmra.mrb[0].mxu0 %v280
      %v559 = vpop.f32.mrb[0].mxu0
      %v560 = vadd.f32 0.0, %v559
      %v561 = vpop.f32.mrb[0].mxu0
      %562 = vmatprep.mubr.f32.mxu0 0.0
      %563 = vmatmul.mubr.f32.gmra.mrb[0].mxu0 %v281
      %v564 = vpop.f32.mrb[0].mxu0
      %v565 = vadd.f32 0.0, %v564
      %v566 = vpop.f32.mrb[0].mxu0
      %567 = vmatprep.mubr.f32.mxu0 0.0
      %568 = vmatmul.mubr.f32.gmra.mrb[0].mxu0 %v282
      %v569 = vpop.f32.mrb[0].mxu0
      %v570 = vadd.f32 0.0, %v569
      %v571 = vpop.f32.mrb[0].mxu0
      %572 = vmatprep.mubr.f32.mxu0 0.0
      %573 = vmatmul.mubr.f32.gmra.mrb[0].mxu0 %v283
      %v574 = vpop.f32.mrb[0].mxu0
      %v575 = vadd.f32 0.0, %v574
      %v576 = vpop.f32.mrb[0].mxu0
      %577 = vmatprep.mubr.f32.mxu0 0.0
      %578 = vmatmul.mubr.f32.gmra.mrb[0].mxu0 %v284
      %v579 = vpop.f32.mrb[0].mxu0
      %v580 = vadd.f32 0.0, %v579
      %v581 = vpop.f32.mrb[0].mxu0
      %582 = vmatprep.mubr.f32.mxu0 0.0
      %583 = vmatmul.mubr.f32.gmra.mrb[0].mxu0 %v285
      %v584 = vpop.f32.mrb[0].mxu0
      %v585 = vadd.f32 0.0, %v584
      %v586 = vpop.f32.mrb[0].mxu0
      %587 = vmatprep.mubr.f32.mxu0 0.0
      %588 = vmatmul.mubr.f32.gmra.mrb[0].mxu0 %v286
      %v589 = vpop.f32.mrb[0].mxu0
      %v590 = vadd.f32 0.0, %v589
      %v591 = vpop.f32.mrb[0].mxu0
      %592 = vmatprep.mubr.f32.mxu0 0.0
      %593 = vmatmul.mubr.f32.gmra.mrb[0].mxu0 %v287
      %v594 = vpop.f32.mrb[0].mxu0
      %v595 = vadd.f32 0.0, %v594
      %v596 = vpop.f32.mrb[0].mxu0
      %597 = vmatprep.mubr.f32.mxu0 0.0
      %598 = vmatmul.mubr.f32.gmra.mrb[0].mxu0 %v288
      %v599 = vpop.f32.mrb[0].mxu0
      %v600 = vadd.f32 0.0, %v599
      %v601 = vpop.f32.mrb[0].mxu0
      %602 = vmatprep.mubr.f32.mxu0 0.0
      %603 = vmatmul.mubr.f32.gmra.mrb[0].mxu0 %v289
      %v604 = vpop.f32.mrb[0].mxu0
      %v605 = vadd.f32 0.0, %v604
      %v606 = vpop.f32.mrb[0].mxu0
      %607 = vmatprep.mubr.f32.mxu0 0.0
      %608 = vmatmul.mubr.f32.gmra.mrb[0].mxu0 %v290
      %v609 = vpop.f32.mrb[0].mxu0
      %v610 = vadd.f32 0.0, %v609
      %v611 = vpop.f32.mrb[0].mxu0
      %612 = vmatprep.mubr.f32.mxu0 0.0
      %613 = vmatmul.mubr.f32.gmra.mrb[0].mxu0 %v291
      %v614 = vpop.f32.mrb[0].mxu0
      %v615 = vadd.f32 0.0, %v614
      %v616 = vpop.f32.mrb[0].mxu0
      %617 = vmatprep.mubr.f32.mxu0 0.0
      %618 = vmatmul.mubr.f32.gmra.mrb[0].mxu0 %v292
      %v619 = vpop.f32.mrb[0].mxu0
      %v620 = vadd.f32 0.0, %v619
      %v621 = vpop.f32.mrb[0].mxu0
      %622 = vmatprep.mubr.f32.mxu0 0.0
      %623 = vmatmul.mubr.f32.gmra.mrb[0].mxu0 %v293
      %v624 = vpop.f32.mrb[0].mxu0
      %v625 = vadd.f32 0.0, %v624
      %v626 = vpop.f32.mrb[0].mxu0
      %627 = vmatprep.mubr.f32.mxu0 0.0
      %628 = vmatmul.mubr.f32.gmra.mrb[0].mxu0 %v294
      %v629 = vpop.f32.mrb[0].mxu0
      %v630 = vadd.f32 0.0, %v629
      %v631 = vpop.f32.mrb[0].mxu0
      %632 = vdwg.mxu0
      %vm633 = vcmask 64512
      %634 = vst.msk [vmem:[%s277] sm:$0xff] %vm633, %v555
      %635 = vst.msk [vmem:[%s277 + $0x8] sm:$0xff] %vm633, %v560
      %636 = vst.msk [vmem:[%s277 + $0x10] sm:$0xff] %vm633, %v565
      %637 = vst.msk [vmem:[%s277 + $0x18] sm:$0xff] %vm633, %v570
      %638 = vst.msk [vmem:[%s277 + $0x20] sm:$0xff] %vm633, %v575
      %639 = vst.msk [vmem:[%s277 + $0x28] sm:$0xff] %vm633, %v580
      %640 = vst.msk [vmem:[%s277 + $0x30] sm:$0xff] %vm633, %v585
      %641 = vst.msk [vmem:[%s277 + $0x38] sm:$0xff] %vm633, %v590
      %642 = vst.msk [vmem:[%s277 + $0x40] sm:$0xff] %vm633, %v595
      %643 = vst.msk [vmem:[%s277 + $0x48] sm:$0xff] %vm633, %v600
      %644 = vst.msk [vmem:[%s277 + $0x50] sm:$0xff] %vm633, %v605
      %645 = vst.msk [vmem:[%s277 + $0x58] sm:$0xff] %vm633, %v610
      %646 = vst.msk [vmem:[%s277 + $0x60] sm:$0xff] %vm633, %v615
      %647 = vst.msk [vmem:[%s277 + $0x68] sm:$0xff] %vm633, %v620
      %648 = vst.msk [vmem:[%s277 + $0x70] sm:$0xff] %vm633, %v625
      %649 = vst.msk [vmem:[%s277 + $0x78] sm:$0xff] %vm633, %v630
      %v650 = vld [vmem:[%s2] sm:$0xff]
      %651 = vmatprep.subr.mxu0 0.0
      %652 = vmatpush1.xpose.msra.mxu0 %v279
      %653 = vmatprep.subr.mxu0 0.0
      %654 = vmatpush1.xpose.msra.mxu0 %v280
      %655 = vmatprep.subr.mxu0 0.0
      %656 = vmatpush1.xpose.msra.mxu0 %v281
      %657 = vmatprep.subr.mxu0 0.0
      %658 = vmatpush1.xpose.msra.mxu0 %v282
      %659 = vmatprep.subr.mxu0 0.0
      %660 = vmatpush1.xpose.msra.mxu0 %v283
      %661 = vmatprep.subr.mxu0 0.0
      %662 = vmatpush1.xpose.msra.mxu0 %v284
      %663 = vmatprep.subr.mxu0 0.0
      %664 = vmatpush1.xpose.msra.mxu0 %v285
      %665 = vmatprep.subr.mxu0 0.0
      %666 = vmatpush1.xpose.msra.mxu0 %v286
      %667 = vmatprep.subr.mxu0 0.0
      %668 = vmatpush1.xpose.msra.mxu0 %v287
      %669 = vmatprep.subr.mxu0 0.0
      %670 = vmatpush1.xpose.msra.mxu0 %v288
      %671 = vmatprep.subr.mxu0 0.0
      %672 = vmatpush1.xpose.msra.mxu0 %v289
      %673 = vmatprep.subr.mxu0 0.0
      %674 = vmatpush1.xpose.msra.mxu0 %v290
      %675 = vmatprep.subr.mxu0 0.0
      %676 = vmatpush1.xpose.msra.mxu0 %v291
      %677 = vmatprep.subr.mxu0 0.0
      %678 = vmatpush1.xpose.msra.mxu0 %v292
      %679 = vmatprep.subr.mxu0 0.0
      %680 = vmatpush1.xpose.msra.mxu0 %v293
      %681 = vmatprep.subr.mxu0 0.0
      %682 = vmatpush1.xpose.msra.mxu0 %v294
      %683 = vmatprep.subr.mxu0 0.0
      %684 = vmatpush1.xpose.msra.mxu0 0.0
      %685 = vmatprep.subr.mxu0 0.0
      %686 = vmatpush1.xpose.msra.mxu0 0.0
      %687 = vmatprep.subr.mxu0 0.0
      %688 = vmatpush1.xpose.msra.mxu0 0.0
      %689 = vmatprep.subr.mxu0 0.0
      %690 = vmatpush1.xpose.msra.mxu0 0.0
      %691 = vmatprep.subr.mxu0 0.0
      %692 = vmatpush1.xpose.msra.mxu0 0.0
      %693 = vmatprep.subr.mxu0 0.0
      %694 = vmatpush1.xpose.msra.mxu0 0.0
      %695 = vmatprep.subr.mxu0 0.0
      %696 = vmatpush1.xpose.msra.mxu0 0.0
      %697 = vmatprep.subr.mxu0 0.0
      %698 = vmatpush1.xpose.msra.mxu0 0.0
      %699 = vmatprep.subr.mxu0 0.0
      %700 = vmatpush1.xpose.msra.mxu0 0.0
      %701 = vmatprep.subr.mxu0 0.0
      %702 = vmatpush1.xpose.msra.mxu0 0.0
      %703 = vmatprep.subr.mxu0 0.0
      %704 = vmatpush1.xpose.msra.mxu0 0.0
      %705 = vmatprep.subr.mxu0 0.0
      %706 = vmatpush1.xpose.msra.mxu0 0.0
      %707 = vmatprep.subr.mxu0 0.0
      %708 = vmatpush1.xpose.msra.mxu0 0.0
      %709 = vmatprep.subr.mxu0 0.0
      %710 = vmatpush1.xpose.msra.mxu0 0.0
      %711 = vmatprep.subr.mxu0 0.0
      %712 = vmatpush1.xpose.msra.mxu0 0.0
      %713 = vmatprep.subr.mxu0 0.0
      %714 = vmatpush1.xpose.msra.mxu0 0.0
      %715 = vmatprep.mubr.f32.mxu0 0.0
      %716 = vmatmul.mubr.f32.gmra.mrb[0].mxu0 %v650
      %v717 = vpop.f32.mrb[0].mxu0
      %v718 = vadd.f32 0.0, %v717
      %v719 = vpop.f32.mrb[0].mxu0
      %720 = vdwg.mxu0
      %721 = vst [vmem:[%s272] sm:$0xff] %v718
      %s722 = smul.u32 16, %s18
      %p723 = scmp.lt.s32.totalorder %s722, 31
      %s724 = scalar_select %p723, %s722, 31
      %s725 = smul.addr %s724, 8
      %s726 = scalar_lea.vmem %s4, %s725
      %p727 = scmp.lt.s32.totalorder %s18, 1
      %s728 = scalar_select %p727, %s18, 1
      %s729 = smul.addr %s728, 8
      %s730 = scalar_lea.vmem %s5, %s729
      %s731 = smul.u32 16, %s18
      %p732 = scmp.lt.s32.totalorder %s731, 31
      %s733 = scalar_select %p732, %s731, 31
      %s734 = smul.addr %s733, 8
      %s735 = scalar_lea.vmem %s6, %s734
      // Predicated region
      $region37: #{gat_forward.4} parent=35 // pred_check
        %p736 = pneg %p125
      $region38: #{gat_forward.4} parent=35 // pred_check_branch
        %738 = sbr.rel (%p736) target = $region40
      $region39: #{gat_forward.4} parent=35 // pred_region
        %s739 = smul.u32 16, %s18
      $region40: #{gat_forward.4} parent=35 // pred_fallthru
        _
      // Predicated region
      $region41: #{gat_forward.4} parent=35 // pred_check
        %p740 = pneg %p151
      $region42: #{gat_forward.4} parent=35 // pred_check_branch
        %742 = sbr.rel (%p740) target = $region44
      $region43: #{gat_forward.4} parent=35 // pred_region
        _
      $region44: #{gat_forward.4} parent=35 // pred_fallthru
        _
      // Predicated region
      $region45: #{gat_forward.4} parent=35 // pred_check
        %p743 = pneg %p177
      $region46: #{gat_forward.4} parent=35 // pred_check_branch
        %745 = sbr.rel (%p743) target = $region48
      $region47: #{gat_forward.4} parent=35 // pred_region
        %s746 = smul.u32 16, %s18
      $region48: #{gat_forward.4} parent=35 // pred_fallthru
        _
    $region36: #{gat_forward.4} parent=5 // pred_fallthru
      _
    %p747 = scmp.le.s32.totalorder 2, %s13
    // Predicated region
    $region49: #{gat_forward.4} parent=5 // pred_check
      %p748 = pneg %p747
    $region50: #{gat_forward.4} parent=5 // pred_check_branch
      %750 = sbr.rel (%p748) target = $region52
    $region51: #{gat_forward.4} parent=5 // pred_region
      %s751 = ssub.s32 %s13, 2
      // Predicated region
      $region53: #{gat_forward.4} parent=51 // pred_check
        %p752 = pneg %p131
      $region54: #{gat_forward.4} parent=51 // pred_check_branch
        %754 = sbr.rel (%p752) target = $region56
      $region55: #{gat_forward.4} parent=51 // pred_region
        %s755 = smul.u32 16, %s19
        %p756 = scmp.lt.s32.totalorder %s755, 31
        %s757 = scalar_select %p756, %s755, 31
        %s758 = smul.addr %s757, 8
        %s759 = scalar_lea.vmem %s4, %s758
      $region56: #{gat_forward.4} parent=51 // pred_fallthru
        _
      // Predicated region
      $region57: #{gat_forward.4} parent=51 // pred_check
        %p760 = pneg %p157
      $region58: #{gat_forward.4} parent=51 // pred_check_branch
        %762 = sbr.rel (%p760) target = $region60
      $region59: #{gat_forward.4} parent=51 // pred_region
        %p763 = scmp.lt.s32.totalorder %s19, 1
        %s764 = scalar_select %p763, %s19, 1
        %s765 = smul.addr %s764, 8
        %s766 = scalar_lea.vmem %s5, %s765
      $region60: #{gat_forward.4} parent=51 // pred_fallthru
        _
      // Predicated region
      $region61: #{gat_forward.4} parent=51 // pred_check
        %p767 = pneg %p183
      $region62: #{gat_forward.4} parent=51 // pred_check_branch
        %769 = sbr.rel (%p767) target = $region64
      $region63: #{gat_forward.4} parent=51 // pred_region
        %s770 = smul.u32 16, %s19
        %p771 = scmp.lt.s32.totalorder %s770, 31
        %s772 = scalar_select %p771, %s770, 31
        %s773 = smul.addr %s772, 8
        %s774 = scalar_lea.vmem %s6, %s773
      $region64: #{gat_forward.4} parent=51 // pred_fallthru
        _
    $region52: #{gat_forward.4} parent=5 // pred_fallthru
      _
  $region6: #{gat_forward.4} parent=0 // loop_footer
    %s17 = sadd.s32 1, %s13
  $region7: #{gat_forward.4} parent=0 // loop_footer_branch
    %12 = sbr.rel target = $region3
  $region8: #{gat_forward.4} parent=0 // loop_exit
    _

// kernel: gat_forward.7
$region0: #{gat_forward.7}
  #allocation0 [shape = 'u32[]', space=smem, size = 0x4, offset = 0x4, fixed_abs, tag = 'smem constant byte address 0x4 - core index']
  #allocation1 [shape = 'u32[144,128]{1,0:T(1,128)}', space=vmem, size = 0x12000, scoped, tag = 'internal scratch']
  %s0 = inlined_call_operand.vmem [shape: s8[256,256], index: 0, kind: input, shape index: {}]
  %s1 = inlined_call_operand.vmem [shape: f32[256,128], index: 1, kind: input, shape index: {}]
  %s2 = inlined_call_operand.vmem [shape: f32[8,256], index: 2, kind: input, shape index: {}]
  %s3 = inlined_call_operand.vmem [shape: f32[256,8], index: 3, kind: input, shape index: {}]
  %s4 = inlined_call_operand.vmem [shape: f32[1,128], index: 4, kind: input, shape index: {}]
  %s5 = inlined_call_operand.vmem [shape: f32[256,128], index: 5, kind: output, shape index: {}]
  %s6 = sld [smem:[#allocation0]]
  $region53: #{gat_forward.7} parent=0
    _
  %s8 = ssub.s32 1, %s6
  %s9 = scalar_select 0, %s8, %s6
  loop: start=0, step=1, limit=4
  $region2: #{gat_forward.7} parent=0 // loop_pre_header
    _
  $region3: #{gat_forward.7} parent=0 // loop_header
    %s11 = sphi 0, %s15
    %p12 = scmp.ge.s32.totalorder %s11, 4
    %s21 = sphi 0, %s23
    %s24 = sphi 0, %s21
    %s25 = sphi 0, %s24
    %s41 = sphi 0, %s25
    %s45 = sphi 0, %s45
    %s47 = sphi 0, %s45
    %s48 = sphi 0, %s47
    %s62 = sphi 0, %s48
    %s66 = sphi 0, %s66
    %s68 = sphi 0, %s66
    %s69 = sphi 0, %s68
    %s83 = sphi 0, %s69
    %s89 = sphi 0, %s91
    %s92 = sphi 0, %s89
    %s93 = sphi 0, %s92
    %s109 = sphi 0, %s93
    %s113 = sphi 0, %s113
    %s115 = sphi 0, %s113
    %s116 = sphi 0, %s115
    %s130 = sphi 0, %s116
    %s136 = sphi 0, %s138
    %s139 = sphi 0, %s136
    %s140 = sphi 0, %s139
    %s156 = sphi 0, %s140
  $region4: #{gat_forward.7} parent=0 // loop_header_branch
    %14 = sbr.rel (%p12) target = $region8
  $region5: #{gat_forward.7} parent=0 // loop_body
    %s16 = ssub.s32 %s11, 1
    %s17 = ssub.s32 %s11, 2
    %s18 = sadd.s32 %s11, 1
    %s19 = ssub.s32 %s11, %s18
    %p20 = scmp.eq.s32.totalorder %s19, 0
    %s22 = sadd.s32 %s21, 1
    %s23 = scalar_select %p20, %s21, %s22
    %p26 = pneg %p20
    %p27 = scmp.eq.s32.totalorder %s11, 1
    %p28 = por %p26, %p27
    %p29 = scmp.ne.s32.totalorder %s21, %s24
    %p30 = scmp.eq.s32.totalorder %s11, 0
    %p31 = por %p29, %p30
    %p32 = scmp.ne.s32.totalorder %s21, %s24
    %p33 = scmp.eq.s32.totalorder %s16, 1
    %p34 = por %p32, %p33
    %p35 = scmp.ne.s32.totalorder %s24, %s25
    %p36 = scmp.eq.s32.totalorder %s16, 0
    %p37 = por %p35, %p36
    %p38 = scmp.ne.s32.totalorder %s24, %s25
    %p39 = scmp.eq.s32.totalorder %s17, 1
    %p40 = por %p38, %p39
    %p42 = scmp.ne.s32.totalorder %s25, %s41
    %p43 = scmp.eq.s32.totalorder %s17, 0
    %p44 = por %p42, %p43
    %s46 = sadd.s32 %s45, 1
    %p49 = scmp.eq.s32.totalorder %s11, 1
    %p50 = scmp.ne.s32.totalorder %s45, %s47
    %p51 = scmp.eq.s32.totalorder %s11, 0
    %p52 = por %p50, %p51
    %p53 = scmp.ne.s32.totalorder %s45, %s47
    %p54 = scmp.eq.s32.totalorder %s16, 1
    %p55 = por %p53, %p54
    %p56 = scmp.ne.s32.totalorder %s47, %s48
    %p57 = scmp.eq.s32.totalorder %s16, 0
    %p58 = por %p56, %p57
    %p59 = scmp.ne.s32.totalorder %s47, %s48
    %p60 = scmp.eq.s32.totalorder %s17, 1
    %p61 = por %p59, %p60
    %p63 = scmp.ne.s32.totalorder %s48, %s62
    %p64 = scmp.eq.s32.totalorder %s17, 0
    %p65 = por %p63, %p64
    %s67 = sadd.s32 %s66, 1
    %p70 = scmp.eq.s32.totalorder %s11, 1
    %p71 = scmp.ne.s32.totalorder %s66, %s68
    %p72 = scmp.eq.s32.totalorder %s11, 0
    %p73 = por %p71, %p72
    %p74 = scmp.ne.s32.totalorder %s66, %s68
    %p75 = scmp.eq.s32.totalorder %s16, 1
    %p76 = por %p74, %p75
    %p77 = scmp.ne.s32.totalorder %s68, %s69
    %p78 = scmp.eq.s32.totalorder %s16, 0
    %p79 = por %p77, %p78
    %p80 = scmp.ne.s32.totalorder %s68, %s69
    %p81 = scmp.eq.s32.totalorder %s17, 1
    %p82 = por %p80, %p81
    %p84 = scmp.ne.s32.totalorder %s69, %s83
    %p85 = scmp.eq.s32.totalorder %s17, 0
    %p86 = por %p84, %p85
    %s87 = ssub.s32 %s11, %s18
    %p88 = scmp.eq.s32.totalorder %s87, 0
    %s90 = sadd.s32 %s89, 1
    %s91 = scalar_select %p88, %s89, %s90
    %p94 = pneg %p88
    %p95 = scmp.eq.s32.totalorder %s11, 1
    %p96 = por %p94, %p95
    %p97 = scmp.ne.s32.totalorder %s89, %s92
    %p98 = scmp.eq.s32.totalorder %s11, 0
    %p99 = por %p97, %p98
    %p100 = scmp.ne.s32.totalorder %s89, %s92
    %p101 = scmp.eq.s32.totalorder %s16, 1
    %p102 = por %p100, %p101
    %p103 = scmp.ne.s32.totalorder %s92, %s93
    %p104 = scmp.eq.s32.totalorder %s16, 0
    %p105 = por %p103, %p104
    %p106 = scmp.ne.s32.totalorder %s92, %s93
    %p107 = scmp.eq.s32.totalorder %s17, 1
    %p108 = por %p106, %p107
    %p110 = scmp.ne.s32.totalorder %s93, %s109
    %p111 = scmp.eq.s32.totalorder %s17, 0
    %p112 = por %p110, %p111
    %s114 = sadd.s32 %s113, 1
    %p117 = scmp.eq.s32.totalorder %s11, 1
    %p118 = scmp.ne.s32.totalorder %s113, %s115
    %p119 = scmp.eq.s32.totalorder %s11, 0
    %p120 = por %p118, %p119
    %p121 = scmp.ne.s32.totalorder %s113, %s115
    %p122 = scmp.eq.s32.totalorder %s16, 1
    %p123 = por %p121, %p122
    %p124 = scmp.ne.s32.totalorder %s115, %s116
    %p125 = scmp.eq.s32.totalorder %s16, 0
    %p126 = por %p124, %p125
    %p127 = scmp.ne.s32.totalorder %s115, %s116
    %p128 = scmp.eq.s32.totalorder %s17, 1
    %p129 = por %p127, %p128
    %p131 = scmp.ne.s32.totalorder %s116, %s130
    %p132 = scmp.eq.s32.totalorder %s17, 0
    %p133 = por %p131, %p132
    %s134 = ssub.s32 %s11, %s18
    %p135 = scmp.eq.s32.totalorder %s134, 0
    %s137 = sadd.s32 %s136, 1
    %s138 = scalar_select %p135, %s136, %s137
    %p141 = pneg %p135
    %p142 = scmp.eq.s32.totalorder %s11, 1
    %p143 = por %p141, %p142
    %p144 = scmp.ne.s32.totalorder %s136, %s139
    %p145 = scmp.eq.s32.totalorder %s11, 0
    %p146 = por %p144, %p145
    %p147 = scmp.ne.s32.totalorder %s136, %s139
    %p148 = scmp.eq.s32.totalorder %s16, 1
    %p149 = por %p147, %p148
    %p150 = scmp.ne.s32.totalorder %s139, %s140
    %p151 = scmp.eq.s32.totalorder %s16, 0
    %p152 = por %p150, %p151
    %p153 = scmp.ne.s32.totalorder %s139, %s140
    %p154 = scmp.eq.s32.totalorder %s17, 1
    %p155 = por %p153, %p154
    %p157 = scmp.ne.s32.totalorder %s140, %s156
    %p158 = scmp.eq.s32.totalorder %s17, 0
    %p159 = por %p157, %p158
    %p160 = scmp.le.s32.totalorder 1, %s11
    %p161 = scmp.lt.s32.totalorder %s11, 3
    %p162 = pnand %p160, %p161
    %p163 = pneg %p162
    // Predicated region
    $region9: #{gat_forward.7} parent=5 // pred_check
      _
    $region10: #{gat_forward.7} parent=5 // pred_check_branch
      %165 = sbr.rel (%p162) target = $region12
    $region11: #{gat_forward.7} parent=5 // pred_region
      %s166 = ssub.s32 %s11, 1
      // Predicated region
      $region13: #{gat_forward.7} parent=11 // pred_check
        %p167 = pneg %p58
      $region14: #{gat_forward.7} parent=11 // pred_check_branch
        %169 = sbr.rel (%p167) target = $region16
      $region15: #{gat_forward.7} parent=11 // pred_region
        _
      $region16: #{gat_forward.7} parent=11 // pred_fallthru
        _
      // Predicated region
      $region17: #{gat_forward.7} parent=11 // pred_check
        %p170 = pneg %p79
      $region18: #{gat_forward.7} parent=11 // pred_check_branch
        %172 = sbr.rel (%p170) target = $region20
      $region19: #{gat_forward.7} parent=11 // pred_region
        _
      $region20: #{gat_forward.7} parent=11 // pred_fallthru
        _
      // Predicated region
      $region21: #{gat_forward.7} parent=11 // pred_check
        %p173 = pneg %p126
      $region22: #{gat_forward.7} parent=11 // pred_check_branch
        %175 = sbr.rel (%p173) target = $region24
      $region23: #{gat_forward.7} parent=11 // pred_region
        _
      $region24: #{gat_forward.7} parent=11 // pred_fallthru
        _
    $region12: #{gat_forward.7} parent=5 // pred_fallthru
      _
    %p176 = scmp.lt.s32.totalorder %s11, 2
    // Predicated region
    $region25: #{gat_forward.7} parent=5 // pred_check
      %p177 = pneg %p176
    $region26: #{gat_forward.7} parent=5 // pred_check_branch
      %179 = sbr.rel (%p177) target = $region28
    $region27: #{gat_forward.7} parent=5 // pred_region
      // Predicated region
      $region29: #{gat_forward.7} parent=27 // pred_check
        %p180 = pneg %p31
      $region30: #{gat_forward.7} parent=27 // pred_check_branch
        %182 = sbr.rel (%p180) target = $region32
      $region31: #{gat_forward.7} parent=27 // pred_region
        %s183 = smul.u32 4, %s11
        %p184 = scmp.lt.s32.totalorder %s183, 7
        %s185 = scalar_select %p184, %s183, 7
        %s186 = smul.addr %s185, 2
        %s187 = smul.addr %s186, 8
        %s188 = scalar_lea.vmem %s0, %s187
        %s189 = smul.u32 4, %s11
      $region32: #{gat_forward.7} parent=27 // pred_fallthru
        _
      // Predicated region
      $region33: #{gat_forward.7} parent=27 // pred_check
        %p190 = pneg %p99
      $region34: #{gat_forward.7} parent=27 // pred_check_branch
        %192 = sbr.rel (%p190) target = $region36
      $region35: #{gat_forward.7} parent=27 // pred_region
        %s193 = smul.u32 16, %s11
        %p194 = scmp.lt.s32.totalorder %s193, 31
        %s195 = scalar_select %p194, %s193, 31
        %s196 = smul.addr %s195, 8
        %s197 = scalar_lea.vmem %s3, %s196
        %s198 = smul.u32 16, %s11
      $region36: #{gat_forward.7} parent=27 // pred_fallthru
        _
    $region28: #{gat_forward.7} parent=5 // pred_fallthru
      _
    %p199 = scmp.le.s32.totalorder 1, %s11
    %p200 = scmp.lt.s32.totalorder %s11, 3
    %p201 = pnand %p199, %p200
    %p202 = pneg %p201
    // Predicated region
    $region37: #{gat_forward.7} parent=5 // pred_check
      _
    $region38: #{gat_forward.7} parent=5 // pred_check_branch
      %204 = sbr.rel (%p201) target = $region40
    $region39: #{gat_forward.7} parent=5 // pred_region
      %s205 = ssub.s32 %s11, 1
      %s206 = smul.u32 4, %s16
      %p207 = scmp.lt.s32.totalorder %s206, 7
      %s208 = scalar_select %p207, %s206, 7
      %s209 = smul.addr %s208, 2
      %s210 = smul.addr %s209, 8
      %s211 = scalar_lea.vmem %s0, %s210
      %p212 = pneg %p37
      %p213 = pneg %p34
      %p214 = pneg %p58
      %p215 = pneg %p55
      %p216 = pneg %p79
      %p217 = pneg %p76
      %s218 = smul.u32 16, %s16
      %p219 = scmp.lt.s32.totalorder %s218, 31
      %s220 = scalar_select %p219, %s218, 31
      %s221 = smul.addr %s220, 8
      %s222 = scalar_lea.vmem %s3, %s221
      %p223 = pneg %p105
      %p224 = pneg %p102
      %p225 = pneg %p126
      %p226 = pneg %p123
      %p227 = pneg %p152
      %p228 = pneg %p149
      %s229 = smul.u32 16, %s16
      %p230 = scmp.lt.s32.totalorder %s229, 31
      %s231 = scalar_select %p230, %s229, 31
      %s232 = smul.addr %s231, 8
      %s233 = scalar_lea.vmem %s5, %s232
      %s234 = smul.u32 4, %s16
      %p235 = scmp.lt.s32.totalorder %s234, 7
      %s236 = scalar_select %p235, %s234, 7
      %s237 = smul.addr %s236, 2
      %s238 = smul.addr %s237, 8
      %s239 = scalar_lea.vmem %s0, %s238
      %s240 = smul.u32 4, %s16
      %s241 = smul.u32 16, %s16
      %p242 = scmp.lt.s32.totalorder %s241, 31
      %s243 = scalar_select %p242, %s241, 31
      %s244 = smul.addr %s243, 8
      %s245 = scalar_lea.vmem %s3, %s244
      %s246 = smul.u32 16, %s16
      %s247 = smul.u32 16, %s16
      %p248 = scmp.lt.s32.totalorder %s247, 31
      %s249 = scalar_select %p248, %s247, 31
      %s250 = smul.addr %s249, 8
      %s251 = scalar_lea.vmem %s5, %s250
      %s252 = smul.u32 16, %s16
      %v255 = vld [vmem:[%s239] sm:$0xff]
      %v256 = vld [vmem:[%s239 + $0x8] sm:$0xff]
      %v257 = vld [vmem:[%s239 + $0x10] sm:$0xff]
      %v258 = vld [vmem:[%s239 + $0x18] sm:$0xff]
      %v259 = vld [vmem:[%s239 + $0x20] sm:$0xff]
      %v260 = vld [vmem:[%s239 + $0x28] sm:$0xff]
      %v261 = vld [vmem:[%s239 + $0x30] sm:$0xff]
      %v262 = vld [vmem:[%s239 + $0x38] sm:$0xff]
      %vm263 = vnez %v255
      %vm264 = vnez %v256
      %vm265 = vnez %v257
      %vm266 = vnez %v258
      %vm267 = vnez %v259
      %vm268 = vnez %v260
      %vm269 = vnez %v261
      %vm270 = vnez %v262
      %v271 = vld [vmem:[%s4] sm:$0x1]
      %vm272 = vcmask 1047680
      %273 = vst.msk [vmem:[%s251] sm:$0xff] %vm272, 0.0
      %274 = vst.msk [vmem:[%s251 + $0x8] sm:$0xff] %vm272, 0.0
      %275 = vst.msk [vmem:[%s251 + $0x10] sm:$0xff] %vm272, 0.0
      %276 = vst.msk [vmem:[%s251 + $0x18] sm:$0xff] %vm272, 0.0
      %277 = vst.msk [vmem:[%s251 + $0x20] sm:$0xff] %vm272, 0.0
      %278 = vst.msk [vmem:[%s251 + $0x28] sm:$0xff] %vm272, 0.0
      %279 = vst.msk [vmem:[%s251 + $0x30] sm:$0xff] %vm272, 0.0
      %280 = vst.msk [vmem:[%s251 + $0x38] sm:$0xff] %vm272, 0.0
      %281 = vst.msk [vmem:[%s251 + $0x40] sm:$0xff] %vm272, 0.0
      %282 = vst.msk [vmem:[%s251 + $0x48] sm:$0xff] %vm272, 0.0
      %283 = vst.msk [vmem:[%s251 + $0x50] sm:$0xff] %vm272, 0.0
      %284 = vst.msk [vmem:[%s251 + $0x58] sm:$0xff] %vm272, 0.0
      %285 = vst.msk [vmem:[%s251 + $0x60] sm:$0xff] %vm272, 0.0
      %286 = vst.msk [vmem:[%s251 + $0x68] sm:$0xff] %vm272, 0.0
      %287 = vst.msk [vmem:[%s251 + $0x70] sm:$0xff] %vm272, 0.0
      %288 = vst.msk [vmem:[%s251 + $0x78] sm:$0xff] %vm272, 0.0
      %v289 = vld [vmem:[%s1] sm:$0xff]
      %v290 = vld [vmem:[%s1 + $0x8] sm:$0xff]
      %v291 = vld [vmem:[%s1 + $0x10] sm:$0xff]
      %v292 = vld [vmem:[%s1 + $0x18] sm:$0xff]
      %v293 = vld [vmem:[%s1 + $0x20] sm:$0xff]
      %v294 = vld [vmem:[%s1 + $0x28] sm:$0xff]
      %v295 = vld [vmem:[%s1 + $0x30] sm:$0xff]
      %v296 = vld [vmem:[%s1 + $0x38] sm:$0xff]
      %v297 = vld [vmem:[%s1 + $0x40] sm:$0xff]
      %v298 = vld [vmem:[%s1 + $0x48] sm:$0xff]
      %v299 = vld [vmem:[%s1 + $0x50] sm:$0xff]
      %v300 = vld [vmem:[%s1 + $0x58] sm:$0xff]
      %v301 = vld [vmem:[%s1 + $0x60] sm:$0xff]
      %v302 = vld [vmem:[%s1 + $0x68] sm:$0xff]
      %v303 = vld [vmem:[%s1 + $0x70] sm:$0xff]
      %v304 = vld [vmem:[%s1 + $0x78] sm:$0xff]
      %v305 = vld [vmem:[%s1 + $0x80] sm:$0xff]
      %v306 = vld [vmem:[%s1 + $0x88] sm:$0xff]
      %v307 = vld [vmem:[%s1 + $0x90] sm:$0xff]
      %v308 = vld [vmem:[%s1 + $0x98] sm:$0xff]
      %v309 = vld [vmem:[%s1 + $0xa0] sm:$0xff]
      %v310 = vld [vmem:[%s1 + $0xa8] sm:$0xff]
      %v311 = vld [vmem:[%s1 + $0xb0] sm:$0xff]
      %v312 = vld [vmem:[%s1 + $0xb8] sm:$0xff]
      %v313 = vld [vmem:[%s1 + $0xc0] sm:$0xff]
      %v314 = vld [vmem:[%s1 + $0xc8] sm:$0xff]
      %v315 = vld [vmem:[%s1 + $0xd0] sm:$0xff]
      %v316 = vld [vmem:[%s1 + $0xd8] sm:$0xff]
      %v317 = vld [vmem:[%s1 + $0xe0] sm:$0xff]
      %v318 = vld [vmem:[%s1 + $0xe8] sm:$0xff]
      %v319 = vld [vmem:[%s1 + $0xf0] sm:$0xff]
      %v320 = vld [vmem:[%s1 + $0xf8] sm:$0xff]
      %v321 = vld [vmem:[%s2] ss:$8 sm:$0x3]
      %v322 = vld [vmem:[%s245] sm:$0xff]
      %v323 = vld [vmem:[%s245 + $0x8] sm:$0xff]
      %v324 = vld [vmem:[%s245 + $0x10] sm:$0xff]
      %v325 = vld [vmem:[%s245 + $0x18] sm:$0xff]
      %v326 = vld [vmem:[%s245 + $0x20] sm:$0xff]
      %v327 = vld [vmem:[%s245 + $0x28] sm:$0xff]
      %v328 = vld [vmem:[%s245 + $0x30] sm:$0xff]
      %v329 = vld [vmem:[%s245 + $0x38] sm:$0xff]
      %v330 = vld [vmem:[%s245 + $0x40] sm:$0xff]
      %v331 = vld [vmem:[%s245 + $0x48] sm:$0xff]
      %v332 = vld [vmem:[%s245 + $0x50] sm:$0xff]
      %v333 = vld [vmem:[%s245 + $0x58] sm:$0xff]
      %v334 = vld [vmem:[%s245 + $0x60] sm:$0xff]
      %v335 = vld [vmem:[%s245 + $0x68] sm:$0xff]
      %v336 = vld [vmem:[%s245 + $0x70] sm:$0xff]
      %v337 = vld [vmem:[%s245 + $0x78] sm:$0xff]
      %339 = vset.pattern.permute.xlu0 0
      %340 = vperm.xlu0 %339, %v322
      %v341 = vpop.permute.xlu0 %340
      %344 = vset.pattern.permute.xlu0 0
      %345 = vperm.xlu0 %344, %v323
      %v346 = vpop.permute.xlu0 %345
      %349 = vset.pattern.permute.xlu0 0
      %350 = vperm.xlu0 %349, %v324
      %v351 = vpop.permute.xlu0 %350
      %354 = vset.pattern.permute.xlu0 0
      %355 = vperm.xlu0 %354, %v325
      %v356 = vpop.permute.xlu0 %355
      %359 = vset.pattern.permute.xlu0 0
      %360 = vperm.xlu0 %359, %v326
      %v361 = vpop.permute.xlu0 %360
      %364 = vset.pattern.permute.xlu0 0
      %365 = vperm.xlu0 %364, %v327
      %v366 = vpop.permute.xlu0 %365
      %369 = vset.pattern.permute.xlu0 0
      %370 = vperm.xlu0 %369, %v328
      %v371 = vpop.permute.xlu0 %370
      %374 = vset.pattern.permute.xlu0 0
      %375 = vperm.xlu0 %374, %v329
      %v376 = vpop.permute.xlu0 %375
      %379 = vset.pattern.permute.xlu0 0
      %380 = vperm.xlu0 %379, %v330
      %v381 = vpop.permute.xlu0 %380
      %384 = vset.pattern.permute.xlu0 0
      %385 = vperm.xlu0 %384, %v331
      %v386 = vpop.permute.xlu0 %385
      %389 = vset.pattern.permute.xlu0 0
      %390 = vperm.xlu0 %389, %v332
      %v391 = vpop.permute.xlu0 %390
      %394 = vset.pattern.permute.xlu0 0
      %395 = vperm.xlu0 %394, %v333
      %v396 = vpop.permute.xlu0 %395
      %399 = vset.pattern.permute.xlu0 0
      %400 = vperm.xlu0 %399, %v334
      %v401 = vpop.permute.xlu0 %400
      %404 = vset.pattern.permute.xlu0 0
      %405 = vperm.xlu0 %404, %v335
      %v406 = vpop.permute.xlu0 %405
      %409 = vset.pattern.permute.xlu0 0
      %410 = vperm.xlu0 %409, %v336
      %v411 = vpop.permute.xlu0 %410
      %414 = vset.pattern.permute.xlu0 0
      %415 = vperm.xlu0 %414, %v337
      %v416 = vpop.permute.xlu0 %415
      %v419 = vlaneseq
      %v420 = vshrl.u32 %v419, 7
      %v421 = vsub.s32 0, %v420
      %v422 = vrot.slane %v321, %v421
      %v423 = vlaneseq
      %v424 = vshrl.u32 %v423, 7
      %v425 = vsub.s32 1, %v424
      %v426 = vrot.slane %v321, %v425
      %v429 = vadd.f32 %v341, %v422
      %v430 = vadd.f32 %v341, %v426
      %v431 = vadd.f32 %v346, %v422
      %v432 = vadd.f32 %v346, %v426
      %v433 = vadd.f32 %v351, %v422
      %v434 = vadd.f32 %v351, %v426
      %v435 = vadd.f32 %v356, %v422
      %v436 = vadd.f32 %v356, %v426
      %v437 = vadd.f32 %v361, %v422
      %v438 = vadd.f32 %v361, %v426
      %v439 = vadd.f32 %v366, %v422
      %v440 = vadd.f32 %v366, %v426
      %v441 = vadd.f32 %v371, %v422
      %v442 = vadd.f32 %v371, %v426
      %v443 = vadd.f32 %v376, %v422
      %v444 = vadd.f32 %v376, %v426
      %v445 = vadd.f32 %v381, %v422
      %v446 = vadd.f32 %v381, %v426
      %v447 = vadd.f32 %v386, %v422
      %v448 = vadd.f32 %v386, %v426
      %v449 = vadd.f32 %v391, %v422
      %v450 = vadd.f32 %v391, %v426
      %v451 = vadd.f32 %v396, %v422
      %v452 = vadd.f32 %v396, %v426
      %v453 = vadd.f32 %v401, %v422
      %v454 = vadd.f32 %v401, %v426
      %v455 = vadd.f32 %v406, %v422
      %v456 = vadd.f32 %v406, %v426
      %v457 = vadd.f32 %v411, %v422
      %v458 = vadd.f32 %v411, %v426
      %v459 = vadd.f32 %v416, %v422
      %v460 = vadd.f32 %v416, %v426
      %vm461 = vcmp.ge.f32.partialorder %v429, 0.0
      %vm462 = vcmp.ge.f32.partialorder %v430, 0.0
      %vm463 = vcmp.ge.f32.partialorder %v431, 0.0
      %vm464 = vcmp.ge.f32.partialorder %v432, 0.0
      %vm465 = vcmp.ge.f32.partialorder %v433, 0.0
      %vm466 = vcmp.ge.f32.partialorder %v434, 0.0
      %vm467 = vcmp.ge.f32.partialorder %v435, 0.0
      %vm468 = vcmp.ge.f32.partialorder %v436, 0.0
      %vm469 = vcmp.ge.f32.partialorder %v437, 0.0
      %vm470 = vcmp.ge.f32.partialorder %v438, 0.0
      %vm471 = vcmp.ge.f32.partialorder %v439, 0.0
      %vm472 = vcmp.ge.f32.partialorder %v440, 0.0
      %vm473 = vcmp.ge.f32.partialorder %v441, 0.0
      %vm474 = vcmp.ge.f32.partialorder %v442, 0.0
      %vm475 = vcmp.ge.f32.partialorder %v443, 0.0
      %vm476 = vcmp.ge.f32.partialorder %v444, 0.0
      %vm477 = vcmp.ge.f32.partialorder %v445, 0.0
      %vm478 = vcmp.ge.f32.partialorder %v446, 0.0
      %vm479 = vcmp.ge.f32.partialorder %v447, 0.0
      %vm480 = vcmp.ge.f32.partialorder %v448, 0.0
      %vm481 = vcmp.ge.f32.partialorder %v449, 0.0
      %vm482 = vcmp.ge.f32.partialorder %v450, 0.0
      %vm483 = vcmp.ge.f32.partialorder %v451, 0.0
      %vm484 = vcmp.ge.f32.partialorder %v452, 0.0
      %vm485 = vcmp.ge.f32.partialorder %v453, 0.0
      %vm486 = vcmp.ge.f32.partialorder %v454, 0.0
      %vm487 = vcmp.ge.f32.partialorder %v455, 0.0
      %vm488 = vcmp.ge.f32.partialorder %v456, 0.0
      %vm489 = vcmp.ge.f32.partialorder %v457, 0.0
      %vm490 = vcmp.ge.f32.partialorder %v458, 0.0
      %vm491 = vcmp.ge.f32.partialorder %v459, 0.0
      %vm492 = vcmp.ge.f32.partialorder %v460, 0.0
      %v493 = vmul.f32 %v429, 0.2
      %v494 = vmul.f32 %v430, 0.2
      %v495 = vmul.f32 %v431, 0.2
      %v496 = vmul.f32 %v432, 0.2
      %v497 = vmul.f32 %v433, 0.2
      %v498 = vmul.f32 %v434, 0.2
      %v499 = vmul.f32 %v435, 0.2
      %v500 = vmul.f32 %v436, 0.2
      %v501 = vmul.f32 %v437, 0.2
      %v502 = vmul.f32 %v438, 0.2
      %v503 = vmul.f32 %v439, 0.2
      %v504 = vmul.f32 %v440, 0.2
      %v505 = vmul.f32 %v441, 0.2
      %v506 = vmul.f32 %v442, 0.2
      %v507 = vmul.f32 %v443, 0.2
      %v508 = vmul.f32 %v444, 0.2
      %v509 = vmul.f32 %v445, 0.2
      %v510 = vmul.f32 %v446, 0.2
      %v511 = vmul.f32 %v447, 0.2
      %v512 = vmul.f32 %v448, 0.2
      %v513 = vmul.f32 %v449, 0.2
      %v514 = vmul.f32 %v450, 0.2
      %v515 = vmul.f32 %v451, 0.2
      %v516 = vmul.f32 %v452, 0.2
      %v517 = vmul.f32 %v453, 0.2
      %v518 = vmul.f32 %v454, 0.2
      %v519 = vmul.f32 %v455, 0.2
      %v520 = vmul.f32 %v456, 0.2
      %v521 = vmul.f32 %v457, 0.2
      %v522 = vmul.f32 %v458, 0.2
      %v523 = vmul.f32 %v459, 0.2
      %v524 = vmul.f32 %v460, 0.2
      %v525 = vsel %vm461, %v429, %v493
      %v526 = vsel %vm462, %v430, %v494
      %v527 = vsel %vm463, %v431, %v495
      %v528 = vsel %vm464, %v432, %v496
      %v529 = vsel %vm465, %v433, %v497
      %v530 = vsel %vm466, %v434, %v498
      %v531 = vsel %vm467, %v435, %v499
      %v532 = vsel %vm468, %v436, %v500
      %v533 = vsel %vm469, %v437, %v501
      %v534 = vsel %vm470, %v438, %v502
      %v535 = vsel %vm471, %v439, %v503
      %v536 = vsel %vm472, %v440, %v504
      %v537 = vsel %vm473, %v441, %v505
      %v538 = vsel %vm474, %v442, %v506
      %v539 = vsel %vm475, %v443, %v507
      %v540 = vsel %vm476, %v444, %v508
      %v541 = vsel %vm477, %v445, %v509
      %v542 = vsel %vm478, %v446, %v510
      %v543 = vsel %vm479, %v447, %v511
      %v544 = vsel %vm480, %v448, %v512
      %v545 = vsel %vm481, %v449, %v513
      %v546 = vsel %vm482, %v450, %v514
      %v547 = vsel %vm483, %v451, %v515
      %v548 = vsel %vm484, %v452, %v516
      %v549 = vsel %vm485, %v453, %v517
      %v550 = vsel %vm486, %v454, %v518
      %v551 = vsel %vm487, %v455, %v519
      %v552 = vsel %vm488, %v456, %v520
      %v553 = vsel %vm489, %v457, %v521
      %v554 = vsel %vm490, %v458, %v522
      %v555 = vsel %vm491, %v459, %v523
      %v556 = vsel %vm492, %v460, %v524
      %v557 = vsel %vm263, 16843009, 0
      %v558 = vsel %vm264, 16843009, 0
      %v559 = vsel %vm265, 16843009, 0
      %v560 = vsel %vm266, 16843009, 0
      %v561 = vsel %vm267, 16843009, 0
      %v562 = vsel %vm268, 16843009, 0
      %v563 = vsel %vm269, 16843009, 0
      %v564 = vsel %vm270, 16843009, 0
      %v565 = vunpack.c.0.s8 %v557
      %v566 = vunpack.c.0.s8 %v558
      %v567 = vunpack.c.1.s8 %v557
      %v568 = vunpack.c.1.s8 %v558
      %v569 = vunpack.c.2.s8 %v557
      %v570 = vunpack.c.2.s8 %v558
      %v571 = vunpack.c.3.s8 %v557
      %v572 = vunpack.c.3.s8 %v558
      %v573 = vunpack.c.0.s8 %v559
      %v574 = vunpack.c.0.s8 %v560
      %v575 = vunpack.c.1.s8 %v559
      %v576 = vunpack.c.1.s8 %v560
      %v577 = vunpack.c.2.s8 %v559
      %v578 = vunpack.c.2.s8 %v560
      %v579 = vunpack.c.3.s8 %v559
      %v580 = vunpack.c.3.s8 %v560
      %v581 = vunpack.c.0.s8 %v561
      %v582 = vunpack.c.0.s8 %v562
      %v583 = vunpack.c.1.s8 %v561
      %v584 = vunpack.c.1.s8 %v562
      %v585 = vunpack.c.2.s8 %v561
      %v586 = vunpack.c.2.s8 %v562
      %v587 = vunpack.c.3.s8 %v561
      %v588 = vunpack.c.3.s8 %v562
      %v589 = vunpack.c.0.s8 %v563
      %v590 = vunpack.c.0.s8 %v564
      %v591 = vunpack.c.1.s8 %v563
      %v592 = vunpack.c.1.s8 %v564
      %v593 = vunpack.c.2.s8 %v563
      %v594 = vunpack.c.2.s8 %v564
      %v595 = vunpack.c.3.s8 %v563
      %v596 = vunpack.c.3.s8 %v564
      %v597 = vpack.c.b16 %v566, %v565
      %v598 = vpack.c.b8 %v597, %v597
      %v599 = vpack.c.b16 %v568, %v567
      %v600 = vpack.c.b8 %v599, %v599
      %v601 = vpack.c.b16 %v570, %v569
      %v602 = vpack.c.b8 %v601, %v601
      %v603 = vpack.c.b16 %v572, %v571
      %v604 = vpack.c.b8 %v603, %v603
      %v605 = vpack.c.b16 %v574, %v573
      %v606 = vpack.c.b8 %v605, %v605
      %v607 = vpack.c.b16 %v576, %v575
      %v608 = vpack.c.b8 %v607, %v607
      %v609 = vpack.c.b16 %v578, %v577
      %v610 = vpack.c.b8 %v609, %v609
      %v611 = vpack.c.b16 %v580, %v579
      %v612 = vpack.c.b8 %v611, %v611
      %v613 = vpack.c.b16 %v582, %v581
      %v614 = vpack.c.b8 %v613, %v613
      %v615 = vpack.c.b16 %v584, %v583
      %v616 = vpack.c.b8 %v615, %v615
      %v617 = vpack.c.b16 %v586, %v585
      %v618 = vpack.c.b8 %v617, %v617
      %v619 = vpack.c.b16 %v588, %v587
      %v620 = vpack.c.b8 %v619, %v619
      %v621 = vpack.c.b16 %v590, %v589
      %v622 = vpack.c.b8 %v621, %v621
      %v623 = vpack.c.b16 %v592, %v591
      %v624 = vpack.c.b8 %v623, %v623
      %v625 = vpack.c.b16 %v594, %v593
      %v626 = vpack.c.b8 %v625, %v625
      %v627 = vpack.c.b16 %v596, %v595
      %v628 = vpack.c.b8 %v627, %v627
      %vm629 = vnez %v598
      %vm630 = vnez %v600
      %vm631 = vnez %v602
      %vm632 = vnez %v604
      %vm633 = vnez %v606
      %vm634 = vnez %v608
      %vm635 = vnez %v610
      %vm636 = vnez %v612
      %vm637 = vnez %v614
      %vm638 = vnez %v616
      %vm639 = vnez %v618
      %vm640 = vnez %v620
      %vm641 = vnez %v622
      %vm642 = vnez %v624
      %vm643 = vnez %v626
      %vm644 = vnez %v628
      %v645 = vsel %vm629, 16843009, 0
      %v646 = vsel %vm630, 16843009, 0
      %v647 = vsel %vm631, 16843009, 0
      %v648 = vsel %vm632, 16843009, 0
      %v649 = vsel %vm633, 16843009, 0
      %v650 = vsel %vm634, 16843009, 0
      %v651 = vsel %vm635, 16843009, 0
      %v652 = vsel %vm636, 16843009, 0
      %v653 = vsel %vm637, 16843009, 0
      %v654 = vsel %vm638, 16843009, 0
      %v655 = vsel %vm639, 16843009, 0
      %v656 = vsel %vm640, 16843009, 0
      %v657 = vsel %vm641, 16843009, 0
      %v658 = vsel %vm642, 16843009, 0
      %v659 = vsel %vm643, 16843009, 0
      %v660 = vsel %vm644, 16843009, 0
      %v661 = vunpack.c.0.s8 %v645
      %v662 = vunpack.c.1.s8 %v645
      %v663 = vunpack.c.0.s8 %v646
      %v664 = vunpack.c.1.s8 %v646
      %v665 = vunpack.c.0.s8 %v647
      %v666 = vunpack.c.1.s8 %v647
      %v667 = vunpack.c.0.s8 %v648
      %v668 = vunpack.c.1.s8 %v648
      %v669 = vunpack.c.0.s8 %v649
      %v670 = vunpack.c.1.s8 %v649
      %v671 = vunpack.c.0.s8 %v650
      %v672 = vunpack.c.1.s8 %v650
      %v673 = vunpack.c.0.s8 %v651
      %v674 = vunpack.c.1.s8 %v651
      %v675 = vunpack.c.0.s8 %v652
      %v676 = vunpack.c.1.s8 %v652
      %v677 = vunpack.c.0.s8 %v653
      %v678 = vunpack.c.1.s8 %v653
      %v679 = vunpack.c.0.s8 %v654
      %v680 = vunpack.c.1.s8 %v654
      %v681 = vunpack.c.0.s8 %v655
      %v682 = vunpack.c.1.s8 %v655
      %v683 = vunpack.c.0.s8 %v656
      %v684 = vunpack.c.1.s8 %v656
      %v685 = vunpack.c.0.s8 %v657
      %v686 = vunpack.c.1.s8 %v657
      %v687 = vunpack.c.0.s8 %v658
      %v688 = vunpack.c.1.s8 %v658
      %v689 = vunpack.c.0.s8 %v659
      %v690 = vunpack.c.1.s8 %v659
      %v691 = vunpack.c.0.s8 %v660
      %v692 = vunpack.c.1.s8 %v660
      %vm693 = vcmp.ne.s32.totalorder %v661, 0
      %vm694 = vcmp.ne.s32.totalorder %v662, 0
      %vm695 = vcmp.ne.s32.totalorder %v663, 0
      %vm696 = vcmp.ne.s32.totalorder %v664, 0
      %vm697 = vcmp.ne.s32.totalorder %v665, 0
      %vm698 = vcmp.ne.s32.totalorder %v666, 0
      %vm699 = vcmp.ne.s32.totalorder %v667, 0
      %vm700 = vcmp.ne.s32.totalorder %v668, 0
      %vm701 = vcmp.ne.s32.totalorder %v669, 0
      %vm702 = vcmp.ne.s32.totalorder %v670, 0
      %vm703 = vcmp.ne.s32.totalorder %v671, 0
      %vm704 = vcmp.ne.s32.totalorder %v672, 0
      %vm705 = vcmp.ne.s32.totalorder %v673, 0
      %vm706 = vcmp.ne.s32.totalorder %v674, 0
      %vm707 = vcmp.ne.s32.totalorder %v675, 0
      %vm708 = vcmp.ne.s32.totalorder %v676, 0
      %vm709 = vcmp.ne.s32.totalorder %v677, 0
      %vm710 = vcmp.ne.s32.totalorder %v678, 0
      %vm711 = vcmp.ne.s32.totalorder %v679, 0
      %vm712 = vcmp.ne.s32.totalorder %v680, 0
      %vm713 = vcmp.ne.s32.totalorder %v681, 0
      %vm714 = vcmp.ne.s32.totalorder %v682, 0
      %vm715 = vcmp.ne.s32.totalorder %v683, 0
      %vm716 = vcmp.ne.s32.totalorder %v684, 0
      %vm717 = vcmp.ne.s32.totalorder %v685, 0
      %vm718 = vcmp.ne.s32.totalorder %v686, 0
      %vm719 = vcmp.ne.s32.totalorder %v687, 0
      %vm720 = vcmp.ne.s32.totalorder %v688, 0
      %vm721 = vcmp.ne.s32.totalorder %v689, 0
      %vm722 = vcmp.ne.s32.totalorder %v690, 0
      %vm723 = vcmp.ne.s32.totalorder %v691, 0
      %vm724 = vcmp.ne.s32.totalorder %v692, 0
      %v725 = vsel %vm693, %v525, -1e+30
      %v726 = vsel %vm694, %v526, -1e+30
      %v727 = vsel %vm695, %v527, -1e+30
      %v728 = vsel %vm696, %v528, -1e+30
      %v729 = vsel %vm697, %v529, -1e+30
      %v730 = vsel %vm698, %v530, -1e+30
      %v731 = vsel %vm699, %v531, -1e+30
      %v732 = vsel %vm700, %v532, -1e+30
      %v733 = vsel %vm701, %v533, -1e+30
      %v734 = vsel %vm702, %v534, -1e+30
      %v735 = vsel %vm703, %v535, -1e+30
      %v736 = vsel %vm704, %v536, -1e+30
      %v737 = vsel %vm705, %v537, -1e+30
      %v738 = vsel %vm706, %v538, -1e+30
      %v739 = vsel %vm707, %v539, -1e+30
      %v740 = vsel %vm708, %v540, -1e+30
      %v741 = vsel %vm709, %v541, -1e+30
      %v742 = vsel %vm710, %v542, -1e+30
      %v743 = vsel %vm711, %v543, -1e+30
      %v744 = vsel %vm712, %v544, -1e+30
      %v745 = vsel %vm713, %v545, -1e+30
      %v746 = vsel %vm714, %v546, -1e+30
      %v747 = vsel %vm715, %v547, -1e+30
      %v748 = vsel %vm716, %v548, -1e+30
      %v749 = vsel %vm717, %v549, -1e+30
      %v750 = vsel %vm718, %v550, -1e+30
      %v751 = vsel %vm719, %v551, -1e+30
      %v752 = vsel %vm720, %v552, -1e+30
      %v753 = vsel %vm721, %v553, -1e+30
      %v754 = vsel %vm722, %v554, -1e+30
      %v755 = vsel %vm723, %v555, -1e+30
      %v756 = vsel %vm724, %v556, -1e+30
      %v757 = vmax.f32 %v725, %v726
      %758 = vmax.xlane.f32.xlu0 %v757
      %v759 = vpop.xlane.xlu0 %758
      %v760 = vmax.f32 %v727, %v728
      %761 = vmax.xlane.f32.xlu0 %v760
      %v762 = vpop.xlane.xlu0 %761
      %v763 = vmax.f32 %v729, %v730
      %764 = vmax.xlane.f32.xlu0 %v763
      %v765 = vpop.xlane.xlu0 %764
      %v766 = vmax.f32 %v731, %v732
      %767 = vmax.xlane.f32.xlu0 %v766
      %v768 = vpop.xlane.xlu0 %767
      %v769 = vmax.f32 %v733, %v734
      %770 = vmax.xlane.f32.xlu0 %v769
      %v771 = vpop.xlane.xlu0 %770
      %v772 = vmax.f32 %v735, %v736
      %773 = vmax.xlane.f32.xlu0 %v772
      %v774 = vpop.xlane.xlu0 %773
      %v775 = vmax.f32 %v737, %v738
      %776 = vmax.xlane.f32.xlu0 %v775
      %v777 = vpop.xlane.xlu0 %776
      %v778 = vmax.f32 %v739, %v740
      %779 = vmax.xlane.f32.xlu0 %v778
      %v780 = vpop.xlane.xlu0 %779
      %v781 = vmax.f32 %v741, %v742
      %782 = vmax.xlane.f32.xlu0 %v781
      %v783 = vpop.xlane.xlu0 %782
      %v784 = vmax.f32 %v743, %v744
      %785 = vmax.xlane.f32.xlu0 %v784
      %v786 = vpop.xlane.xlu0 %785
      %v787 = vmax.f32 %v745, %v746
      %788 = vmax.xlane.f32.xlu0 %v787
      %v789 = vpop.xlane.xlu0 %788
      %v790 = vmax.f32 %v747, %v748
      %791 = vmax.xlane.f32.xlu0 %v790
      %v792 = vpop.xlane.xlu0 %791
      %v793 = vmax.f32 %v749, %v750
      %794 = vmax.xlane.f32.xlu0 %v793
      %v795 = vpop.xlane.xlu0 %794
      %v796 = vmax.f32 %v751, %v752
      %797 = vmax.xlane.f32.xlu0 %v796
      %v798 = vpop.xlane.xlu0 %797
      %v799 = vmax.f32 %v753, %v754
      %800 = vmax.xlane.f32.xlu0 %v799
      %v801 = vpop.xlane.xlu0 %800
      %v802 = vmax.f32 %v755, %v756
      %803 = vmax.xlane.f32.xlu0 %v802
      %v804 = vpop.xlane.xlu0 %803
      %v805 = vsub.f32 %v725, %v759
      %v806 = vsub.f32 %v726, %v759
      %v807 = vsub.f32 %v727, %v762
      %v808 = vsub.f32 %v728, %v762
      %v809 = vsub.f32 %v729, %v765
      %v810 = vsub.f32 %v730, %v765
      %v811 = vsub.f32 %v731, %v768
      %v812 = vsub.f32 %v732, %v768
      %v813 = vsub.f32 %v733, %v771
      %v814 = vsub.f32 %v734, %v771
      %v815 = vsub.f32 %v735, %v774
      %v816 = vsub.f32 %v736, %v774
      %v817 = vsub.f32 %v737, %v777
      %v818 = vsub.f32 %v738, %v777
      %v819 = vsub.f32 %v739, %v780
      %v820 = vsub.f32 %v740, %v780
      %v821 = vsub.f32 %v741, %v783
      %v822 = vsub.f32 %v742, %v783
      %v823 = vsub.f32 %v743, %v786
      %v824 = vsub.f32 %v744, %v786
      %v825 = vsub.f32 %v745, %v789
      %v826 = vsub.f32 %v746, %v789
      %v827 = vsub.f32 %v747, %v792
      %v828 = vsub.f32 %v748, %v792
      %v829 = vsub.f32 %v749, %v795
      %v830 = vsub.f32 %v750, %v795
      %v831 = vsub.f32 %v751, %v798
      %v832 = vsub.f32 %v752, %v798
      %v833 = vsub.f32 %v753, %v801
      %v834 = vsub.f32 %v754, %v801
      %v835 = vsub.f32 %v755, %v804
      %v836 = vsub.f32 %v756, %v804
      %v837 = vmul.f32 %v805, 1.442695
      %v838 = vpow.pop %v837
      %v839 = vmul.f32 %v806, 1.442695
      %v840 = vpow.pop %v839
      %v841 = vmul.f32 %v807, 1.442695
      %v842 = vpow.pop %v841
      %v843 = vmul.f32 %v808, 1.442695
      %v844 = vpow.pop %v843
      %v845 = vmul.f32 %v809, 1.442695
      %v846 = vpow.pop %v845
      %v847 = vmul.f32 %v810, 1.442695
      %v848 = vpow.pop %v847
      %v849 = vmul.f32 %v811, 1.442695
      %v850 = vpow.pop %v849
      %v851 = vmul.f32 %v812, 1.442695
      %v852 = vpow.pop %v851
      %v853 = vmul.f32 %v813, 1.442695
      %v854 = vpow.pop %v853
      %v855 = vmul.f32 %v814, 1.442695
      %v856 = vpow.pop %v855
      %v857 = vmul.f32 %v815, 1.442695
      %v858 = vpow.pop %v857
      %v859 = vmul.f32 %v816, 1.442695
      %v860 = vpow.pop %v859
      %v861 = vmul.f32 %v817, 1.442695
      %v862 = vpow.pop %v861
      %v863 = vmul.f32 %v818, 1.442695
      %v864 = vpow.pop %v863
      %v865 = vmul.f32 %v819, 1.442695
      %v866 = vpow.pop %v865
      %v867 = vmul.f32 %v820, 1.442695
      %v868 = vpow.pop %v867
      %v869 = vmul.f32 %v821, 1.442695
      %v870 = vpow.pop %v869
      %v871 = vmul.f32 %v822, 1.442695
      %v872 = vpow.pop %v871
      %v873 = vmul.f32 %v823, 1.442695
      %v874 = vpow.pop %v873
      %v875 = vmul.f32 %v824, 1.442695
      %v876 = vpow.pop %v875
      %v877 = vmul.f32 %v825, 1.442695
      %v878 = vpow.pop %v877
      %v879 = vmul.f32 %v826, 1.442695
      %v880 = vpow.pop %v879
      %v881 = vmul.f32 %v827, 1.442695
      %v882 = vpow.pop %v881
      %v883 = vmul.f32 %v828, 1.442695
      %v884 = vpow.pop %v883
      %v885 = vmul.f32 %v829, 1.442695
      %v886 = vpow.pop %v885
      %v887 = vmul.f32 %v830, 1.442695
      %v888 = vpow.pop %v887
      %v889 = vmul.f32 %v831, 1.442695
      %v890 = vpow.pop %v889
      %v891 = vmul.f32 %v832, 1.442695
      %v892 = vpow.pop %v891
      %v893 = vmul.f32 %v833, 1.442695
      %v894 = vpow.pop %v893
      %v895 = vmul.f32 %v834, 1.442695
      %v896 = vpow.pop %v895
      %v897 = vmul.f32 %v835, 1.442695
      %v898 = vpow.pop %v897
      %v899 = vmul.f32 %v836, 1.442695
      %v900 = vpow.pop %v899
      %v901 = vadd.f32 %v838, %v840
      %902 = vadd.xlane.f32.xlu0 %v901
      %v903 = vpop.xlane.xlu0 %902
      %v904 = vadd.f32 %v842, %v844
      %905 = vadd.xlane.f32.xlu0 %v904
      %v906 = vpop.xlane.xlu0 %905
      %v907 = vadd.f32 %v846, %v848
      %908 = vadd.xlane.f32.xlu0 %v907
      %v909 = vpop.xlane.xlu0 %908
      %v910 = vadd.f32 %v850, %v852
      %911 = vadd.xlane.f32.xlu0 %v910
      %v912 = vpop.xlane.xlu0 %911
      %v913 = vadd.f32 %v854, %v856
      %914 = vadd.xlane.f32.xlu0 %v913
      %v915 = vpop.xlane.xlu0 %914
      %v916 = vadd.f32 %v858, %v860
      %917 = vadd.xlane.f32.xlu0 %v916
      %v918 = vpop.xlane.xlu0 %917
      %v919 = vadd.f32 %v862, %v864
      %920 = vadd.xlane.f32.xlu0 %v919
      %v921 = vpop.xlane.xlu0 %920
      %v922 = vadd.f32 %v866, %v868
      %923 = vadd.xlane.f32.xlu0 %v922
      %v924 = vpop.xlane.xlu0 %923
      %v925 = vadd.f32 %v870, %v872
      %926 = vadd.xlane.f32.xlu0 %v925
      %v927 = vpop.xlane.xlu0 %926
      %v928 = vadd.f32 %v874, %v876
      %929 = vadd.xlane.f32.xlu0 %v928
      %v930 = vpop.xlane.xlu0 %929
      %v931 = vadd.f32 %v878, %v880
      %932 = vadd.xlane.f32.xlu0 %v931
      %v933 = vpop.xlane.xlu0 %932
      %v934 = vadd.f32 %v882, %v884
      %935 = vadd.xlane.f32.xlu0 %v934
      %v936 = vpop.xlane.xlu0 %935
      %v937 = vadd.f32 %v886, %v888
      %938 = vadd.xlane.f32.xlu0 %v937
      %v939 = vpop.xlane.xlu0 %938
      %v940 = vadd.f32 %v890, %v892
      %941 = vadd.xlane.f32.xlu0 %v940
      %v942 = vpop.xlane.xlu0 %941
      %v943 = vadd.f32 %v894, %v896
      %944 = vadd.xlane.f32.xlu0 %v943
      %v945 = vpop.xlane.xlu0 %944
      %v946 = vadd.f32 %v898, %v900
      %947 = vadd.xlane.f32.xlu0 %v946
      %v948 = vpop.xlane.xlu0 %947
      %949 = vmatprep.subr.mxu0 0.0
      %950 = vmatpush1.msra.mxu0 %v289
      %951 = vmatprep.subr.mxu0 0.0
      %952 = vmatpush1.msra.mxu0 %v290
      %953 = vmatprep.subr.mxu0 0.0
      %954 = vmatpush1.msra.mxu0 %v291
      %955 = vmatprep.subr.mxu0 0.0
      %956 = vmatpush1.msra.mxu0 %v292
      %957 = vmatprep.subr.mxu0 0.0
      %958 = vmatpush1.msra.mxu0 %v293
      %959 = vmatprep.subr.mxu0 0.0
      %960 = vmatpush1.msra.mxu0 %v294
      %961 = vmatprep.subr.mxu0 0.0
      %962 = vmatpush1.msra.mxu0 %v295
      %963 = vmatprep.subr.mxu0 0.0
      %964 = vmatpush1.msra.mxu0 %v296
      %965 = vmatprep.subr.mxu0 0.0
      %966 = vmatpush1.msra.mxu0 %v297
      %967 = vmatprep.subr.mxu0 0.0
      %968 = vmatpush1.msra.mxu0 %v298
      %969 = vmatprep.subr.mxu0 0.0
      %970 = vmatpush1.msra.mxu0 %v299
      %971 = vmatprep.subr.mxu0 0.0
      %972 = vmatpush1.msra.mxu0 %v300
      %973 = vmatprep.subr.mxu0 0.0
      %974 = vmatpush1.msra.mxu0 %v301
      %975 = vmatprep.subr.mxu0 0.0
      %976 = vmatpush1.msra.mxu0 %v302
      %977 = vmatprep.subr.mxu0 0.0
      %978 = vmatpush1.msra.mxu0 %v303
      %979 = vmatprep.subr.mxu0 0.0
      %980 = vmatpush1.msra.mxu0 %v304
      %981 = vmatprep.subr.mxu0 0.0
      %982 = vmatpush1.msra.mxu0 %v305
      %983 = vmatprep.subr.mxu0 0.0
      %984 = vmatpush1.msra.mxu0 %v306
      %985 = vmatprep.subr.mxu0 0.0
      %986 = vmatpush1.msra.mxu0 %v307
      %987 = vmatprep.subr.mxu0 0.0
      %988 = vmatpush1.msra.mxu0 %v308
      %989 = vmatprep.subr.mxu0 0.0
      %990 = vmatpush1.msra.mxu0 %v309
      %991 = vmatprep.subr.mxu0 0.0
      %992 = vmatpush1.msra.mxu0 %v310
      %993 = vmatprep.subr.mxu0 0.0
      %994 = vmatpush1.msra.mxu0 %v311
      %995 = vmatprep.subr.mxu0 0.0
      %996 = vmatpush1.msra.mxu0 %v312
      %997 = vmatprep.subr.mxu0 0.0
      %998 = vmatpush1.msra.mxu0 %v313
      %999 = vmatprep.subr.mxu0 0.0
      %1000 = vmatpush1.msra.mxu0 %v314
      %1001 = vmatprep.subr.mxu0 0.0
      %1002 = vmatpush1.msra.mxu0 %v315
      %1003 = vmatprep.subr.mxu0 0.0
      %1004 = vmatpush1.msra.mxu0 %v316
      %1005 = vmatprep.subr.mxu0 0.0
      %1006 = vmatpush1.msra.mxu0 %v317
      %1007 = vmatprep.subr.mxu0 0.0
      %1008 = vmatpush1.msra.mxu0 %v318
      %1009 = vmatprep.subr.mxu0 0.0
      %1010 = vmatpush1.msra.mxu0 %v319
      %1011 = vmatprep.subr.mxu0 0.0
      %1012 = vmatpush1.msra.mxu0 %v320
      %1013 = vmatprep.mubr.f32.mxu0 %v840
      %1014 = vmatmul.mubr.f32.gmra.mrb[0].mxu0 %v838
      %v1015 = vpop.f32.mrb[0].mxu0
      %v1016 = vadd.f32 0.0, %v1015
      %v1017 = vpop.f32.mrb[0].mxu0
      %1018 = vmatprep.mubr.f32.mxu0 %v844
      %1019 = vmatmul.mubr.f32.gmra.mrb[0].mxu0 %v842
      %v1020 = vpop.f32.mrb[0].mxu0
      %v1021 = vadd.f32 0.0, %v1020
      %v1022 = vpop.f32.mrb[0].mxu0
      %1023 = vmatprep.mubr.f32.mxu0 %v848
      %1024 = vmatmul.mubr.f32.gmra.mrb[0].mxu0 %v846
      %v1025 = vpop.f32.mrb[0].mxu0
      %v1026 = vadd.f32 0.0, %v1025
      %v1027 = vpop.f32.mrb[0].mxu0
      %1028 = vmatprep.mubr.f32.mxu0 %v852
      %1029 = vmatmul.mubr.f32.gmra.mrb[0].mxu0 %v850
      %v1030 = vpop.f32.mrb[0].mxu0
      %v1031 = vadd.f32 0.0, %v1030
      %v1032 = vpop.f32.mrb[0].mxu0
      %1033 = vmatprep.mubr.f32.mxu0 %v856
      %1034 = vmatmul.mubr.f32.gmra.mrb[0].mxu0 %v854
      %v1035 = vpop.f32.mrb[0].mxu0
      %v1036 = vadd.f32 0.0, %v1035
      %v1037 = vpop.f32.mrb[0].mxu0
      %1038 = vmatprep.mubr.f32.mxu0 %v860
      %1039 = vmatmul.mubr.f32.gmra.mrb[0].mxu0 %v858
      %v1040 = vpop.f32.mrb[0].mxu0
      %v1041 = vadd.f32 0.0, %v1040
      %v1042 = vpop.f32.mrb[0].mxu0
      %1043 = vmatprep.mubr.f32.mxu0 %v864
      %1044 = vmatmul.mubr.f32.gmra.mrb[0].mxu0 %v862
      %v1045 = vpop.f32.mrb[0].mxu0
      %v1046 = vadd.f32 0.0, %v1045
      %v1047 = vpop.f32.mrb[0].mxu0
      %1048 = vmatprep.mubr.f32.mxu0 %v868
      %1049 = vmatmul.mubr.f32.gmra.mrb[0].mxu0 %v866
      %v1050 = vpop.f32.mrb[0].mxu0
      %v1051 = vadd.f32 0.0, %v1050
      %v1052 = vpop.f32.mrb[0].mxu0
      %1053 = vmatprep.mubr.f32.mxu0 %v872
      %1054 = vmatmul.mubr.f32.gmra.mrb[0].mxu0 %v870
      %v1055 = vpop.f32.mrb[0].mxu0
      %v1056 = vadd.f32 0.0, %v1055
      %v1057 = vpop.f32.mrb[0].mxu0
      %1058 = vmatprep.mubr.f32.mxu0 %v876
      %1059 = vmatmul.mubr.f32.gmra.mrb[0].mxu0 %v874
      %v1060 = vpop.f32.mrb[0].mxu0
      %v1061 = vadd.f32 0.0, %v1060
      %v1062 = vpop.f32.mrb[0].mxu0
      %1063 = vmatprep.mubr.f32.mxu0 %v880
      %1064 = vmatmul.mubr.f32.gmra.mrb[0].mxu0 %v878
      %v1065 = vpop.f32.mrb[0].mxu0
      %v1066 = vadd.f32 0.0, %v1065
      %v1067 = vpop.f32.mrb[0].mxu0
      %1068 = vmatprep.mubr.f32.mxu0 %v884
      %1069 = vmatmul.mubr.f32.gmra.mrb[0].mxu0 %v882
      %v1070 = vpop.f32.mrb[0].mxu0
      %v1071 = vadd.f32 0.0, %v1070
      %v1072 = vpop.f32.mrb[0].mxu0
      %1073 = vmatprep.mubr.f32.mxu0 %v888
      %1074 = vmatmul.mubr.f32.gmra.mrb[0].mxu0 %v886
      %v1075 = vpop.f32.mrb[0].mxu0
      %v1076 = vadd.f32 0.0, %v1075
      %v1077 = vpop.f32.mrb[0].mxu0
      %1078 = vmatprep.mubr.f32.mxu0 %v892
      %1079 = vmatmul.mubr.f32.gmra.mrb[0].mxu0 %v890
      %v1080 = vpop.f32.mrb[0].mxu0
      %v1081 = vadd.f32 0.0, %v1080
      %v1082 = vpop.f32.mrb[0].mxu0
      %1083 = vmatprep.mubr.f32.mxu0 %v896
      %1084 = vmatmul.mubr.f32.gmra.mrb[0].mxu0 %v894
      %v1085 = vpop.f32.mrb[0].mxu0
      %v1086 = vadd.f32 0.0, %v1085
      %v1087 = vpop.f32.mrb[0].mxu0
      %1088 = vmatprep.mubr.f32.mxu0 %v900
      %1089 = vmatmul.mubr.f32.gmra.mrb[0].mxu0 %v898
      %v1090 = vpop.f32.mrb[0].mxu0
      %v1091 = vadd.f32 0.0, %v1090
      %v1092 = vpop.f32.mrb[0].mxu0
      %1093 = vdwg.mxu0
      %v1094 = vrcp.pop %v903
      %v1095 = vrcp.pop %v906
      %v1096 = vrcp.pop %v909
      %v1097 = vrcp.pop %v912
      %v1098 = vrcp.pop %v915
      %v1099 = vrcp.pop %v918
      %v1100 = vrcp.pop %v921
      %v1101 = vrcp.pop %v924
      %v1102 = vrcp.pop %v927
      %v1103 = vrcp.pop %v930
      %v1104 = vrcp.pop %v933
      %v1105 = vrcp.pop %v936
      %v1106 = vrcp.pop %v939
      %v1107 = vrcp.pop %v942
      %v1108 = vrcp.pop %v945
      %v1109 = vrcp.pop %v948
      %v1110 = vmul.f32 %v1016, %v1094
      %v1111 = vmul.f32 %v1021, %v1095
      %v1112 = vmul.f32 %v1026, %v1096
      %v1113 = vmul.f32 %v1031, %v1097
      %v1114 = vmul.f32 %v1036, %v1098
      %v1115 = vmul.f32 %v1041, %v1099
      %v1116 = vmul.f32 %v1046, %v1100
      %v1117 = vmul.f32 %v1051, %v1101
      %v1118 = vmul.f32 %v1056, %v1102
      %v1119 = vmul.f32 %v1061, %v1103
      %v1120 = vmul.f32 %v1066, %v1104
      %v1121 = vmul.f32 %v1071, %v1105
      %v1122 = vmul.f32 %v1076, %v1106
      %v1123 = vmul.f32 %v1081, %v1107
      %v1124 = vmul.f32 %v1086, %v1108
      %v1125 = vmul.f32 %v1091, %v1109
      %v1127 = vlaneseq
      %v1128 = vshrl.u32 %v1127, 7
      %v1129 = vsub.s32 0, %v1128
      %v1130 = vrot.slane %v271, %v1129
      %v1132 = vadd.f32 %v1110, %v1130
      %v1133 = vadd.f32 %v1111, %v1130
      %v1134 = vadd.f32 %v1112, %v1130
      %v1135 = vadd.f32 %v1113, %v1130
      %v1136 = vadd.f32 %v1114, %v1130
      %v1137 = vadd.f32 %v1115, %v1130
      %v1138 = vadd.f32 %v1116, %v1130
      %v1139 = vadd.f32 %v1117, %v1130
      %v1140 = vadd.f32 %v1118, %v1130
      %v1141 = vadd.f32 %v1119, %v1130
      %v1142 = vadd.f32 %v1120, %v1130
      %v1143 = vadd.f32 %v1121, %v1130
      %v1144 = vadd.f32 %v1122, %v1130
      %v1145 = vadd.f32 %v1123, %v1130
      %v1146 = vadd.f32 %v1124, %v1130
      %v1147 = vadd.f32 %v1125, %v1130
      %vm1148 = vcmask 130048
      %1149 = vst.msk [vmem:[%s251] sm:$0xff] %vm1148, %v1132
      %1150 = vst.msk [vmem:[%s251 + $0x8] sm:$0xff] %vm1148, %v1133
      %1151 = vst.msk [vmem:[%s251 + $0x10] sm:$0xff] %vm1148, %v1134
      %1152 = vst.msk [vmem:[%s251 + $0x18] sm:$0xff] %vm1148, %v1135
      %1153 = vst.msk [vmem:[%s251 + $0x20] sm:$0xff] %vm1148, %v1136
      %1154 = vst.msk [vmem:[%s251 + $0x28] sm:$0xff] %vm1148, %v1137
      %1155 = vst.msk [vmem:[%s251 + $0x30] sm:$0xff] %vm1148, %v1138
      %1156 = vst.msk [vmem:[%s251 + $0x38] sm:$0xff] %vm1148, %v1139
      %1157 = vst.msk [vmem:[%s251 + $0x40] sm:$0xff] %vm1148, %v1140
      %1158 = vst.msk [vmem:[%s251 + $0x48] sm:$0xff] %vm1148, %v1141
      %1159 = vst.msk [vmem:[%s251 + $0x50] sm:$0xff] %vm1148, %v1142
      %1160 = vst.msk [vmem:[%s251 + $0x58] sm:$0xff] %vm1148, %v1143
      %1161 = vst.msk [vmem:[%s251 + $0x60] sm:$0xff] %vm1148, %v1144
      %1162 = vst.msk [vmem:[%s251 + $0x68] sm:$0xff] %vm1148, %v1145
      %1163 = vst.msk [vmem:[%s251 + $0x70] sm:$0xff] %vm1148, %v1146
      %1164 = vst.msk [vmem:[%s251 + $0x78] sm:$0xff] %vm1148, %v1147
      %s1165 = smul.u32 16, %s16
      %p1166 = scmp.lt.s32.totalorder %s1165, 31
      %s1167 = scalar_select %p1166, %s1165, 31
      %s1168 = smul.addr %s1167, 8
      %s1169 = scalar_lea.vmem %s5, %s1168
      // Predicated region
      $region41: #{gat_forward.7} parent=39 // pred_check
        %p1170 = pneg %p149
      $region42: #{gat_forward.7} parent=39 // pred_check_branch
        %1172 = sbr.rel (%p1170) target = $region44
      $region43: #{gat_forward.7} parent=39 // pred_region
        %s1173 = smul.u32 16, %s16
      $region44: #{gat_forward.7} parent=39 // pred_fallthru
        _
    $region40: #{gat_forward.7} parent=5 // pred_fallthru
      _
    %p1174 = scmp.le.s32.totalorder 2, %s11
    // Predicated region
    $region45: #{gat_forward.7} parent=5 // pred_check
      %p1175 = pneg %p1174
    $region46: #{gat_forward.7} parent=5 // pred_check_branch
      %1177 = sbr.rel (%p1175) target = $region48
    $region47: #{gat_forward.7} parent=5 // pred_region
      %s1178 = ssub.s32 %s11, 2
      // Predicated region
      $region49: #{gat_forward.7} parent=47 // pred_check
        %p1179 = pneg %p155
      $region50: #{gat_forward.7} parent=47 // pred_check_branch
        %1181 = sbr.rel (%p1179) target = $region52
      $region51: #{gat_forward.7} parent=47 // pred_region
        %s1182 = smul.u32 16, %s17
        %p1183 = scmp.lt.s32.totalorder %s1182, 31
        %s1184 = scalar_select %p1183, %s1182, 31
        %s1185 = smul.addr %s1184, 8
        %s1186 = scalar_lea.vmem %s5, %s1185
      $region52: #{gat_forward.7} parent=47 // pred_fallthru
        _
    $region48: #{gat_forward.7} parent=5 // pred_fallthru
      _
  $region6: #{gat_forward.7} parent=0 // loop_footer
    %s15 = sadd.s32 1, %s11
  $region7: #{gat_forward.7} parent=0 // loop_footer_branch
    %10 = sbr.rel target = $region3
  $region8: #{gat_forward.7} parent=0 // loop_exit
    _

// kernel: gat_forward.5
$region0: #{gat_forward.5}
  #allocation0 [shape = 'u32[]', space=smem, size = 0x4, offset = 0x4, fixed_abs, tag = 'smem constant byte address 0x4 - core index']
  #allocation1 [shape = 'u32[144,128]{1,0:T(1,128)}', space=vmem, size = 0x12000, scoped, tag = 'internal scratch']
  %s0 = inlined_call_operand.vmem [shape: s8[256,256], index: 0, kind: input, shape index: {}]
  %s1 = inlined_call_operand.vmem [shape: f32[256,128], index: 1, kind: input, shape index: {}]
  %s2 = inlined_call_operand.vmem [shape: f32[8,256], index: 2, kind: input, shape index: {}]
  %s3 = inlined_call_operand.vmem [shape: f32[256,8], index: 3, kind: input, shape index: {}]
  %s4 = inlined_call_operand.vmem [shape: f32[1,128], index: 4, kind: input, shape index: {}]
  %s5 = inlined_call_operand.vmem [shape: f32[256,128], index: 5, kind: output, shape index: {}]
  %s6 = sld [smem:[#allocation0]]
  $region53: #{gat_forward.5} parent=0
    _
  %s8 = ssub.s32 1, %s6
  %s9 = scalar_select 0, %s8, %s6
  loop: start=0, step=1, limit=4
  $region2: #{gat_forward.5} parent=0 // loop_pre_header
    _
  $region3: #{gat_forward.5} parent=0 // loop_header
    %s11 = sphi 0, %s15
    %p12 = scmp.ge.s32.totalorder %s11, 4
    %s21 = sphi 0, %s23
    %s24 = sphi 0, %s21
    %s25 = sphi 0, %s24
    %s41 = sphi 0, %s25
    %s45 = sphi 0, %s45
    %s47 = sphi 0, %s45
    %s48 = sphi 0, %s47
    %s62 = sphi 0, %s48
    %s66 = sphi 0, %s66
    %s68 = sphi 0, %s66
    %s69 = sphi 0, %s68
    %s83 = sphi 0, %s69
    %s89 = sphi 0, %s91
    %s92 = sphi 0, %s89
    %s93 = sphi 0, %s92
    %s109 = sphi 0, %s93
    %s113 = sphi 0, %s113
    %s115 = sphi 0, %s113
    %s116 = sphi 0, %s115
    %s130 = sphi 0, %s116
    %s136 = sphi 0, %s138
    %s139 = sphi 0, %s136
    %s140 = sphi 0, %s139
    %s156 = sphi 0, %s140
  $region4: #{gat_forward.5} parent=0 // loop_header_branch
    %14 = sbr.rel (%p12) target = $region8
  $region5: #{gat_forward.5} parent=0 // loop_body
    %s16 = ssub.s32 %s11, 1
    %s17 = ssub.s32 %s11, 2
    %s18 = sadd.s32 %s11, 1
    %s19 = ssub.s32 %s11, %s18
    %p20 = scmp.eq.s32.totalorder %s19, 0
    %s22 = sadd.s32 %s21, 1
    %s23 = scalar_select %p20, %s21, %s22
    %p26 = pneg %p20
    %p27 = scmp.eq.s32.totalorder %s11, 1
    %p28 = por %p26, %p27
    %p29 = scmp.ne.s32.totalorder %s21, %s24
    %p30 = scmp.eq.s32.totalorder %s11, 0
    %p31 = por %p29, %p30
    %p32 = scmp.ne.s32.totalorder %s21, %s24
    %p33 = scmp.eq.s32.totalorder %s16, 1
    %p34 = por %p32, %p33
    %p35 = scmp.ne.s32.totalorder %s24, %s25
    %p36 = scmp.eq.s32.totalorder %s16, 0
    %p37 = por %p35, %p36
    %p38 = scmp.ne.s32.totalorder %s24, %s25
    %p39 = scmp.eq.s32.totalorder %s17, 1
    %p40 = por %p38, %p39
    %p42 = scmp.ne.s32.totalorder %s25, %s41
    %p43 = scmp.eq.s32.totalorder %s17, 0
    %p44 = por %p42, %p43
    %s46 = sadd.s32 %s45, 1
    %p49 = scmp.eq.s32.totalorder %s11, 1
    %p50 = scmp.ne.s32.totalorder %s45, %s47
    %p51 = scmp.eq.s32.totalorder %s11, 0
    %p52 = por %p50, %p51
    %p53 = scmp.ne.s32.totalorder %s45, %s47
    %p54 = scmp.eq.s32.totalorder %s16, 1
    %p55 = por %p53, %p54
    %p56 = scmp.ne.s32.totalorder %s47, %s48
    %p57 = scmp.eq.s32.totalorder %s16, 0
    %p58 = por %p56, %p57
    %p59 = scmp.ne.s32.totalorder %s47, %s48
    %p60 = scmp.eq.s32.totalorder %s17, 1
    %p61 = por %p59, %p60
    %p63 = scmp.ne.s32.totalorder %s48, %s62
    %p64 = scmp.eq.s32.totalorder %s17, 0
    %p65 = por %p63, %p64
    %s67 = sadd.s32 %s66, 1
    %p70 = scmp.eq.s32.totalorder %s11, 1
    %p71 = scmp.ne.s32.totalorder %s66, %s68
    %p72 = scmp.eq.s32.totalorder %s11, 0
    %p73 = por %p71, %p72
    %p74 = scmp.ne.s32.totalorder %s66, %s68
    %p75 = scmp.eq.s32.totalorder %s16, 1
    %p76 = por %p74, %p75
    %p77 = scmp.ne.s32.totalorder %s68, %s69
    %p78 = scmp.eq.s32.totalorder %s16, 0
    %p79 = por %p77, %p78
    %p80 = scmp.ne.s32.totalorder %s68, %s69
    %p81 = scmp.eq.s32.totalorder %s17, 1
    %p82 = por %p80, %p81
    %p84 = scmp.ne.s32.totalorder %s69, %s83
    %p85 = scmp.eq.s32.totalorder %s17, 0
    %p86 = por %p84, %p85
    %s87 = ssub.s32 %s11, %s18
    %p88 = scmp.eq.s32.totalorder %s87, 0
    %s90 = sadd.s32 %s89, 1
    %s91 = scalar_select %p88, %s89, %s90
    %p94 = pneg %p88
    %p95 = scmp.eq.s32.totalorder %s11, 1
    %p96 = por %p94, %p95
    %p97 = scmp.ne.s32.totalorder %s89, %s92
    %p98 = scmp.eq.s32.totalorder %s11, 0
    %p99 = por %p97, %p98
    %p100 = scmp.ne.s32.totalorder %s89, %s92
    %p101 = scmp.eq.s32.totalorder %s16, 1
    %p102 = por %p100, %p101
    %p103 = scmp.ne.s32.totalorder %s92, %s93
    %p104 = scmp.eq.s32.totalorder %s16, 0
    %p105 = por %p103, %p104
    %p106 = scmp.ne.s32.totalorder %s92, %s93
    %p107 = scmp.eq.s32.totalorder %s17, 1
    %p108 = por %p106, %p107
    %p110 = scmp.ne.s32.totalorder %s93, %s109
    %p111 = scmp.eq.s32.totalorder %s17, 0
    %p112 = por %p110, %p111
    %s114 = sadd.s32 %s113, 1
    %p117 = scmp.eq.s32.totalorder %s11, 1
    %p118 = scmp.ne.s32.totalorder %s113, %s115
    %p119 = scmp.eq.s32.totalorder %s11, 0
    %p120 = por %p118, %p119
    %p121 = scmp.ne.s32.totalorder %s113, %s115
    %p122 = scmp.eq.s32.totalorder %s16, 1
    %p123 = por %p121, %p122
    %p124 = scmp.ne.s32.totalorder %s115, %s116
    %p125 = scmp.eq.s32.totalorder %s16, 0
    %p126 = por %p124, %p125
    %p127 = scmp.ne.s32.totalorder %s115, %s116
    %p128 = scmp.eq.s32.totalorder %s17, 1
    %p129 = por %p127, %p128
    %p131 = scmp.ne.s32.totalorder %s116, %s130
    %p132 = scmp.eq.s32.totalorder %s17, 0
    %p133 = por %p131, %p132
    %s134 = ssub.s32 %s11, %s18
    %p135 = scmp.eq.s32.totalorder %s134, 0
    %s137 = sadd.s32 %s136, 1
    %s138 = scalar_select %p135, %s136, %s137
    %p141 = pneg %p135
    %p142 = scmp.eq.s32.totalorder %s11, 1
    %p143 = por %p141, %p142
    %p144 = scmp.ne.s32.totalorder %s136, %s139
    %p145 = scmp.eq.s32.totalorder %s11, 0
    %p146 = por %p144, %p145
    %p147 = scmp.ne.s32.totalorder %s136, %s139
    %p148 = scmp.eq.s32.totalorder %s16, 1
    %p149 = por %p147, %p148
    %p150 = scmp.ne.s32.totalorder %s139, %s140
    %p151 = scmp.eq.s32.totalorder %s16, 0
    %p152 = por %p150, %p151
    %p153 = scmp.ne.s32.totalorder %s139, %s140
    %p154 = scmp.eq.s32.totalorder %s17, 1
    %p155 = por %p153, %p154
    %p157 = scmp.ne.s32.totalorder %s140, %s156
    %p158 = scmp.eq.s32.totalorder %s17, 0
    %p159 = por %p157, %p158
    %p160 = scmp.le.s32.totalorder 1, %s11
    %p161 = scmp.lt.s32.totalorder %s11, 3
    %p162 = pnand %p160, %p161
    %p163 = pneg %p162
    // Predicated region
    $region9: #{gat_forward.5} parent=5 // pred_check
      _
    $region10: #{gat_forward.5} parent=5 // pred_check_branch
      %165 = sbr.rel (%p162) target = $region12
    $region11: #{gat_forward.5} parent=5 // pred_region
      %s166 = ssub.s32 %s11, 1
      // Predicated region
      $region13: #{gat_forward.5} parent=11 // pred_check
        %p167 = pneg %p58
      $region14: #{gat_forward.5} parent=11 // pred_check_branch
        %169 = sbr.rel (%p167) target = $region16
      $region15: #{gat_forward.5} parent=11 // pred_region
        _
      $region16: #{gat_forward.5} parent=11 // pred_fallthru
        _
      // Predicated region
      $region17: #{gat_forward.5} parent=11 // pred_check
        %p170 = pneg %p79
      $region18: #{gat_forward.5} parent=11 // pred_check_branch
        %172 = sbr.rel (%p170) target = $region20
      $region19: #{gat_forward.5} parent=11 // pred_region
        _
      $region20: #{gat_forward.5} parent=11 // pred_fallthru
        _
      // Predicated region
      $region21: #{gat_forward.5} parent=11 // pred_check
        %p173 = pneg %p126
      $region22: #{gat_forward.5} parent=11 // pred_check_branch
        %175 = sbr.rel (%p173) target = $region24
      $region23: #{gat_forward.5} parent=11 // pred_region
        _
      $region24: #{gat_forward.5} parent=11 // pred_fallthru
        _
    $region12: #{gat_forward.5} parent=5 // pred_fallthru
      _
    %p176 = scmp.lt.s32.totalorder %s11, 2
    // Predicated region
    $region25: #{gat_forward.5} parent=5 // pred_check
      %p177 = pneg %p176
    $region26: #{gat_forward.5} parent=5 // pred_check_branch
      %179 = sbr.rel (%p177) target = $region28
    $region27: #{gat_forward.5} parent=5 // pred_region
      // Predicated region
      $region29: #{gat_forward.5} parent=27 // pred_check
        %p180 = pneg %p31
      $region30: #{gat_forward.5} parent=27 // pred_check_branch
        %182 = sbr.rel (%p180) target = $region32
      $region31: #{gat_forward.5} parent=27 // pred_region
        %s183 = smul.u32 4, %s11
        %p184 = scmp.lt.s32.totalorder %s183, 7
        %s185 = scalar_select %p184, %s183, 7
        %s186 = smul.addr %s185, 2
        %s187 = smul.addr %s186, 8
        %s188 = scalar_lea.vmem %s0, %s187
        %s189 = smul.u32 4, %s11
      $region32: #{gat_forward.5} parent=27 // pred_fallthru
        _
      // Predicated region
      $region33: #{gat_forward.5} parent=27 // pred_check
        %p190 = pneg %p99
      $region34: #{gat_forward.5} parent=27 // pred_check_branch
        %192 = sbr.rel (%p190) target = $region36
      $region35: #{gat_forward.5} parent=27 // pred_region
        %s193 = smul.u32 16, %s11
        %p194 = scmp.lt.s32.totalorder %s193, 31
        %s195 = scalar_select %p194, %s193, 31
        %s196 = smul.addr %s195, 8
        %s197 = scalar_lea.vmem %s3, %s196
        %s198 = smul.u32 16, %s11
      $region36: #{gat_forward.5} parent=27 // pred_fallthru
        _
    $region28: #{gat_forward.5} parent=5 // pred_fallthru
      _
    %p199 = scmp.le.s32.totalorder 1, %s11
    %p200 = scmp.lt.s32.totalorder %s11, 3
    %p201 = pnand %p199, %p200
    %p202 = pneg %p201
    // Predicated region
    $region37: #{gat_forward.5} parent=5 // pred_check
      _
    $region38: #{gat_forward.5} parent=5 // pred_check_branch
      %204 = sbr.rel (%p201) target = $region40
    $region39: #{gat_forward.5} parent=5 // pred_region
      %s205 = ssub.s32 %s11, 1
      %s206 = smul.u32 4, %s16
      %p207 = scmp.lt.s32.totalorder %s206, 7
      %s208 = scalar_select %p207, %s206, 7
      %s209 = smul.addr %s208, 2
      %s210 = smul.addr %s209, 8
      %s211 = scalar_lea.vmem %s0, %s210
      %p212 = pneg %p37
      %p213 = pneg %p34
      %p214 = pneg %p58
      %p215 = pneg %p55
      %p216 = pneg %p79
      %p217 = pneg %p76
      %s218 = smul.u32 16, %s16
      %p219 = scmp.lt.s32.totalorder %s218, 31
      %s220 = scalar_select %p219, %s218, 31
      %s221 = smul.addr %s220, 8
      %s222 = scalar_lea.vmem %s3, %s221
      %p223 = pneg %p105
      %p224 = pneg %p102
      %p225 = pneg %p126
      %p226 = pneg %p123
      %p227 = pneg %p152
      %p228 = pneg %p149
      %s229 = smul.u32 16, %s16
      %p230 = scmp.lt.s32.totalorder %s229, 31
      %s231 = scalar_select %p230, %s229, 31
      %s232 = smul.addr %s231, 8
      %s233 = scalar_lea.vmem %s5, %s232
      %s234 = smul.u32 4, %s16
      %p235 = scmp.lt.s32.totalorder %s234, 7
      %s236 = scalar_select %p235, %s234, 7
      %s237 = smul.addr %s236, 2
      %s238 = smul.addr %s237, 8
      %s239 = scalar_lea.vmem %s0, %s238
      %s240 = smul.u32 4, %s16
      %s241 = smul.u32 16, %s16
      %p242 = scmp.lt.s32.totalorder %s241, 31
      %s243 = scalar_select %p242, %s241, 31
      %s244 = smul.addr %s243, 8
      %s245 = scalar_lea.vmem %s3, %s244
      %s246 = smul.u32 16, %s16
      %s247 = smul.u32 16, %s16
      %p248 = scmp.lt.s32.totalorder %s247, 31
      %s249 = scalar_select %p248, %s247, 31
      %s250 = smul.addr %s249, 8
      %s251 = scalar_lea.vmem %s5, %s250
      %s252 = smul.u32 16, %s16
      %v255 = vld [vmem:[%s239] sm:$0xff]
      %v256 = vld [vmem:[%s239 + $0x8] sm:$0xff]
      %v257 = vld [vmem:[%s239 + $0x10] sm:$0xff]
      %v258 = vld [vmem:[%s239 + $0x18] sm:$0xff]
      %v259 = vld [vmem:[%s239 + $0x20] sm:$0xff]
      %v260 = vld [vmem:[%s239 + $0x28] sm:$0xff]
      %v261 = vld [vmem:[%s239 + $0x30] sm:$0xff]
      %v262 = vld [vmem:[%s239 + $0x38] sm:$0xff]
      %vm263 = vnez %v255
      %vm264 = vnez %v256
      %vm265 = vnez %v257
      %vm266 = vnez %v258
      %vm267 = vnez %v259
      %vm268 = vnez %v260
      %vm269 = vnez %v261
      %vm270 = vnez %v262
      %v271 = vld [vmem:[%s4] sm:$0x1]
      %vm272 = vcmask 1048064
      %273 = vst.msk [vmem:[%s251] sm:$0xff] %vm272, 0.0
      %274 = vst.msk [vmem:[%s251 + $0x8] sm:$0xff] %vm272, 0.0
      %275 = vst.msk [vmem:[%s251 + $0x10] sm:$0xff] %vm272, 0.0
      %276 = vst.msk [vmem:[%s251 + $0x18] sm:$0xff] %vm272, 0.0
      %277 = vst.msk [vmem:[%s251 + $0x20] sm:$0xff] %vm272, 0.0
      %278 = vst.msk [vmem:[%s251 + $0x28] sm:$0xff] %vm272, 0.0
      %279 = vst.msk [vmem:[%s251 + $0x30] sm:$0xff] %vm272, 0.0
      %280 = vst.msk [vmem:[%s251 + $0x38] sm:$0xff] %vm272, 0.0
      %281 = vst.msk [vmem:[%s251 + $0x40] sm:$0xff] %vm272, 0.0
      %282 = vst.msk [vmem:[%s251 + $0x48] sm:$0xff] %vm272, 0.0
      %283 = vst.msk [vmem:[%s251 + $0x50] sm:$0xff] %vm272, 0.0
      %284 = vst.msk [vmem:[%s251 + $0x58] sm:$0xff] %vm272, 0.0
      %285 = vst.msk [vmem:[%s251 + $0x60] sm:$0xff] %vm272, 0.0
      %286 = vst.msk [vmem:[%s251 + $0x68] sm:$0xff] %vm272, 0.0
      %287 = vst.msk [vmem:[%s251 + $0x70] sm:$0xff] %vm272, 0.0
      %288 = vst.msk [vmem:[%s251 + $0x78] sm:$0xff] %vm272, 0.0
      %v289 = vld [vmem:[%s1] sm:$0xff]
      %v290 = vld [vmem:[%s1 + $0x8] sm:$0xff]
      %v291 = vld [vmem:[%s1 + $0x10] sm:$0xff]
      %v292 = vld [vmem:[%s1 + $0x18] sm:$0xff]
      %v293 = vld [vmem:[%s1 + $0x20] sm:$0xff]
      %v294 = vld [vmem:[%s1 + $0x28] sm:$0xff]
      %v295 = vld [vmem:[%s1 + $0x30] sm:$0xff]
      %v296 = vld [vmem:[%s1 + $0x38] sm:$0xff]
      %v297 = vld [vmem:[%s1 + $0x40] sm:$0xff]
      %v298 = vld [vmem:[%s1 + $0x48] sm:$0xff]
      %v299 = vld [vmem:[%s1 + $0x50] sm:$0xff]
      %v300 = vld [vmem:[%s1 + $0x58] sm:$0xff]
      %v301 = vld [vmem:[%s1 + $0x60] sm:$0xff]
      %v302 = vld [vmem:[%s1 + $0x68] sm:$0xff]
      %v303 = vld [vmem:[%s1 + $0x70] sm:$0xff]
      %v304 = vld [vmem:[%s1 + $0x78] sm:$0xff]
      %v305 = vld [vmem:[%s1 + $0x80] sm:$0xff]
      %v306 = vld [vmem:[%s1 + $0x88] sm:$0xff]
      %v307 = vld [vmem:[%s1 + $0x90] sm:$0xff]
      %v308 = vld [vmem:[%s1 + $0x98] sm:$0xff]
      %v309 = vld [vmem:[%s1 + $0xa0] sm:$0xff]
      %v310 = vld [vmem:[%s1 + $0xa8] sm:$0xff]
      %v311 = vld [vmem:[%s1 + $0xb0] sm:$0xff]
      %v312 = vld [vmem:[%s1 + $0xb8] sm:$0xff]
      %v313 = vld [vmem:[%s1 + $0xc0] sm:$0xff]
      %v314 = vld [vmem:[%s1 + $0xc8] sm:$0xff]
      %v315 = vld [vmem:[%s1 + $0xd0] sm:$0xff]
      %v316 = vld [vmem:[%s1 + $0xd8] sm:$0xff]
      %v317 = vld [vmem:[%s1 + $0xe0] sm:$0xff]
      %v318 = vld [vmem:[%s1 + $0xe8] sm:$0xff]
      %v319 = vld [vmem:[%s1 + $0xf0] sm:$0xff]
      %v320 = vld [vmem:[%s1 + $0xf8] sm:$0xff]
      %v321 = vld [vmem:[%s2] ss:$8 sm:$0x3]
      %v322 = vld [vmem:[%s245] sm:$0xff]
      %v323 = vld [vmem:[%s245 + $0x8] sm:$0xff]
      %v324 = vld [vmem:[%s245 + $0x10] sm:$0xff]
      %v325 = vld [vmem:[%s245 + $0x18] sm:$0xff]
      %v326 = vld [vmem:[%s245 + $0x20] sm:$0xff]
      %v327 = vld [vmem:[%s245 + $0x28] sm:$0xff]
      %v328 = vld [vmem:[%s245 + $0x30] sm:$0xff]
      %v329 = vld [vmem:[%s245 + $0x38] sm:$0xff]
      %v330 = vld [vmem:[%s245 + $0x40] sm:$0xff]
      %v331 = vld [vmem:[%s245 + $0x48] sm:$0xff]
      %v332 = vld [vmem:[%s245 + $0x50] sm:$0xff]
      %v333 = vld [vmem:[%s245 + $0x58] sm:$0xff]
      %v334 = vld [vmem:[%s245 + $0x60] sm:$0xff]
      %v335 = vld [vmem:[%s245 + $0x68] sm:$0xff]
      %v336 = vld [vmem:[%s245 + $0x70] sm:$0xff]
      %v337 = vld [vmem:[%s245 + $0x78] sm:$0xff]
      %339 = vset.pattern.permute.xlu0 0
      %340 = vperm.xlu0 %339, %v322
      %v341 = vpop.permute.xlu0 %340
      %344 = vset.pattern.permute.xlu0 0
      %345 = vperm.xlu0 %344, %v323
      %v346 = vpop.permute.xlu0 %345
      %349 = vset.pattern.permute.xlu0 0
      %350 = vperm.xlu0 %349, %v324
      %v351 = vpop.permute.xlu0 %350
      %354 = vset.pattern.permute.xlu0 0
      %355 = vperm.xlu0 %354, %v325
      %v356 = vpop.permute.xlu0 %355
      %359 = vset.pattern.permute.xlu0 0
      %360 = vperm.xlu0 %359, %v326
      %v361 = vpop.permute.xlu0 %360
      %364 = vset.pattern.permute.xlu0 0
      %365 = vperm.xlu0 %364, %v327
      %v366 = vpop.permute.xlu0 %365
      %369 = vset.pattern.permute.xlu0 0
      %370 = vperm.xlu0 %369, %v328
      %v371 = vpop.permute.xlu0 %370
      %374 = vset.pattern.permute.xlu0 0
      %375 = vperm.xlu0 %374, %v329
      %v376 = vpop.permute.xlu0 %375
      %379 = vset.pattern.permute.xlu0 0
      %380 = vperm.xlu0 %379, %v330
      %v381 = vpop.permute.xlu0 %380
      %384 = vset.pattern.permute.xlu0 0
      %385 = vperm.xlu0 %384, %v331
      %v386 = vpop.permute.xlu0 %385
      %389 = vset.pattern.permute.xlu0 0
      %390 = vperm.xlu0 %389, %v332
      %v391 = vpop.permute.xlu0 %390
      %394 = vset.pattern.permute.xlu0 0
      %395 = vperm.xlu0 %394, %v333
      %v396 = vpop.permute.xlu0 %395
      %399 = vset.pattern.permute.xlu0 0
      %400 = vperm.xlu0 %399, %v334
      %v401 = vpop.permute.xlu0 %400
      %404 = vset.pattern.permute.xlu0 0
      %405 = vperm.xlu0 %404, %v335
      %v406 = vpop.permute.xlu0 %405
      %409 = vset.pattern.permute.xlu0 0
      %410 = vperm.xlu0 %409, %v336
      %v411 = vpop.permute.xlu0 %410
      %414 = vset.pattern.permute.xlu0 0
      %415 = vperm.xlu0 %414, %v337
      %v416 = vpop.permute.xlu0 %415
      %v419 = vlaneseq
      %v420 = vshrl.u32 %v419, 7
      %v421 = vsub.s32 0, %v420
      %v422 = vrot.slane %v321, %v421
      %v423 = vlaneseq
      %v424 = vshrl.u32 %v423, 7
      %v425 = vsub.s32 1, %v424
      %v426 = vrot.slane %v321, %v425
      %v429 = vadd.f32 %v341, %v422
      %v430 = vadd.f32 %v341, %v426
      %v431 = vadd.f32 %v346, %v422
      %v432 = vadd.f32 %v346, %v426
      %v433 = vadd.f32 %v351, %v422
      %v434 = vadd.f32 %v351, %v426
      %v435 = vadd.f32 %v356, %v422
      %v436 = vadd.f32 %v356, %v426
      %v437 = vadd.f32 %v361, %v422
      %v438 = vadd.f32 %v361, %v426
      %v439 = vadd.f32 %v366, %v422
      %v440 = vadd.f32 %v366, %v426
      %v441 = vadd.f32 %v371, %v422
      %v442 = vadd.f32 %v371, %v426
      %v443 = vadd.f32 %v376, %v422
      %v444 = vadd.f32 %v376, %v426
      %v445 = vadd.f32 %v381, %v422
      %v446 = vadd.f32 %v381, %v426
      %v447 = vadd.f32 %v386, %v422
      %v448 = vadd.f32 %v386, %v426
      %v449 = vadd.f32 %v391, %v422
      %v450 = vadd.f32 %v391, %v426
      %v451 = vadd.f32 %v396, %v422
      %v452 = vadd.f32 %v396, %v426
      %v453 = vadd.f32 %v401, %v422
      %v454 = vadd.f32 %v401, %v426
      %v455 = vadd.f32 %v406, %v422
      %v456 = vadd.f32 %v406, %v426
      %v457 = vadd.f32 %v411, %v422
      %v458 = vadd.f32 %v411, %v426
      %v459 = vadd.f32 %v416, %v422
      %v460 = vadd.f32 %v416, %v426
      %vm461 = vcmp.ge.f32.partialorder %v429, 0.0
      %vm462 = vcmp.ge.f32.partialorder %v430, 0.0
      %vm463 = vcmp.ge.f32.partialorder %v431, 0.0
      %vm464 = vcmp.ge.f32.partialorder %v432, 0.0
      %vm465 = vcmp.ge.f32.partialorder %v433, 0.0
      %vm466 = vcmp.ge.f32.partialorder %v434, 0.0
      %vm467 = vcmp.ge.f32.partialorder %v435, 0.0
      %vm468 = vcmp.ge.f32.partialorder %v436, 0.0
      %vm469 = vcmp.ge.f32.partialorder %v437, 0.0
      %vm470 = vcmp.ge.f32.partialorder %v438, 0.0
      %vm471 = vcmp.ge.f32.partialorder %v439, 0.0
      %vm472 = vcmp.ge.f32.partialorder %v440, 0.0
      %vm473 = vcmp.ge.f32.partialorder %v441, 0.0
      %vm474 = vcmp.ge.f32.partialorder %v442, 0.0
      %vm475 = vcmp.ge.f32.partialorder %v443, 0.0
      %vm476 = vcmp.ge.f32.partialorder %v444, 0.0
      %vm477 = vcmp.ge.f32.partialorder %v445, 0.0
      %vm478 = vcmp.ge.f32.partialorder %v446, 0.0
      %vm479 = vcmp.ge.f32.partialorder %v447, 0.0
      %vm480 = vcmp.ge.f32.partialorder %v448, 0.0
      %vm481 = vcmp.ge.f32.partialorder %v449, 0.0
      %vm482 = vcmp.ge.f32.partialorder %v450, 0.0
      %vm483 = vcmp.ge.f32.partialorder %v451, 0.0
      %vm484 = vcmp.ge.f32.partialorder %v452, 0.0
      %vm485 = vcmp.ge.f32.partialorder %v453, 0.0
      %vm486 = vcmp.ge.f32.partialorder %v454, 0.0
      %vm487 = vcmp.ge.f32.partialorder %v455, 0.0
      %vm488 = vcmp.ge.f32.partialorder %v456, 0.0
      %vm489 = vcmp.ge.f32.partialorder %v457, 0.0
      %vm490 = vcmp.ge.f32.partialorder %v458, 0.0
      %vm491 = vcmp.ge.f32.partialorder %v459, 0.0
      %vm492 = vcmp.ge.f32.partialorder %v460, 0.0
      %v493 = vmul.f32 %v429, 0.2
      %v494 = vmul.f32 %v430, 0.2
      %v495 = vmul.f32 %v431, 0.2
      %v496 = vmul.f32 %v432, 0.2
      %v497 = vmul.f32 %v433, 0.2
      %v498 = vmul.f32 %v434, 0.2
      %v499 = vmul.f32 %v435, 0.2
      %v500 = vmul.f32 %v436, 0.2
      %v501 = vmul.f32 %v437, 0.2
      %v502 = vmul.f32 %v438, 0.2
      %v503 = vmul.f32 %v439, 0.2
      %v504 = vmul.f32 %v440, 0.2
      %v505 = vmul.f32 %v441, 0.2
      %v506 = vmul.f32 %v442, 0.2
      %v507 = vmul.f32 %v443, 0.2
      %v508 = vmul.f32 %v444, 0.2
      %v509 = vmul.f32 %v445, 0.2
      %v510 = vmul.f32 %v446, 0.2
      %v511 = vmul.f32 %v447, 0.2
      %v512 = vmul.f32 %v448, 0.2
      %v513 = vmul.f32 %v449, 0.2
      %v514 = vmul.f32 %v450, 0.2
      %v515 = vmul.f32 %v451, 0.2
      %v516 = vmul.f32 %v452, 0.2
      %v517 = vmul.f32 %v453, 0.2
      %v518 = vmul.f32 %v454, 0.2
      %v519 = vmul.f32 %v455, 0.2
      %v520 = vmul.f32 %v456, 0.2
      %v521 = vmul.f32 %v457, 0.2
      %v522 = vmul.f32 %v458, 0.2
      %v523 = vmul.f32 %v459, 0.2
      %v524 = vmul.f32 %v460, 0.2
      %v525 = vsel %vm461, %v429, %v493
      %v526 = vsel %vm462, %v430, %v494
      %v527 = vsel %vm463, %v431, %v495
      %v528 = vsel %vm464, %v432, %v496
      %v529 = vsel %vm465, %v433, %v497
      %v530 = vsel %vm466, %v434, %v498
      %v531 = vsel %vm467, %v435, %v499
      %v532 = vsel %vm468, %v436, %v500
      %v533 = vsel %vm469, %v437, %v501
      %v534 = vsel %vm470, %v438, %v502
      %v535 = vsel %vm471, %v439, %v503
      %v536 = vsel %vm472, %v440, %v504
      %v537 = vsel %vm473, %v441, %v505
      %v538 = vsel %vm474, %v442, %v506
      %v539 = vsel %vm475, %v443, %v507
      %v540 = vsel %vm476, %v444, %v508
      %v541 = vsel %vm477, %v445, %v509
      %v542 = vsel %vm478, %v446, %v510
      %v543 = vsel %vm479, %v447, %v511
      %v544 = vsel %vm480, %v448, %v512
      %v545 = vsel %vm481, %v449, %v513
      %v546 = vsel %vm482, %v450, %v514
      %v547 = vsel %vm483, %v451, %v515
      %v548 = vsel %vm484, %v452, %v516
      %v549 = vsel %vm485, %v453, %v517
      %v550 = vsel %vm486, %v454, %v518
      %v551 = vsel %vm487, %v455, %v519
      %v552 = vsel %vm488, %v456, %v520
      %v553 = vsel %vm489, %v457, %v521
      %v554 = vsel %vm490, %v458, %v522
      %v555 = vsel %vm491, %v459, %v523
      %v556 = vsel %vm492, %v460, %v524
      %v557 = vsel %vm263, 16843009, 0
      %v558 = vsel %vm264, 16843009, 0
      %v559 = vsel %vm265, 16843009, 0
      %v560 = vsel %vm266, 16843009, 0
      %v561 = vsel %vm267, 16843009, 0
      %v562 = vsel %vm268, 16843009, 0
      %v563 = vsel %vm269, 16843009, 0
      %v564 = vsel %vm270, 16843009, 0
      %v565 = vunpack.c.0.s8 %v557
      %v566 = vunpack.c.0.s8 %v558
      %v567 = vunpack.c.1.s8 %v557
      %v568 = vunpack.c.1.s8 %v558
      %v569 = vunpack.c.2.s8 %v557
      %v570 = vunpack.c.2.s8 %v558
      %v571 = vunpack.c.3.s8 %v557
      %v572 = vunpack.c.3.s8 %v558
      %v573 = vunpack.c.0.s8 %v559
      %v574 = vunpack.c.0.s8 %v560
      %v575 = vunpack.c.1.s8 %v559
      %v576 = vunpack.c.1.s8 %v560
      %v577 = vunpack.c.2.s8 %v559
      %v578 = vunpack.c.2.s8 %v560
      %v579 = vunpack.c.3.s8 %v559
      %v580 = vunpack.c.3.s8 %v560
      %v581 = vunpack.c.0.s8 %v561
      %v582 = vunpack.c.0.s8 %v562
      %v583 = vunpack.c.1.s8 %v561
      %v584 = vunpack.c.1.s8 %v562
      %v585 = vunpack.c.2.s8 %v561
      %v586 = vunpack.c.2.s8 %v562
      %v587 = vunpack.c.3.s8 %v561
      %v588 = vunpack.c.3.s8 %v562
      %v589 = vunpack.c.0.s8 %v563
      %v590 = vunpack.c.0.s8 %v564
      %v591 = vunpack.c.1.s8 %v563
      %v592 = vunpack.c.1.s8 %v564
      %v593 = vunpack.c.2.s8 %v563
      %v594 = vunpack.c.2.s8 %v564
      %v595 = vunpack.c.3.s8 %v563
      %v596 = vunpack.c.3.s8 %v564
      %v597 = vpack.c.b16 %v566, %v565
      %v598 = vpack.c.b8 %v597, %v597
      %v599 = vpack.c.b16 %v568, %v567
      %v600 = vpack.c.b8 %v599, %v599
      %v601 = vpack.c.b16 %v570, %v569
      %v602 = vpack.c.b8 %v601, %v601
      %v603 = vpack.c.b16 %v572, %v571
      %v604 = vpack.c.b8 %v603, %v603
      %v605 = vpack.c.b16 %v574, %v573
      %v606 = vpack.c.b8 %v605, %v605
      %v607 = vpack.c.b16 %v576, %v575
      %v608 = vpack.c.b8 %v607, %v607
      %v609 = vpack.c.b16 %v578, %v577
      %v610 = vpack.c.b8 %v609, %v609
      %v611 = vpack.c.b16 %v580, %v579
      %v612 = vpack.c.b8 %v611, %v611
      %v613 = vpack.c.b16 %v582, %v581
      %v614 = vpack.c.b8 %v613, %v613
      %v615 = vpack.c.b16 %v584, %v583
      %v616 = vpack.c.b8 %v615, %v615
      %v617 = vpack.c.b16 %v586, %v585
      %v618 = vpack.c.b8 %v617, %v617
      %v619 = vpack.c.b16 %v588, %v587
      %v620 = vpack.c.b8 %v619, %v619
      %v621 = vpack.c.b16 %v590, %v589
      %v622 = vpack.c.b8 %v621, %v621
      %v623 = vpack.c.b16 %v592, %v591
      %v624 = vpack.c.b8 %v623, %v623
      %v625 = vpack.c.b16 %v594, %v593
      %v626 = vpack.c.b8 %v625, %v625
      %v627 = vpack.c.b16 %v596, %v595
      %v628 = vpack.c.b8 %v627, %v627
      %vm629 = vnez %v598
      %vm630 = vnez %v600
      %vm631 = vnez %v602
      %vm632 = vnez %v604
      %vm633 = vnez %v606
      %vm634 = vnez %v608
      %vm635 = vnez %v610
      %vm636 = vnez %v612
      %vm637 = vnez %v614
      %vm638 = vnez %v616
      %vm639 = vnez %v618
      %vm640 = vnez %v620
      %vm641 = vnez %v622
      %vm642 = vnez %v624
      %vm643 = vnez %v626
      %vm644 = vnez %v628
      %v645 = vsel %vm629, 16843009, 0
      %v646 = vsel %vm630, 16843009, 0
      %v647 = vsel %vm631, 16843009, 0
      %v648 = vsel %vm632, 16843009, 0
      %v649 = vsel %vm633, 16843009, 0
      %v650 = vsel %vm634, 16843009, 0
      %v651 = vsel %vm635, 16843009, 0
      %v652 = vsel %vm636, 16843009, 0
      %v653 = vsel %vm637, 16843009, 0
      %v654 = vsel %vm638, 16843009, 0
      %v655 = vsel %vm639, 16843009, 0
      %v656 = vsel %vm640, 16843009, 0
      %v657 = vsel %vm641, 16843009, 0
      %v658 = vsel %vm642, 16843009, 0
      %v659 = vsel %vm643, 16843009, 0
      %v660 = vsel %vm644, 16843009, 0
      %v661 = vunpack.c.0.s8 %v645
      %v662 = vunpack.c.1.s8 %v645
      %v663 = vunpack.c.0.s8 %v646
      %v664 = vunpack.c.1.s8 %v646
      %v665 = vunpack.c.0.s8 %v647
      %v666 = vunpack.c.1.s8 %v647
      %v667 = vunpack.c.0.s8 %v648
      %v668 = vunpack.c.1.s8 %v648
      %v669 = vunpack.c.0.s8 %v649
      %v670 = vunpack.c.1.s8 %v649
      %v671 = vunpack.c.0.s8 %v650
      %v672 = vunpack.c.1.s8 %v650
      %v673 = vunpack.c.0.s8 %v651
      %v674 = vunpack.c.1.s8 %v651
      %v675 = vunpack.c.0.s8 %v652
      %v676 = vunpack.c.1.s8 %v652
      %v677 = vunpack.c.0.s8 %v653
      %v678 = vunpack.c.1.s8 %v653
      %v679 = vunpack.c.0.s8 %v654
      %v680 = vunpack.c.1.s8 %v654
      %v681 = vunpack.c.0.s8 %v655
      %v682 = vunpack.c.1.s8 %v655
      %v683 = vunpack.c.0.s8 %v656
      %v684 = vunpack.c.1.s8 %v656
      %v685 = vunpack.c.0.s8 %v657
      %v686 = vunpack.c.1.s8 %v657
      %v687 = vunpack.c.0.s8 %v658
      %v688 = vunpack.c.1.s8 %v658
      %v689 = vunpack.c.0.s8 %v659
      %v690 = vunpack.c.1.s8 %v659
      %v691 = vunpack.c.0.s8 %v660
      %v692 = vunpack.c.1.s8 %v660
      %vm693 = vcmp.ne.s32.totalorder %v661, 0
      %vm694 = vcmp.ne.s32.totalorder %v662, 0
      %vm695 = vcmp.ne.s32.totalorder %v663, 0
      %vm696 = vcmp.ne.s32.totalorder %v664, 0
      %vm697 = vcmp.ne.s32.totalorder %v665, 0
      %vm698 = vcmp.ne.s32.totalorder %v666, 0
      %vm699 = vcmp.ne.s32.totalorder %v667, 0
      %vm700 = vcmp.ne.s32.totalorder %v668, 0
      %vm701 = vcmp.ne.s32.totalorder %v669, 0
      %vm702 = vcmp.ne.s32.totalorder %v670, 0
      %vm703 = vcmp.ne.s32.totalorder %v671, 0
      %vm704 = vcmp.ne.s32.totalorder %v672, 0
      %vm705 = vcmp.ne.s32.totalorder %v673, 0
      %vm706 = vcmp.ne.s32.totalorder %v674, 0
      %vm707 = vcmp.ne.s32.totalorder %v675, 0
      %vm708 = vcmp.ne.s32.totalorder %v676, 0
      %vm709 = vcmp.ne.s32.totalorder %v677, 0
      %vm710 = vcmp.ne.s32.totalorder %v678, 0
      %vm711 = vcmp.ne.s32.totalorder %v679, 0
      %vm712 = vcmp.ne.s32.totalorder %v680, 0
      %vm713 = vcmp.ne.s32.totalorder %v681, 0
      %vm714 = vcmp.ne.s32.totalorder %v682, 0
      %vm715 = vcmp.ne.s32.totalorder %v683, 0
      %vm716 = vcmp.ne.s32.totalorder %v684, 0
      %vm717 = vcmp.ne.s32.totalorder %v685, 0
      %vm718 = vcmp.ne.s32.totalorder %v686, 0
      %vm719 = vcmp.ne.s32.totalorder %v687, 0
      %vm720 = vcmp.ne.s32.totalorder %v688, 0
      %vm721 = vcmp.ne.s32.totalorder %v689, 0
      %vm722 = vcmp.ne.s32.totalorder %v690, 0
      %vm723 = vcmp.ne.s32.totalorder %v691, 0
      %vm724 = vcmp.ne.s32.totalorder %v692, 0
      %v725 = vsel %vm693, %v525, -1e+30
      %v726 = vsel %vm694, %v526, -1e+30
      %v727 = vsel %vm695, %v527, -1e+30
      %v728 = vsel %vm696, %v528, -1e+30
      %v729 = vsel %vm697, %v529, -1e+30
      %v730 = vsel %vm698, %v530, -1e+30
      %v731 = vsel %vm699, %v531, -1e+30
      %v732 = vsel %vm700, %v532, -1e+30
      %v733 = vsel %vm701, %v533, -1e+30
      %v734 = vsel %vm702, %v534, -1e+30
      %v735 = vsel %vm703, %v535, -1e+30
      %v736 = vsel %vm704, %v536, -1e+30
      %v737 = vsel %vm705, %v537, -1e+30
      %v738 = vsel %vm706, %v538, -1e+30
      %v739 = vsel %vm707, %v539, -1e+30
      %v740 = vsel %vm708, %v540, -1e+30
      %v741 = vsel %vm709, %v541, -1e+30
      %v742 = vsel %vm710, %v542, -1e+30
      %v743 = vsel %vm711, %v543, -1e+30
      %v744 = vsel %vm712, %v544, -1e+30
      %v745 = vsel %vm713, %v545, -1e+30
      %v746 = vsel %vm714, %v546, -1e+30
      %v747 = vsel %vm715, %v547, -1e+30
      %v748 = vsel %vm716, %v548, -1e+30
      %v749 = vsel %vm717, %v549, -1e+30
      %v750 = vsel %vm718, %v550, -1e+30
      %v751 = vsel %vm719, %v551, -1e+30
      %v752 = vsel %vm720, %v552, -1e+30
      %v753 = vsel %vm721, %v553, -1e+30
      %v754 = vsel %vm722, %v554, -1e+30
      %v755 = vsel %vm723, %v555, -1e+30
      %v756 = vsel %vm724, %v556, -1e+30
      %v757 = vmax.f32 %v725, %v726
      %758 = vmax.xlane.f32.xlu0 %v757
      %v759 = vpop.xlane.xlu0 %758
      %v760 = vmax.f32 %v727, %v728
      %761 = vmax.xlane.f32.xlu0 %v760
      %v762 = vpop.xlane.xlu0 %761
      %v763 = vmax.f32 %v729, %v730
      %764 = vmax.xlane.f32.xlu0 %v763
      %v765 = vpop.xlane.xlu0 %764
      %v766 = vmax.f32 %v731, %v732
      %767 = vmax.xlane.f32.xlu0 %v766
      %v768 = vpop.xlane.xlu0 %767
      %v769 = vmax.f32 %v733, %v734
      %770 = vmax.xlane.f32.xlu0 %v769
      %v771 = vpop.xlane.xlu0 %770
      %v772 = vmax.f32 %v735, %v736
      %773 = vmax.xlane.f32.xlu0 %v772
      %v774 = vpop.xlane.xlu0 %773
      %v775 = vmax.f32 %v737, %v738
      %776 = vmax.xlane.f32.xlu0 %v775
      %v777 = vpop.xlane.xlu0 %776
      %v778 = vmax.f32 %v739, %v740
      %779 = vmax.xlane.f32.xlu0 %v778
      %v780 = vpop.xlane.xlu0 %779
      %v781 = vmax.f32 %v741, %v742
      %782 = vmax.xlane.f32.xlu0 %v781
      %v783 = vpop.xlane.xlu0 %782
      %v784 = vmax.f32 %v743, %v744
      %785 = vmax.xlane.f32.xlu0 %v784
      %v786 = vpop.xlane.xlu0 %785
      %v787 = vmax.f32 %v745, %v746
      %788 = vmax.xlane.f32.xlu0 %v787
      %v789 = vpop.xlane.xlu0 %788
      %v790 = vmax.f32 %v747, %v748
      %791 = vmax.xlane.f32.xlu0 %v790
      %v792 = vpop.xlane.xlu0 %791
      %v793 = vmax.f32 %v749, %v750
      %794 = vmax.xlane.f32.xlu0 %v793
      %v795 = vpop.xlane.xlu0 %794
      %v796 = vmax.f32 %v751, %v752
      %797 = vmax.xlane.f32.xlu0 %v796
      %v798 = vpop.xlane.xlu0 %797
      %v799 = vmax.f32 %v753, %v754
      %800 = vmax.xlane.f32.xlu0 %v799
      %v801 = vpop.xlane.xlu0 %800
      %v802 = vmax.f32 %v755, %v756
      %803 = vmax.xlane.f32.xlu0 %v802
      %v804 = vpop.xlane.xlu0 %803
      %v805 = vsub.f32 %v725, %v759
      %v806 = vsub.f32 %v726, %v759
      %v807 = vsub.f32 %v727, %v762
      %v808 = vsub.f32 %v728, %v762
      %v809 = vsub.f32 %v729, %v765
      %v810 = vsub.f32 %v730, %v765
      %v811 = vsub.f32 %v731, %v768
      %v812 = vsub.f32 %v732, %v768
      %v813 = vsub.f32 %v733, %v771
      %v814 = vsub.f32 %v734, %v771
      %v815 = vsub.f32 %v735, %v774
      %v816 = vsub.f32 %v736, %v774
      %v817 = vsub.f32 %v737, %v777
      %v818 = vsub.f32 %v738, %v777
      %v819 = vsub.f32 %v739, %v780
      %v820 = vsub.f32 %v740, %v780
      %v821 = vsub.f32 %v741, %v783
      %v822 = vsub.f32 %v742, %v783
      %v823 = vsub.f32 %v743, %v786
      %v824 = vsub.f32 %v744, %v786
      %v825 = vsub.f32 %v745, %v789
      %v826 = vsub.f32 %v746, %v789
      %v827 = vsub.f32 %v747, %v792
      %v828 = vsub.f32 %v748, %v792
      %v829 = vsub.f32 %v749, %v795
      %v830 = vsub.f32 %v750, %v795
      %v831 = vsub.f32 %v751, %v798
      %v832 = vsub.f32 %v752, %v798
      %v833 = vsub.f32 %v753, %v801
      %v834 = vsub.f32 %v754, %v801
      %v835 = vsub.f32 %v755, %v804
      %v836 = vsub.f32 %v756, %v804
      %v837 = vmul.f32 %v805, 1.442695
      %v838 = vpow.pop %v837
      %v839 = vmul.f32 %v806, 1.442695
      %v840 = vpow.pop %v839
      %v841 = vmul.f32 %v807, 1.442695
      %v842 = vpow.pop %v841
      %v843 = vmul.f32 %v808, 1.442695
      %v844 = vpow.pop %v843
      %v845 = vmul.f32 %v809, 1.442695
      %v846 = vpow.pop %v845
      %v847 = vmul.f32 %v810, 1.442695
      %v848 = vpow.pop %v847
      %v849 = vmul.f32 %v811, 1.442695
      %v850 = vpow.pop %v849
      %v851 = vmul.f32 %v812, 1.442695
      %v852 = vpow.pop %v851
      %v853 = vmul.f32 %v813, 1.442695
      %v854 = vpow.pop %v853
      %v855 = vmul.f32 %v814, 1.442695
      %v856 = vpow.pop %v855
      %v857 = vmul.f32 %v815, 1.442695
      %v858 = vpow.pop %v857
      %v859 = vmul.f32 %v816, 1.442695
      %v860 = vpow.pop %v859
      %v861 = vmul.f32 %v817, 1.442695
      %v862 = vpow.pop %v861
      %v863 = vmul.f32 %v818, 1.442695
      %v864 = vpow.pop %v863
      %v865 = vmul.f32 %v819, 1.442695
      %v866 = vpow.pop %v865
      %v867 = vmul.f32 %v820, 1.442695
      %v868 = vpow.pop %v867
      %v869 = vmul.f32 %v821, 1.442695
      %v870 = vpow.pop %v869
      %v871 = vmul.f32 %v822, 1.442695
      %v872 = vpow.pop %v871
      %v873 = vmul.f32 %v823, 1.442695
      %v874 = vpow.pop %v873
      %v875 = vmul.f32 %v824, 1.442695
      %v876 = vpow.pop %v875
      %v877 = vmul.f32 %v825, 1.442695
      %v878 = vpow.pop %v877
      %v879 = vmul.f32 %v826, 1.442695
      %v880 = vpow.pop %v879
      %v881 = vmul.f32 %v827, 1.442695
      %v882 = vpow.pop %v881
      %v883 = vmul.f32 %v828, 1.442695
      %v884 = vpow.pop %v883
      %v885 = vmul.f32 %v829, 1.442695
      %v886 = vpow.pop %v885
      %v887 = vmul.f32 %v830, 1.442695
      %v888 = vpow.pop %v887
      %v889 = vmul.f32 %v831, 1.442695
      %v890 = vpow.pop %v889
      %v891 = vmul.f32 %v832, 1.442695
      %v892 = vpow.pop %v891
      %v893 = vmul.f32 %v833, 1.442695
      %v894 = vpow.pop %v893
      %v895 = vmul.f32 %v834, 1.442695
      %v896 = vpow.pop %v895
      %v897 = vmul.f32 %v835, 1.442695
      %v898 = vpow.pop %v897
      %v899 = vmul.f32 %v836, 1.442695
      %v900 = vpow.pop %v899
      %v901 = vadd.f32 %v838, %v840
      %902 = vadd.xlane.f32.xlu0 %v901
      %v903 = vpop.xlane.xlu0 %902
      %v904 = vadd.f32 %v842, %v844
      %905 = vadd.xlane.f32.xlu0 %v904
      %v906 = vpop.xlane.xlu0 %905
      %v907 = vadd.f32 %v846, %v848
      %908 = vadd.xlane.f32.xlu0 %v907
      %v909 = vpop.xlane.xlu0 %908
      %v910 = vadd.f32 %v850, %v852
      %911 = vadd.xlane.f32.xlu0 %v910
      %v912 = vpop.xlane.xlu0 %911
      %v913 = vadd.f32 %v854, %v856
      %914 = vadd.xlane.f32.xlu0 %v913
      %v915 = vpop.xlane.xlu0 %914
      %v916 = vadd.f32 %v858, %v860
      %917 = vadd.xlane.f32.xlu0 %v916
      %v918 = vpop.xlane.xlu0 %917
      %v919 = vadd.f32 %v862, %v864
      %920 = vadd.xlane.f32.xlu0 %v919
      %v921 = vpop.xlane.xlu0 %920
      %v922 = vadd.f32 %v866, %v868
      %923 = vadd.xlane.f32.xlu0 %v922
      %v924 = vpop.xlane.xlu0 %923
      %v925 = vadd.f32 %v870, %v872
      %926 = vadd.xlane.f32.xlu0 %v925
      %v927 = vpop.xlane.xlu0 %926
      %v928 = vadd.f32 %v874, %v876
      %929 = vadd.xlane.f32.xlu0 %v928
      %v930 = vpop.xlane.xlu0 %929
      %v931 = vadd.f32 %v878, %v880
      %932 = vadd.xlane.f32.xlu0 %v931
      %v933 = vpop.xlane.xlu0 %932
      %v934 = vadd.f32 %v882, %v884
      %935 = vadd.xlane.f32.xlu0 %v934
      %v936 = vpop.xlane.xlu0 %935
      %v937 = vadd.f32 %v886, %v888
      %938 = vadd.xlane.f32.xlu0 %v937
      %v939 = vpop.xlane.xlu0 %938
      %v940 = vadd.f32 %v890, %v892
      %941 = vadd.xlane.f32.xlu0 %v940
      %v942 = vpop.xlane.xlu0 %941
      %v943 = vadd.f32 %v894, %v896
      %944 = vadd.xlane.f32.xlu0 %v943
      %v945 = vpop.xlane.xlu0 %944
      %v946 = vadd.f32 %v898, %v900
      %947 = vadd.xlane.f32.xlu0 %v946
      %v948 = vpop.xlane.xlu0 %947
      %949 = vmatprep.subr.mxu0 0.0
      %950 = vmatpush1.msra.mxu0 %v289
      %951 = vmatprep.subr.mxu0 0.0
      %952 = vmatpush1.msra.mxu0 %v290
      %953 = vmatprep.subr.mxu0 0.0
      %954 = vmatpush1.msra.mxu0 %v291
      %955 = vmatprep.subr.mxu0 0.0
      %956 = vmatpush1.msra.mxu0 %v292
      %957 = vmatprep.subr.mxu0 0.0
      %958 = vmatpush1.msra.mxu0 %v293
      %959 = vmatprep.subr.mxu0 0.0
      %960 = vmatpush1.msra.mxu0 %v294
      %961 = vmatprep.subr.mxu0 0.0
      %962 = vmatpush1.msra.mxu0 %v295
      %963 = vmatprep.subr.mxu0 0.0
      %964 = vmatpush1.msra.mxu0 %v296
      %965 = vmatprep.subr.mxu0 0.0
      %966 = vmatpush1.msra.mxu0 %v297
      %967 = vmatprep.subr.mxu0 0.0
      %968 = vmatpush1.msra.mxu0 %v298
      %969 = vmatprep.subr.mxu0 0.0
      %970 = vmatpush1.msra.mxu0 %v299
      %971 = vmatprep.subr.mxu0 0.0
      %972 = vmatpush1.msra.mxu0 %v300
      %973 = vmatprep.subr.mxu0 0.0
      %974 = vmatpush1.msra.mxu0 %v301
      %975 = vmatprep.subr.mxu0 0.0
      %976 = vmatpush1.msra.mxu0 %v302
      %977 = vmatprep.subr.mxu0 0.0
      %978 = vmatpush1.msra.mxu0 %v303
      %979 = vmatprep.subr.mxu0 0.0
      %980 = vmatpush1.msra.mxu0 %v304
      %981 = vmatprep.subr.mxu0 0.0
      %982 = vmatpush1.msra.mxu0 %v305
      %983 = vmatprep.subr.mxu0 0.0
      %984 = vmatpush1.msra.mxu0 %v306
      %985 = vmatprep.subr.mxu0 0.0
      %986 = vmatpush1.msra.mxu0 %v307
      %987 = vmatprep.subr.mxu0 0.0
      %988 = vmatpush1.msra.mxu0 %v308
      %989 = vmatprep.subr.mxu0 0.0
      %990 = vmatpush1.msra.mxu0 %v309
      %991 = vmatprep.subr.mxu0 0.0
      %992 = vmatpush1.msra.mxu0 %v310
      %993 = vmatprep.subr.mxu0 0.0
      %994 = vmatpush1.msra.mxu0 %v311
      %995 = vmatprep.subr.mxu0 0.0
      %996 = vmatpush1.msra.mxu0 %v312
      %997 = vmatprep.subr.mxu0 0.0
      %998 = vmatpush1.msra.mxu0 %v313
      %999 = vmatprep.subr.mxu0 0.0
      %1000 = vmatpush1.msra.mxu0 %v314
      %1001 = vmatprep.subr.mxu0 0.0
      %1002 = vmatpush1.msra.mxu0 %v315
      %1003 = vmatprep.subr.mxu0 0.0
      %1004 = vmatpush1.msra.mxu0 %v316
      %1005 = vmatprep.subr.mxu0 0.0
      %1006 = vmatpush1.msra.mxu0 %v317
      %1007 = vmatprep.subr.mxu0 0.0
      %1008 = vmatpush1.msra.mxu0 %v318
      %1009 = vmatprep.subr.mxu0 0.0
      %1010 = vmatpush1.msra.mxu0 %v319
      %1011 = vmatprep.subr.mxu0 0.0
      %1012 = vmatpush1.msra.mxu0 %v320
      %1013 = vmatprep.mubr.f32.mxu0 %v840
      %1014 = vmatmul.mubr.f32.gmra.mrb[0].mxu0 %v838
      %v1015 = vpop.f32.mrb[0].mxu0
      %v1016 = vadd.f32 0.0, %v1015
      %v1017 = vpop.f32.mrb[0].mxu0
      %1018 = vmatprep.mubr.f32.mxu0 %v844
      %1019 = vmatmul.mubr.f32.gmra.mrb[0].mxu0 %v842
      %v1020 = vpop.f32.mrb[0].mxu0
      %v1021 = vadd.f32 0.0, %v1020
      %v1022 = vpop.f32.mrb[0].mxu0
      %1023 = vmatprep.mubr.f32.mxu0 %v848
      %1024 = vmatmul.mubr.f32.gmra.mrb[0].mxu0 %v846
      %v1025 = vpop.f32.mrb[0].mxu0
      %v1026 = vadd.f32 0.0, %v1025
      %v1027 = vpop.f32.mrb[0].mxu0
      %1028 = vmatprep.mubr.f32.mxu0 %v852
      %1029 = vmatmul.mubr.f32.gmra.mrb[0].mxu0 %v850
      %v1030 = vpop.f32.mrb[0].mxu0
      %v1031 = vadd.f32 0.0, %v1030
      %v1032 = vpop.f32.mrb[0].mxu0
      %1033 = vmatprep.mubr.f32.mxu0 %v856
      %1034 = vmatmul.mubr.f32.gmra.mrb[0].mxu0 %v854
      %v1035 = vpop.f32.mrb[0].mxu0
      %v1036 = vadd.f32 0.0, %v1035
      %v1037 = vpop.f32.mrb[0].mxu0
      %1038 = vmatprep.mubr.f32.mxu0 %v860
      %1039 = vmatmul.mubr.f32.gmra.mrb[0].mxu0 %v858
      %v1040 = vpop.f32.mrb[0].mxu0
      %v1041 = vadd.f32 0.0, %v1040
      %v1042 = vpop.f32.mrb[0].mxu0
      %1043 = vmatprep.mubr.f32.mxu0 %v864
      %1044 = vmatmul.mubr.f32.gmra.mrb[0].mxu0 %v862
      %v1045 = vpop.f32.mrb[0].mxu0
      %v1046 = vadd.f32 0.0, %v1045
      %v1047 = vpop.f32.mrb[0].mxu0
      %1048 = vmatprep.mubr.f32.mxu0 %v868
      %1049 = vmatmul.mubr.f32.gmra.mrb[0].mxu0 %v866
      %v1050 = vpop.f32.mrb[0].mxu0
      %v1051 = vadd.f32 0.0, %v1050
      %v1052 = vpop.f32.mrb[0].mxu0
      %1053 = vmatprep.mubr.f32.mxu0 %v872
      %1054 = vmatmul.mubr.f32.gmra.mrb[0].mxu0 %v870
      %v1055 = vpop.f32.mrb[0].mxu0
      %v1056 = vadd.f32 0.0, %v1055
      %v1057 = vpop.f32.mrb[0].mxu0
      %1058 = vmatprep.mubr.f32.mxu0 %v876
      %1059 = vmatmul.mubr.f32.gmra.mrb[0].mxu0 %v874
      %v1060 = vpop.f32.mrb[0].mxu0
      %v1061 = vadd.f32 0.0, %v1060
      %v1062 = vpop.f32.mrb[0].mxu0
      %1063 = vmatprep.mubr.f32.mxu0 %v880
      %1064 = vmatmul.mubr.f32.gmra.mrb[0].mxu0 %v878
      %v1065 = vpop.f32.mrb[0].mxu0
      %v1066 = vadd.f32 0.0, %v1065
      %v1067 = vpop.f32.mrb[0].mxu0
      %1068 = vmatprep.mubr.f32.mxu0 %v884
      %1069 = vmatmul.mubr.f32.gmra.mrb[0].mxu0 %v882
      %v1070 = vpop.f32.mrb[0].mxu0
      %v1071 = vadd.f32 0.0, %v1070
      %v1072 = vpop.f32.mrb[0].mxu0
      %1073 = vmatprep.mubr.f32.mxu0 %v888
      %1074 = vmatmul.mubr.f32.gmra.mrb[0].mxu0 %v886
      %v1075 = vpop.f32.mrb[0].mxu0
      %v1076 = vadd.f32 0.0, %v1075
      %v1077 = vpop.f32.mrb[0].mxu0
      %1078 = vmatprep.mubr.f32.mxu0 %v892
      %1079 = vmatmul.mubr.f32.gmra.mrb[0].mxu0 %v890
      %v1080 = vpop.f32.mrb[0].mxu0
      %v1081 = vadd.f32 0.0, %v1080
      %v1082 = vpop.f32.mrb[0].mxu0
      %1083 = vmatprep.mubr.f32.mxu0 %v896
      %1084 = vmatmul.mubr.f32.gmra.mrb[0].mxu0 %v894
      %v1085 = vpop.f32.mrb[0].mxu0
      %v1086 = vadd.f32 0.0, %v1085
      %v1087 = vpop.f32.mrb[0].mxu0
      %1088 = vmatprep.mubr.f32.mxu0 %v900
      %1089 = vmatmul.mubr.f32.gmra.mrb[0].mxu0 %v898
      %v1090 = vpop.f32.mrb[0].mxu0
      %v1091 = vadd.f32 0.0, %v1090
      %v1092 = vpop.f32.mrb[0].mxu0
      %1093 = vdwg.mxu0
      %v1094 = vrcp.pop %v903
      %v1095 = vrcp.pop %v906
      %v1096 = vrcp.pop %v909
      %v1097 = vrcp.pop %v912
      %v1098 = vrcp.pop %v915
      %v1099 = vrcp.pop %v918
      %v1100 = vrcp.pop %v921
      %v1101 = vrcp.pop %v924
      %v1102 = vrcp.pop %v927
      %v1103 = vrcp.pop %v930
      %v1104 = vrcp.pop %v933
      %v1105 = vrcp.pop %v936
      %v1106 = vrcp.pop %v939
      %v1107 = vrcp.pop %v942
      %v1108 = vrcp.pop %v945
      %v1109 = vrcp.pop %v948
      %v1110 = vmul.f32 %v1016, %v1094
      %v1111 = vmul.f32 %v1021, %v1095
      %v1112 = vmul.f32 %v1026, %v1096
      %v1113 = vmul.f32 %v1031, %v1097
      %v1114 = vmul.f32 %v1036, %v1098
      %v1115 = vmul.f32 %v1041, %v1099
      %v1116 = vmul.f32 %v1046, %v1100
      %v1117 = vmul.f32 %v1051, %v1101
      %v1118 = vmul.f32 %v1056, %v1102
      %v1119 = vmul.f32 %v1061, %v1103
      %v1120 = vmul.f32 %v1066, %v1104
      %v1121 = vmul.f32 %v1071, %v1105
      %v1122 = vmul.f32 %v1076, %v1106
      %v1123 = vmul.f32 %v1081, %v1107
      %v1124 = vmul.f32 %v1086, %v1108
      %v1125 = vmul.f32 %v1091, %v1109
      %v1127 = vlaneseq
      %v1128 = vshrl.u32 %v1127, 7
      %v1129 = vsub.s32 0, %v1128
      %v1130 = vrot.slane %v271, %v1129
      %v1132 = vadd.f32 %v1110, %v1130
      %v1133 = vadd.f32 %v1111, %v1130
      %v1134 = vadd.f32 %v1112, %v1130
      %v1135 = vadd.f32 %v1113, %v1130
      %v1136 = vadd.f32 %v1114, %v1130
      %v1137 = vadd.f32 %v1115, %v1130
      %v1138 = vadd.f32 %v1116, %v1130
      %v1139 = vadd.f32 %v1117, %v1130
      %v1140 = vadd.f32 %v1118, %v1130
      %v1141 = vadd.f32 %v1119, %v1130
      %v1142 = vadd.f32 %v1120, %v1130
      %v1143 = vadd.f32 %v1121, %v1130
      %v1144 = vadd.f32 %v1122, %v1130
      %v1145 = vadd.f32 %v1123, %v1130
      %v1146 = vadd.f32 %v1124, %v1130
      %v1147 = vadd.f32 %v1125, %v1130
      %v1148 = vmax.f32 %v1132, 0.0
      %v1149 = vmax.f32 %v1133, 0.0
      %v1150 = vmax.f32 %v1134, 0.0
      %v1151 = vmax.f32 %v1135, 0.0
      %v1152 = vmax.f32 %v1136, 0.0
      %v1153 = vmax.f32 %v1137, 0.0
      %v1154 = vmax.f32 %v1138, 0.0
      %v1155 = vmax.f32 %v1139, 0.0
      %v1156 = vmax.f32 %v1140, 0.0
      %v1157 = vmax.f32 %v1141, 0.0
      %v1158 = vmax.f32 %v1142, 0.0
      %v1159 = vmax.f32 %v1143, 0.0
      %v1160 = vmax.f32 %v1144, 0.0
      %v1161 = vmax.f32 %v1145, 0.0
      %v1162 = vmax.f32 %v1146, 0.0
      %v1163 = vmax.f32 %v1147, 0.0
      %vm1164 = vcmask 261120
      %1165 = vst.msk [vmem:[%s251] sm:$0xff] %vm1164, %v1148
      %1166 = vst.msk [vmem:[%s251 + $0x8] sm:$0xff] %vm1164, %v1149
      %1167 = vst.msk [vmem:[%s251 + $0x10] sm:$0xff] %vm1164, %v1150
      %1168 = vst.msk [vmem:[%s251 + $0x18] sm:$0xff] %vm1164, %v1151
      %1169 = vst.msk [vmem:[%s251 + $0x20] sm:$0xff] %vm1164, %v1152
      %1170 = vst.msk [vmem:[%s251 + $0x28] sm:$0xff] %vm1164, %v1153
      %1171 = vst.msk [vmem:[%s251 + $0x30] sm:$0xff] %vm1164, %v1154
      %1172 = vst.msk [vmem:[%s251 + $0x38] sm:$0xff] %vm1164, %v1155
      %1173 = vst.msk [vmem:[%s251 + $0x40] sm:$0xff] %vm1164, %v1156
      %1174 = vst.msk [vmem:[%s251 + $0x48] sm:$0xff] %vm1164, %v1157
      %1175 = vst.msk [vmem:[%s251 + $0x50] sm:$0xff] %vm1164, %v1158
      %1176 = vst.msk [vmem:[%s251 + $0x58] sm:$0xff] %vm1164, %v1159
      %1177 = vst.msk [vmem:[%s251 + $0x60] sm:$0xff] %vm1164, %v1160
      %1178 = vst.msk [vmem:[%s251 + $0x68] sm:$0xff] %vm1164, %v1161
      %1179 = vst.msk [vmem:[%s251 + $0x70] sm:$0xff] %vm1164, %v1162
      %1180 = vst.msk [vmem:[%s251 + $0x78] sm:$0xff] %vm1164, %v1163
      %v1181 = vld [vmem:[%s1] sm:$0xff]
      %v1182 = vld [vmem:[%s1 + $0x8] sm:$0xff]
      %v1183 = vld [vmem:[%s1 + $0x10] sm:$0xff]
      %v1184 = vld [vmem:[%s1 + $0x18] sm:$0xff]
      %v1185 = vld [vmem:[%s1 + $0x20] sm:$0xff]
      %v1186 = vld [vmem:[%s1 + $0x28] sm:$0xff]
      %v1187 = vld [vmem:[%s1 + $0x30] sm:$0xff]
      %v1188 = vld [vmem:[%s1 + $0x38] sm:$0xff]
      %v1189 = vld [vmem:[%s1 + $0x40] sm:$0xff]
      %v1190 = vld [vmem:[%s1 + $0x48] sm:$0xff]
      %v1191 = vld [vmem:[%s1 + $0x50] sm:$0xff]
      %v1192 = vld [vmem:[%s1 + $0x58] sm:$0xff]
      %v1193 = vld [vmem:[%s1 + $0x60] sm:$0xff]
      %v1194 = vld [vmem:[%s1 + $0x68] sm:$0xff]
      %v1195 = vld [vmem:[%s1 + $0x70] sm:$0xff]
      %v1196 = vld [vmem:[%s1 + $0x78] sm:$0xff]
      %v1197 = vld [vmem:[%s1 + $0x80] sm:$0xff]
      %v1198 = vld [vmem:[%s1 + $0x88] sm:$0xff]
      %v1199 = vld [vmem:[%s1 + $0x90] sm:$0xff]
      %v1200 = vld [vmem:[%s1 + $0x98] sm:$0xff]
      %v1201 = vld [vmem:[%s1 + $0xa0] sm:$0xff]
      %v1202 = vld [vmem:[%s1 + $0xa8] sm:$0xff]
      %v1203 = vld [vmem:[%s1 + $0xb0] sm:$0xff]
      %v1204 = vld [vmem:[%s1 + $0xb8] sm:$0xff]
      %v1205 = vld [vmem:[%s1 + $0xc0] sm:$0xff]
      %v1206 = vld [vmem:[%s1 + $0xc8] sm:$0xff]
      %v1207 = vld [vmem:[%s1 + $0xd0] sm:$0xff]
      %v1208 = vld [vmem:[%s1 + $0xd8] sm:$0xff]
      %v1209 = vld [vmem:[%s1 + $0xe0] sm:$0xff]
      %v1210 = vld [vmem:[%s1 + $0xe8] sm:$0xff]
      %v1211 = vld [vmem:[%s1 + $0xf0] sm:$0xff]
      %v1212 = vld [vmem:[%s1 + $0xf8] sm:$0xff]
      %s1213 = scalar_lea.vmem %s2, 1
      %v1214 = vld [vmem:[%s1213] ss:$8 sm:$0x3]
      %v1215 = vld [vmem:[%s245] sm:$0xff]
      %v1216 = vld [vmem:[%s245 + $0x8] sm:$0xff]
      %v1217 = vld [vmem:[%s245 + $0x10] sm:$0xff]
      %v1218 = vld [vmem:[%s245 + $0x18] sm:$0xff]
      %v1219 = vld [vmem:[%s245 + $0x20] sm:$0xff]
      %v1220 = vld [vmem:[%s245 + $0x28] sm:$0xff]
      %v1221 = vld [vmem:[%s245 + $0x30] sm:$0xff]
      %v1222 = vld [vmem:[%s245 + $0x38] sm:$0xff]
      %v1223 = vld [vmem:[%s245 + $0x40] sm:$0xff]
      %v1224 = vld [vmem:[%s245 + $0x48] sm:$0xff]
      %v1225 = vld [vmem:[%s245 + $0x50] sm:$0xff]
      %v1226 = vld [vmem:[%s245 + $0x58] sm:$0xff]
      %v1227 = vld [vmem:[%s245 + $0x60] sm:$0xff]
      %v1228 = vld [vmem:[%s245 + $0x68] sm:$0xff]
      %v1229 = vld [vmem:[%s245 + $0x70] sm:$0xff]
      %v1230 = vld [vmem:[%s245 + $0x78] sm:$0xff]
      %1232 = vset.pattern.permute.xlu0 1
      %1233 = vperm.xlu0 %1232, %v1215
      %v1234 = vpop.permute.xlu0 %1233
      %1237 = vset.pattern.permute.xlu0 1
      %1238 = vperm.xlu0 %1237, %v1216
      %v1239 = vpop.permute.xlu0 %1238
      %1242 = vset.pattern.permute.xlu0 1
      %1243 = vperm.xlu0 %1242, %v1217
      %v1244 = vpop.permute.xlu0 %1243
      %1247 = vset.pattern.permute.xlu0 1
      %1248 = vperm.xlu0 %1247, %v1218
      %v1249 = vpop.permute.xlu0 %1248
      %1252 = vset.pattern.permute.xlu0 1
      %1253 = vperm.xlu0 %1252, %v1219
      %v1254 = vpop.permute.xlu0 %1253
      %1257 = vset.pattern.permute.xlu0 1
      %1258 = vperm.xlu0 %1257, %v1220
      %v1259 = vpop.permute.xlu0 %1258
      %1262 = vset.pattern.permute.xlu0 1
      %1263 = vperm.xlu0 %1262, %v1221
      %v1264 = vpop.permute.xlu0 %1263
      %1267 = vset.pattern.permute.xlu0 1
      %1268 = vperm.xlu0 %1267, %v1222
      %v1269 = vpop.permute.xlu0 %1268
      %1272 = vset.pattern.permute.xlu0 1
      %1273 = vperm.xlu0 %1272, %v1223
      %v1274 = vpop.permute.xlu0 %1273
      %1277 = vset.pattern.permute.xlu0 1
      %1278 = vperm.xlu0 %1277, %v1224
      %v1279 = vpop.permute.xlu0 %1278
      %1282 = vset.pattern.permute.xlu0 1
      %1283 = vperm.xlu0 %1282, %v1225
      %v1284 = vpop.permute.xlu0 %1283
      %1287 = vset.pattern.permute.xlu0 1
      %1288 = vperm.xlu0 %1287, %v1226
      %v1289 = vpop.permute.xlu0 %1288
      %1292 = vset.pattern.permute.xlu0 1
      %1293 = vperm.xlu0 %1292, %v1227
      %v1294 = vpop.permute.xlu0 %1293
      %1297 = vset.pattern.permute.xlu0 1
      %1298 = vperm.xlu0 %1297, %v1228
      %v1299 = vpop.permute.xlu0 %1298
      %1302 = vset.pattern.permute.xlu0 1
      %1303 = vperm.xlu0 %1302, %v1229
      %v1304 = vpop.permute.xlu0 %1303
      %1307 = vset.pattern.permute.xlu0 1
      %1308 = vperm.xlu0 %1307, %v1230
      %v1309 = vpop.permute.xlu0 %1308
      %v1312 = vlaneseq
      %v1313 = vshrl.u32 %v1312, 7
      %v1314 = vsub.s32 0, %v1313
      %v1315 = vrot.slane %v1214, %v1314
      %v1316 = vlaneseq
      %v1317 = vshrl.u32 %v1316, 7
      %v1318 = vsub.s32 1, %v1317
      %v1319 = vrot.slane %v1214, %v1318
      %v1322 = vadd.f32 %v1234, %v1315
      %v1323 = vadd.f32 %v1234, %v1319
      %v1324 = vadd.f32 %v1239, %v1315
      %v1325 = vadd.f32 %v1239, %v1319
      %v1326 = vadd.f32 %v1244, %v1315
      %v1327 = vadd.f32 %v1244, %v1319
      %v1328 = vadd.f32 %v1249, %v1315
      %v1329 = vadd.f32 %v1249, %v1319
      %v1330 = vadd.f32 %v1254, %v1315
      %v1331 = vadd.f32 %v1254, %v1319
      %v1332 = vadd.f32 %v1259, %v1315
      %v1333 = vadd.f32 %v1259, %v1319
      %v1334 = vadd.f32 %v1264, %v1315
      %v1335 = vadd.f32 %v1264, %v1319
      %v1336 = vadd.f32 %v1269, %v1315
      %v1337 = vadd.f32 %v1269, %v1319
      %v1338 = vadd.f32 %v1274, %v1315
      %v1339 = vadd.f32 %v1274, %v1319
      %v1340 = vadd.f32 %v1279, %v1315
      %v1341 = vadd.f32 %v1279, %v1319
      %v1342 = vadd.f32 %v1284, %v1315
      %v1343 = vadd.f32 %v1284, %v1319
      %v1344 = vadd.f32 %v1289, %v1315
      %v1345 = vadd.f32 %v1289, %v1319
      %v1346 = vadd.f32 %v1294, %v1315
      %v1347 = vadd.f32 %v1294, %v1319
      %v1348 = vadd.f32 %v1299, %v1315
      %v1349 = vadd.f32 %v1299, %v1319
      %v1350 = vadd.f32 %v1304, %v1315
      %v1351 = vadd.f32 %v1304, %v1319
      %v1352 = vadd.f32 %v1309, %v1315
      %v1353 = vadd.f32 %v1309, %v1319
      %vm1354 = vcmp.ge.f32.partialorder %v1322, 0.0
      %vm1355 = vcmp.ge.f32.partialorder %v1323, 0.0
      %vm1356 = vcmp.ge.f32.partialorder %v1324, 0.0
      %vm1357 = vcmp.ge.f32.partialorder %v1325, 0.0
      %vm1358 = vcmp.ge.f32.partialorder %v1326, 0.0
      %vm1359 = vcmp.ge.f32.partialorder %v1327, 0.0
      %vm1360 = vcmp.ge.f32.partialorder %v1328, 0.0
      %vm1361 = vcmp.ge.f32.partialorder %v1329, 0.0
      %vm1362 = vcmp.ge.f32.partialorder %v1330, 0.0
      %vm1363 = vcmp.ge.f32.partialorder %v1331, 0.0
      %vm1364 = vcmp.ge.f32.partialorder %v1332, 0.0
      %vm1365 = vcmp.ge.f32.partialorder %v1333, 0.0
      %vm1366 = vcmp.ge.f32.partialorder %v1334, 0.0
      %vm1367 = vcmp.ge.f32.partialorder %v1335, 0.0
      %vm1368 = vcmp.ge.f32.partialorder %v1336, 0.0
      %vm1369 = vcmp.ge.f32.partialorder %v1337, 0.0
      %vm1370 = vcmp.ge.f32.partialorder %v1338, 0.0
      %vm1371 = vcmp.ge.f32.partialorder %v1339, 0.0
      %vm1372 = vcmp.ge.f32.partialorder %v1340, 0.0
      %vm1373 = vcmp.ge.f32.partialorder %v1341, 0.0
      %vm1374 = vcmp.ge.f32.partialorder %v1342, 0.0
      %vm1375 = vcmp.ge.f32.partialorder %v1343, 0.0
      %vm1376 = vcmp.ge.f32.partialorder %v1344, 0.0
      %vm1377 = vcmp.ge.f32.partialorder %v1345, 0.0
      %vm1378 = vcmp.ge.f32.partialorder %v1346, 0.0
      %vm1379 = vcmp.ge.f32.partialorder %v1347, 0.0
      %vm1380 = vcmp.ge.f32.partialorder %v1348, 0.0
      %vm1381 = vcmp.ge.f32.partialorder %v1349, 0.0
      %vm1382 = vcmp.ge.f32.partialorder %v1350, 0.0
      %vm1383 = vcmp.ge.f32.partialorder %v1351, 0.0
      %vm1384 = vcmp.ge.f32.partialorder %v1352, 0.0
      %vm1385 = vcmp.ge.f32.partialorder %v1353, 0.0
      %v1386 = vmul.f32 %v1322, 0.2
      %v1387 = vmul.f32 %v1323, 0.2
      %v1388 = vmul.f32 %v1324, 0.2
      %v1389 = vmul.f32 %v1325, 0.2
      %v1390 = vmul.f32 %v1326, 0.2
      %v1391 = vmul.f32 %v1327, 0.2
      %v1392 = vmul.f32 %v1328, 0.2
      %v1393 = vmul.f32 %v1329, 0.2
      %v1394 = vmul.f32 %v1330, 0.2
      %v1395 = vmul.f32 %v1331, 0.2
      %v1396 = vmul.f32 %v1332, 0.2
      %v1397 = vmul.f32 %v1333, 0.2
      %v1398 = vmul.f32 %v1334, 0.2
      %v1399 = vmul.f32 %v1335, 0.2
      %v1400 = vmul.f32 %v1336, 0.2
      %v1401 = vmul.f32 %v1337, 0.2
      %v1402 = vmul.f32 %v1338, 0.2
      %v1403 = vmul.f32 %v1339, 0.2
      %v1404 = vmul.f32 %v1340, 0.2
      %v1405 = vmul.f32 %v1341, 0.2
      %v1406 = vmul.f32 %v1342, 0.2
      %v1407 = vmul.f32 %v1343, 0.2
      %v1408 = vmul.f32 %v1344, 0.2
      %v1409 = vmul.f32 %v1345, 0.2
      %v1410 = vmul.f32 %v1346, 0.2
      %v1411 = vmul.f32 %v1347, 0.2
      %v1412 = vmul.f32 %v1348, 0.2
      %v1413 = vmul.f32 %v1349, 0.2
      %v1414 = vmul.f32 %v1350, 0.2
      %v1415 = vmul.f32 %v1351, 0.2
      %v1416 = vmul.f32 %v1352, 0.2
      %v1417 = vmul.f32 %v1353, 0.2
      %v1418 = vsel %vm1354, %v1322, %v1386
      %v1419 = vsel %vm1355, %v1323, %v1387
      %v1420 = vsel %vm1356, %v1324, %v1388
      %v1421 = vsel %vm1357, %v1325, %v1389
      %v1422 = vsel %vm1358, %v1326, %v1390
      %v1423 = vsel %vm1359, %v1327, %v1391
      %v1424 = vsel %vm1360, %v1328, %v1392
      %v1425 = vsel %vm1361, %v1329, %v1393
      %v1426 = vsel %vm1362, %v1330, %v1394
      %v1427 = vsel %vm1363, %v1331, %v1395
      %v1428 = vsel %vm1364, %v1332, %v1396
      %v1429 = vsel %vm1365, %v1333, %v1397
      %v1430 = vsel %vm1366, %v1334, %v1398
      %v1431 = vsel %vm1367, %v1335, %v1399
      %v1432 = vsel %vm1368, %v1336, %v1400
      %v1433 = vsel %vm1369, %v1337, %v1401
      %v1434 = vsel %vm1370, %v1338, %v1402
      %v1435 = vsel %vm1371, %v1339, %v1403
      %v1436 = vsel %vm1372, %v1340, %v1404
      %v1437 = vsel %vm1373, %v1341, %v1405
      %v1438 = vsel %vm1374, %v1342, %v1406
      %v1439 = vsel %vm1375, %v1343, %v1407
      %v1440 = vsel %vm1376, %v1344, %v1408
      %v1441 = vsel %vm1377, %v1345, %v1409
      %v1442 = vsel %vm1378, %v1346, %v1410
      %v1443 = vsel %vm1379, %v1347, %v1411
      %v1444 = vsel %vm1380, %v1348, %v1412
      %v1445 = vsel %vm1381, %v1349, %v1413
      %v1446 = vsel %vm1382, %v1350, %v1414
      %v1447 = vsel %vm1383, %v1351, %v1415
      %v1448 = vsel %vm1384, %v1352, %v1416
      %v1449 = vsel %vm1385, %v1353, %v1417
      %v1450 = vsel %vm693, %v1418, -1e+30
      %v1451 = vsel %vm694, %v1419, -1e+30
      %v1452 = vsel %vm695, %v1420, -1e+30
      %v1453 = vsel %vm696, %v1421, -1e+30
      %v1454 = vsel %vm697, %v1422, -1e+30
      %v1455 = vsel %vm698, %v1423, -1e+30
      %v1456 = vsel %vm699, %v1424, -1e+30
      %v1457 = vsel %vm700, %v1425, -1e+30
      %v1458 = vsel %vm701, %v1426, -1e+30
      %v1459 = vsel %vm702, %v1427, -1e+30
      %v1460 = vsel %vm703, %v1428, -1e+30
      %v1461 = vsel %vm704, %v1429, -1e+30
      %v1462 = vsel %vm705, %v1430, -1e+30
      %v1463 = vsel %vm706, %v1431, -1e+30
      %v1464 = vsel %vm707, %v1432, -1e+30
      %v1465 = vsel %vm708, %v1433, -1e+30
      %v1466 = vsel %vm709, %v1434, -1e+30
      %v1467 = vsel %vm710, %v1435, -1e+30
      %v1468 = vsel %vm711, %v1436, -1e+30
      %v1469 = vsel %vm712, %v1437, -1e+30
      %v1470 = vsel %vm713, %v1438, -1e+30
      %v1471 = vsel %vm714, %v1439, -1e+30
      %v1472 = vsel %vm715, %v1440, -1e+30
      %v1473 = vsel %vm716, %v1441, -1e+30
      %v1474 = vsel %vm717, %v1442, -1e+30
      %v1475 = vsel %vm718, %v1443, -1e+30
      %v1476 = vsel %vm719, %v1444, -1e+30
      %v1477 = vsel %vm720, %v1445, -1e+30
      %v1478 = vsel %vm721, %v1446, -1e+30
      %v1479 = vsel %vm722, %v1447, -1e+30
      %v1480 = vsel %vm723, %v1448, -1e+30
      %v1481 = vsel %vm724, %v1449, -1e+30
      %v1482 = vmax.f32 %v1450, %v1451
      %1483 = vmax.xlane.f32.xlu0 %v1482
      %v1484 = vpop.xlane.xlu0 %1483
      %v1485 = vmax.f32 %v1452, %v1453
      %1486 = vmax.xlane.f32.xlu0 %v1485
      %v1487 = vpop.xlane.xlu0 %1486
      %v1488 = vmax.f32 %v1454, %v1455
      %1489 = vmax.xlane.f32.xlu0 %v1488
      %v1490 = vpop.xlane.xlu0 %1489
      %v1491 = vmax.f32 %v1456, %v1457
      %1492 = vmax.xlane.f32.xlu0 %v1491
      %v1493 = vpop.xlane.xlu0 %1492
      %v1494 = vmax.f32 %v1458, %v1459
      %1495 = vmax.xlane.f32.xlu0 %v1494
      %v1496 = vpop.xlane.xlu0 %1495
      %v1497 = vmax.f32 %v1460, %v1461
      %1498 = vmax.xlane.f32.xlu0 %v1497
      %v1499 = vpop.xlane.xlu0 %1498
      %v1500 = vmax.f32 %v1462, %v1463
      %1501 = vmax.xlane.f32.xlu0 %v1500
      %v1502 = vpop.xlane.xlu0 %1501
      %v1503 = vmax.f32 %v1464, %v1465
      %1504 = vmax.xlane.f32.xlu0 %v1503
      %v1505 = vpop.xlane.xlu0 %1504
      %v1506 = vmax.f32 %v1466, %v1467
      %1507 = vmax.xlane.f32.xlu0 %v1506
      %v1508 = vpop.xlane.xlu0 %1507
      %v1509 = vmax.f32 %v1468, %v1469
      %1510 = vmax.xlane.f32.xlu0 %v1509
      %v1511 = vpop.xlane.xlu0 %1510
      %v1512 = vmax.f32 %v1470, %v1471
      %1513 = vmax.xlane.f32.xlu0 %v1512
      %v1514 = vpop.xlane.xlu0 %1513
      %v1515 = vmax.f32 %v1472, %v1473
      %1516 = vmax.xlane.f32.xlu0 %v1515
      %v1517 = vpop.xlane.xlu0 %1516
      %v1518 = vmax.f32 %v1474, %v1475
      %1519 = vmax.xlane.f32.xlu0 %v1518
      %v1520 = vpop.xlane.xlu0 %1519
      %v1521 = vmax.f32 %v1476, %v1477
      %1522 = vmax.xlane.f32.xlu0 %v1521
      %v1523 = vpop.xlane.xlu0 %1522
      %v1524 = vmax.f32 %v1478, %v1479
      %1525 = vmax.xlane.f32.xlu0 %v1524
      %v1526 = vpop.xlane.xlu0 %1525
      %v1527 = vmax.f32 %v1480, %v1481
      %1528 = vmax.xlane.f32.xlu0 %v1527
      %v1529 = vpop.xlane.xlu0 %1528
      %v1530 = vsub.f32 %v1450, %v1484
      %v1531 = vsub.f32 %v1451, %v1484
      %v1532 = vsub.f32 %v1452, %v1487
      %v1533 = vsub.f32 %v1453, %v1487
      %v1534 = vsub.f32 %v1454, %v1490
      %v1535 = vsub.f32 %v1455, %v1490
      %v1536 = vsub.f32 %v1456, %v1493
      %v1537 = vsub.f32 %v1457, %v1493
      %v1538 = vsub.f32 %v1458, %v1496
      %v1539 = vsub.f32 %v1459, %v1496
      %v1540 = vsub.f32 %v1460, %v1499
      %v1541 = vsub.f32 %v1461, %v1499
      %v1542 = vsub.f32 %v1462, %v1502
      %v1543 = vsub.f32 %v1463, %v1502
      %v1544 = vsub.f32 %v1464, %v1505
      %v1545 = vsub.f32 %v1465, %v1505
      %v1546 = vsub.f32 %v1466, %v1508
      %v1547 = vsub.f32 %v1467, %v1508
      %v1548 = vsub.f32 %v1468, %v1511
      %v1549 = vsub.f32 %v1469, %v1511
      %v1550 = vsub.f32 %v1470, %v1514
      %v1551 = vsub.f32 %v1471, %v1514
      %v1552 = vsub.f32 %v1472, %v1517
      %v1553 = vsub.f32 %v1473, %v1517
      %v1554 = vsub.f32 %v1474, %v1520
      %v1555 = vsub.f32 %v1475, %v1520
      %v1556 = vsub.f32 %v1476, %v1523
      %v1557 = vsub.f32 %v1477, %v1523
      %v1558 = vsub.f32 %v1478, %v1526
      %v1559 = vsub.f32 %v1479, %v1526
      %v1560 = vsub.f32 %v1480, %v1529
      %v1561 = vsub.f32 %v1481, %v1529
      %v1562 = vmul.f32 %v1530, 1.442695
      %v1563 = vpow.pop %v1562
      %v1564 = vmul.f32 %v1531, 1.442695
      %v1565 = vpow.pop %v1564
      %v1566 = vmul.f32 %v1532, 1.442695
      %v1567 = vpow.pop %v1566
      %v1568 = vmul.f32 %v1533, 1.442695
      %v1569 = vpow.pop %v1568
      %v1570 = vmul.f32 %v1534, 1.442695
      %v1571 = vpow.pop %v1570
      %v1572 = vmul.f32 %v1535, 1.442695
      %v1573 = vpow.pop %v1572
      %v1574 = vmul.f32 %v1536, 1.442695
      %v1575 = vpow.pop %v1574
      %v1576 = vmul.f32 %v1537, 1.442695
      %v1577 = vpow.pop %v1576
      %v1578 = vmul.f32 %v1538, 1.442695
      %v1579 = vpow.pop %v1578
      %v1580 = vmul.f32 %v1539, 1.442695
      %v1581 = vpow.pop %v1580
      %v1582 = vmul.f32 %v1540, 1.442695
      %v1583 = vpow.pop %v1582
      %v1584 = vmul.f32 %v1541, 1.442695
      %v1585 = vpow.pop %v1584
      %v1586 = vmul.f32 %v1542, 1.442695
      %v1587 = vpow.pop %v1586
      %v1588 = vmul.f32 %v1543, 1.442695
      %v1589 = vpow.pop %v1588
      %v1590 = vmul.f32 %v1544, 1.442695
      %v1591 = vpow.pop %v1590
      %v1592 = vmul.f32 %v1545, 1.442695
      %v1593 = vpow.pop %v1592
      %v1594 = vmul.f32 %v1546, 1.442695
      %v1595 = vpow.pop %v1594
      %v1596 = vmul.f32 %v1547, 1.442695
      %v1597 = vpow.pop %v1596
      %v1598 = vmul.f32 %v1548, 1.442695
      %v1599 = vpow.pop %v1598
      %v1600 = vmul.f32 %v1549, 1.442695
      %v1601 = vpow.pop %v1600
      %v1602 = vmul.f32 %v1550, 1.442695
      %v1603 = vpow.pop %v1602
      %v1604 = vmul.f32 %v1551, 1.442695
      %v1605 = vpow.pop %v1604
      %v1606 = vmul.f32 %v1552, 1.442695
      %v1607 = vpow.pop %v1606
      %v1608 = vmul.f32 %v1553, 1.442695
      %v1609 = vpow.pop %v1608
      %v1610 = vmul.f32 %v1554, 1.442695
      %v1611 = vpow.pop %v1610
      %v1612 = vmul.f32 %v1555, 1.442695
      %v1613 = vpow.pop %v1612
      %v1614 = vmul.f32 %v1556, 1.442695
      %v1615 = vpow.pop %v1614
      %v1616 = vmul.f32 %v1557, 1.442695
      %v1617 = vpow.pop %v1616
      %v1618 = vmul.f32 %v1558, 1.442695
      %v1619 = vpow.pop %v1618
      %v1620 = vmul.f32 %v1559, 1.442695
      %v1621 = vpow.pop %v1620
      %v1622 = vmul.f32 %v1560, 1.442695
      %v1623 = vpow.pop %v1622
      %v1624 = vmul.f32 %v1561, 1.442695
      %v1625 = vpow.pop %v1624
      %v1626 = vadd.f32 %v1563, %v1565
      %1627 = vadd.xlane.f32.xlu0 %v1626
      %v1628 = vpop.xlane.xlu0 %1627
      %v1629 = vadd.f32 %v1567, %v1569
      %1630 = vadd.xlane.f32.xlu0 %v1629
      %v1631 = vpop.xlane.xlu0 %1630
      %v1632 = vadd.f32 %v1571, %v1573
      %1633 = vadd.xlane.f32.xlu0 %v1632
      %v1634 = vpop.xlane.xlu0 %1633
      %v1635 = vadd.f32 %v1575, %v1577
      %1636 = vadd.xlane.f32.xlu0 %v1635
      %v1637 = vpop.xlane.xlu0 %1636
      %v1638 = vadd.f32 %v1579, %v1581
      %1639 = vadd.xlane.f32.xlu0 %v1638
      %v1640 = vpop.xlane.xlu0 %1639
      %v1641 = vadd.f32 %v1583, %v1585
      %1642 = vadd.xlane.f32.xlu0 %v1641
      %v1643 = vpop.xlane.xlu0 %1642
      %v1644 = vadd.f32 %v1587, %v1589
      %1645 = vadd.xlane.f32.xlu0 %v1644
      %v1646 = vpop.xlane.xlu0 %1645
      %v1647 = vadd.f32 %v1591, %v1593
      %1648 = vadd.xlane.f32.xlu0 %v1647
      %v1649 = vpop.xlane.xlu0 %1648
      %v1650 = vadd.f32 %v1595, %v1597
      %1651 = vadd.xlane.f32.xlu0 %v1650
      %v1652 = vpop.xlane.xlu0 %1651
      %v1653 = vadd.f32 %v1599, %v1601
      %1654 = vadd.xlane.f32.xlu0 %v1653
      %v1655 = vpop.xlane.xlu0 %1654
      %v1656 = vadd.f32 %v1603, %v1605
      %1657 = vadd.xlane.f32.xlu0 %v1656
      %v1658 = vpop.xlane.xlu0 %1657
      %v1659 = vadd.f32 %v1607, %v1609
      %1660 = vadd.xlane.f32.xlu0 %v1659
      %v1661 = vpop.xlane.xlu0 %1660
      %v1662 = vadd.f32 %v1611, %v1613
      %1663 = vadd.xlane.f32.xlu0 %v1662
      %v1664 = vpop.xlane.xlu0 %1663
      %v1665 = vadd.f32 %v1615, %v1617
      %1666 = vadd.xlane.f32.xlu0 %v1665
      %v1667 = vpop.xlane.xlu0 %1666
      %v1668 = vadd.f32 %v1619, %v1621
      %1669 = vadd.xlane.f32.xlu0 %v1668
      %v1670 = vpop.xlane.xlu0 %1669
      %v1671 = vadd.f32 %v1623, %v1625
      %1672 = vadd.xlane.f32.xlu0 %v1671
      %v1673 = vpop.xlane.xlu0 %1672
      %1706 = vrot.lane.b32.xlu0 %v1181, 96
      %v1707 = vpop.permute.xlu0 %1706
      %1708 = vrot.lane.b32.xlu0 %v1182, 96
      %v1709 = vpop.permute.xlu0 %1708
      %1710 = vrot.lane.b32.xlu0 %v1183, 96
      %v1711 = vpop.permute.xlu0 %1710
      %1712 = vrot.lane.b32.xlu0 %v1184, 96
      %v1713 = vpop.permute.xlu0 %1712
      %1714 = vrot.lane.b32.xlu0 %v1185, 96
      %v1715 = vpop.permute.xlu0 %1714
      %1716 = vrot.lane.b32.xlu0 %v1186, 96
      %v1717 = vpop.permute.xlu0 %1716
      %1718 = vrot.lane.b32.xlu0 %v1187, 96
      %v1719 = vpop.permute.xlu0 %1718
      %1720 = vrot.lane.b32.xlu0 %v1188, 96
      %v1721 = vpop.permute.xlu0 %1720
      %1722 = vrot.lane.b32.xlu0 %v1189, 96
      %v1723 = vpop.permute.xlu0 %1722
      %1724 = vrot.lane.b32.xlu0 %v1190, 96
      %v1725 = vpop.permute.xlu0 %1724
      %1726 = vrot.lane.b32.xlu0 %v1191, 96
      %v1727 = vpop.permute.xlu0 %1726
      %1728 = vrot.lane.b32.xlu0 %v1192, 96
      %v1729 = vpop.permute.xlu0 %1728
      %1730 = vrot.lane.b32.xlu0 %v1193, 96
      %v1731 = vpop.permute.xlu0 %1730
      %1732 = vrot.lane.b32.xlu0 %v1194, 96
      %v1733 = vpop.permute.xlu0 %1732
      %1734 = vrot.lane.b32.xlu0 %v1195, 96
      %v1735 = vpop.permute.xlu0 %1734
      %1736 = vrot.lane.b32.xlu0 %v1196, 96
      %v1737 = vpop.permute.xlu0 %1736
      %1738 = vrot.lane.b32.xlu0 %v1197, 96
      %v1739 = vpop.permute.xlu0 %1738
      %1740 = vrot.lane.b32.xlu0 %v1198, 96
      %v1741 = vpop.permute.xlu0 %1740
      %1742 = vrot.lane.b32.xlu0 %v1199, 96
      %v1743 = vpop.permute.xlu0 %1742
      %1744 = vrot.lane.b32.xlu0 %v1200, 96
      %v1745 = vpop.permute.xlu0 %1744
      %1746 = vrot.lane.b32.xlu0 %v1201, 96
      %v1747 = vpop.permute.xlu0 %1746
      %1748 = vrot.lane.b32.xlu0 %v1202, 96
      %v1749 = vpop.permute.xlu0 %1748
      %1750 = vrot.lane.b32.xlu0 %v1203, 96
      %v1751 = vpop.permute.xlu0 %1750
      %1752 = vrot.lane.b32.xlu0 %v1204, 96
      %v1753 = vpop.permute.xlu0 %1752
      %1754 = vrot.lane.b32.xlu0 %v1205, 96
      %v1755 = vpop.permute.xlu0 %1754
      %1756 = vrot.lane.b32.xlu0 %v1206, 96
      %v1757 = vpop.permute.xlu0 %1756
      %1758 = vrot.lane.b32.xlu0 %v1207, 96
      %v1759 = vpop.permute.xlu0 %1758
      %1760 = vrot.lane.b32.xlu0 %v1208, 96
      %v1761 = vpop.permute.xlu0 %1760
      %1762 = vrot.lane.b32.xlu0 %v1209, 96
      %v1763 = vpop.permute.xlu0 %1762
      %1764 = vrot.lane.b32.xlu0 %v1210, 96
      %v1765 = vpop.permute.xlu0 %1764
      %1766 = vrot.lane.b32.xlu0 %v1211, 96
      %v1767 = vpop.permute.xlu0 %1766
      %1768 = vrot.lane.b32.xlu0 %v1212, 96
      %v1769 = vpop.permute.xlu0 %1768
      %1802 = vmatprep.subr.mxu0 0.0
      %1803 = vmatpush1.msra.mxu0 %v1707
      %1804 = vmatprep.subr.mxu0 0.0
      %1805 = vmatpush1.msra.mxu0 %v1709
      %1806 = vmatprep.subr.mxu0 0.0
      %1807 = vmatpush1.msra.mxu0 %v1711
      %1808 = vmatprep.subr.mxu0 0.0
      %1809 = vmatpush1.msra.mxu0 %v1713
      %1810 = vmatprep.subr.mxu0 0.0
      %1811 = vmatpush1.msra.mxu0 %v1715
      %1812 = vmatprep.subr.mxu0 0.0
      %1813 = vmatpush1.msra.mxu0 %v1717
      %1814 = vmatprep.subr.mxu0 0.0
      %1815 = vmatpush1.msra.mxu0 %v1719
      %1816 = vmatprep.subr.mxu0 0.0
      %1817 = vmatpush1.msra.mxu0 %v1721
      %1818 = vmatprep.subr.mxu0 0.0
      %1819 = vmatpush1.msra.mxu0 %v1723
      %1820 = vmatprep.subr.mxu0 0.0
      %1821 = vmatpush1.msra.mxu0 %v1725
      %1822 = vmatprep.subr.mxu0 0.0
      %1823 = vmatpush1.msra.mxu0 %v1727
      %1824 = vmatprep.subr.mxu0 0.0
      %1825 = vmatpush1.msra.mxu0 %v1729
      %1826 = vmatprep.subr.mxu0 0.0
      %1827 = vmatpush1.msra.mxu0 %v1731
      %1828 = vmatprep.subr.mxu0 0.0
      %1829 = vmatpush1.msra.mxu0 %v1733
      %1830 = vmatprep.subr.mxu0 0.0
      %1831 = vmatpush1.msra.mxu0 %v1735
      %1832 = vmatprep.subr.mxu0 0.0
      %1833 = vmatpush1.msra.mxu0 %v1737
      %1834 = vmatprep.subr.mxu0 0.0
      %1835 = vmatpush1.msra.mxu0 %v1739
      %1836 = vmatprep.subr.mxu0 0.0
      %1837 = vmatpush1.msra.mxu0 %v1741
      %1838 = vmatprep.subr.mxu0 0.0
      %1839 = vmatpush1.msra.mxu0 %v1743
      %1840 = vmatprep.subr.mxu0 0.0
      %1841 = vmatpush1.msra.mxu0 %v1745
      %1842 = vmatprep.subr.mxu0 0.0
      %1843 = vmatpush1.msra.mxu0 %v1747
      %1844 = vmatprep.subr.mxu0 0.0
      %1845 = vmatpush1.msra.mxu0 %v1749
      %1846 = vmatprep.subr.mxu0 0.0
      %1847 = vmatpush1.msra.mxu0 %v1751
      %1848 = vmatprep.subr.mxu0 0.0
      %1849 = vmatpush1.msra.mxu0 %v1753
      %1850 = vmatprep.subr.mxu0 0.0
      %1851 = vmatpush1.msra.mxu0 %v1755
      %1852 = vmatprep.subr.mxu0 0.0
      %1853 = vmatpush1.msra.mxu0 %v1757
      %1854 = vmatprep.subr.mxu0 0.0
      %1855 = vmatpush1.msra.mxu0 %v1759
      %1856 = vmatprep.subr.mxu0 0.0
      %1857 = vmatpush1.msra.mxu0 %v1761
      %1858 = vmatprep.subr.mxu0 0.0
      %1859 = vmatpush1.msra.mxu0 %v1763
      %1860 = vmatprep.subr.mxu0 0.0
      %1861 = vmatpush1.msra.mxu0 %v1765
      %1862 = vmatprep.subr.mxu0 0.0
      %1863 = vmatpush1.msra.mxu0 %v1767
      %1864 = vmatprep.subr.mxu0 0.0
      %1865 = vmatpush1.msra.mxu0 %v1769
      %1866 = vmatprep.mubr.f32.mxu0 %v1565
      %1867 = vmatmul.mubr.f32.gmra.mrb[0].mxu0 %v1563
      %v1868 = vpop.f32.mrb[0].mxu0
      %v1869 = vadd.f32 0.0, %v1868
      %v1870 = vpop.f32.mrb[0].mxu0
      %1871 = vmatprep.mubr.f32.mxu0 %v1569
      %1872 = vmatmul.mubr.f32.gmra.mrb[0].mxu0 %v1567
      %v1873 = vpop.f32.mrb[0].mxu0
      %v1874 = vadd.f32 0.0, %v1873
      %v1875 = vpop.f32.mrb[0].mxu0
      %1876 = vmatprep.mubr.f32.mxu0 %v1573
      %1877 = vmatmul.mubr.f32.gmra.mrb[0].mxu0 %v1571
      %v1878 = vpop.f32.mrb[0].mxu0
      %v1879 = vadd.f32 0.0, %v1878
      %v1880 = vpop.f32.mrb[0].mxu0
      %1881 = vmatprep.mubr.f32.mxu0 %v1577
      %1882 = vmatmul.mubr.f32.gmra.mrb[0].mxu0 %v1575
      %v1883 = vpop.f32.mrb[0].mxu0
      %v1884 = vadd.f32 0.0, %v1883
      %v1885 = vpop.f32.mrb[0].mxu0
      %1886 = vmatprep.mubr.f32.mxu0 %v1581
      %1887 = vmatmul.mubr.f32.gmra.mrb[0].mxu0 %v1579
      %v1888 = vpop.f32.mrb[0].mxu0
      %v1889 = vadd.f32 0.0, %v1888
      %v1890 = vpop.f32.mrb[0].mxu0
      %1891 = vmatprep.mubr.f32.mxu0 %v1585
      %1892 = vmatmul.mubr.f32.gmra.mrb[0].mxu0 %v1583
      %v1893 = vpop.f32.mrb[0].mxu0
      %v1894 = vadd.f32 0.0, %v1893
      %v1895 = vpop.f32.mrb[0].mxu0
      %1896 = vmatprep.mubr.f32.mxu0 %v1589
      %1897 = vmatmul.mubr.f32.gmra.mrb[0].mxu0 %v1587
      %v1898 = vpop.f32.mrb[0].mxu0
      %v1899 = vadd.f32 0.0, %v1898
      %v1900 = vpop.f32.mrb[0].mxu0
      %1901 = vmatprep.mubr.f32.mxu0 %v1593
      %1902 = vmatmul.mubr.f32.gmra.mrb[0].mxu0 %v1591
      %v1903 = vpop.f32.mrb[0].mxu0
      %v1904 = vadd.f32 0.0, %v1903
      %v1905 = vpop.f32.mrb[0].mxu0
      %1906 = vmatprep.mubr.f32.mxu0 %v1597
      %1907 = vmatmul.mubr.f32.gmra.mrb[0].mxu0 %v1595
      %v1908 = vpop.f32.mrb[0].mxu0
      %v1909 = vadd.f32 0.0, %v1908
      %v1910 = vpop.f32.mrb[0].mxu0
      %1911 = vmatprep.mubr.f32.mxu0 %v1601
      %1912 = vmatmul.mubr.f32.gmra.mrb[0].mxu0 %v1599
      %v1913 = vpop.f32.mrb[0].mxu0
      %v1914 = vadd.f32 0.0, %v1913
      %v1915 = vpop.f32.mrb[0].mxu0
      %1916 = vmatprep.mubr.f32.mxu0 %v1605
      %1917 = vmatmul.mubr.f32.gmra.mrb[0].mxu0 %v1603
      %v1918 = vpop.f32.mrb[0].mxu0
      %v1919 = vadd.f32 0.0, %v1918
      %v1920 = vpop.f32.mrb[0].mxu0
      %1921 = vmatprep.mubr.f32.mxu0 %v1609
      %1922 = vmatmul.mubr.f32.gmra.mrb[0].mxu0 %v1607
      %v1923 = vpop.f32.mrb[0].mxu0
      %v1924 = vadd.f32 0.0, %v1923
      %v1925 = vpop.f32.mrb[0].mxu0
      %1926 = vmatprep.mubr.f32.mxu0 %v1613
      %1927 = vmatmul.mubr.f32.gmra.mrb[0].mxu0 %v1611
      %v1928 = vpop.f32.mrb[0].mxu0
      %v1929 = vadd.f32 0.0, %v1928
      %v1930 = vpop.f32.mrb[0].mxu0
      %1931 = vmatprep.mubr.f32.mxu0 %v1617
      %1932 = vmatmul.mubr.f32.gmra.mrb[0].mxu0 %v1615
      %v1933 = vpop.f32.mrb[0].mxu0
      %v1934 = vadd.f32 0.0, %v1933
      %v1935 = vpop.f32.mrb[0].mxu0
      %1936 = vmatprep.mubr.f32.mxu0 %v1621
      %1937 = vmatmul.mubr.f32.gmra.mrb[0].mxu0 %v1619
      %v1938 = vpop.f32.mrb[0].mxu0
      %v1939 = vadd.f32 0.0, %v1938
      %v1940 = vpop.f32.mrb[0].mxu0
      %1941 = vmatprep.mubr.f32.mxu0 %v1625
      %1942 = vmatmul.mubr.f32.gmra.mrb[0].mxu0 %v1623
      %v1943 = vpop.f32.mrb[0].mxu0
      %v1944 = vadd.f32 0.0, %v1943
      %v1945 = vpop.f32.mrb[0].mxu0
      %1946 = vdwg.mxu0
      %v1947 = vrcp.pop %v1628
      %v1948 = vrcp.pop %v1631
      %v1949 = vrcp.pop %v1634
      %v1950 = vrcp.pop %v1637
      %v1951 = vrcp.pop %v1640
      %v1952 = vrcp.pop %v1643
      %v1953 = vrcp.pop %v1646
      %v1954 = vrcp.pop %v1649
      %v1955 = vrcp.pop %v1652
      %v1956 = vrcp.pop %v1655
      %v1957 = vrcp.pop %v1658
      %v1958 = vrcp.pop %v1661
      %v1959 = vrcp.pop %v1664
      %v1960 = vrcp.pop %v1667
      %v1961 = vrcp.pop %v1670
      %v1962 = vrcp.pop %v1673
      %v1963 = vmul.f32 %v1869, %v1947
      %v1964 = vmul.f32 %v1874, %v1948
      %v1965 = vmul.f32 %v1879, %v1949
      %v1966 = vmul.f32 %v1884, %v1950
      %v1967 = vmul.f32 %v1889, %v1951
      %v1968 = vmul.f32 %v1894, %v1952
      %v1969 = vmul.f32 %v1899, %v1953
      %v1970 = vmul.f32 %v1904, %v1954
      %v1971 = vmul.f32 %v1909, %v1955
      %v1972 = vmul.f32 %v1914, %v1956
      %v1973 = vmul.f32 %v1919, %v1957
      %v1974 = vmul.f32 %v1924, %v1958
      %v1975 = vmul.f32 %v1929, %v1959
      %v1976 = vmul.f32 %v1934, %v1960
      %v1977 = vmul.f32 %v1939, %v1961
      %v1978 = vmul.f32 %v1944, %v1962
      %1979 = vrot.lane.b32.xlu0 %v1130, 96
      %v1980 = vpop.permute.xlu0 %1979
      %v1982 = vadd.f32 %v1963, %v1980
      %v1983 = vadd.f32 %v1964, %v1980
      %v1984 = vadd.f32 %v1965, %v1980
      %v1985 = vadd.f32 %v1966, %v1980
      %v1986 = vadd.f32 %v1967, %v1980
      %v1987 = vadd.f32 %v1968, %v1980
      %v1988 = vadd.f32 %v1969, %v1980
      %v1989 = vadd.f32 %v1970, %v1980
      %v1990 = vadd.f32 %v1971, %v1980
      %v1991 = vadd.f32 %v1972, %v1980
      %v1992 = vadd.f32 %v1973, %v1980
      %v1993 = vadd.f32 %v1974, %v1980
      %v1994 = vadd.f32 %v1975, %v1980
      %v1995 = vadd.f32 %v1976, %v1980
      %v1996 = vadd.f32 %v1977, %v1980
      %v1997 = vadd.f32 %v1978, %v1980
      %v1998 = vmax.f32 %v1982, 0.0
      %v1999 = vmax.f32 %v1983, 0.0
      %v2000 = vmax.f32 %v1984, 0.0
      %v2001 = vmax.f32 %v1985, 0.0
      %v2002 = vmax.f32 %v1986, 0.0
      %v2003 = vmax.f32 %v1987, 0.0
      %v2004 = vmax.f32 %v1988, 0.0
      %v2005 = vmax.f32 %v1989, 0.0
      %v2006 = vmax.f32 %v1990, 0.0
      %v2007 = vmax.f32 %v1991, 0.0
      %v2008 = vmax.f32 %v1992, 0.0
      %v2009 = vmax.f32 %v1993, 0.0
      %v2010 = vmax.f32 %v1994, 0.0
      %v2011 = vmax.f32 %v1995, 0.0
      %v2012 = vmax.f32 %v1996, 0.0
      %v2013 = vmax.f32 %v1997, 0.0
      %2030 = vrot.lane.b32.xlu0 %v1998, 32
      %v2031 = vpop.permute.xlu0 %2030
      %2032 = vrot.lane.b32.xlu0 %v1999, 32
      %v2033 = vpop.permute.xlu0 %2032
      %2034 = vrot.lane.b32.xlu0 %v2000, 32
      %v2035 = vpop.permute.xlu0 %2034
      %2036 = vrot.lane.b32.xlu0 %v2001, 32
      %v2037 = vpop.permute.xlu0 %2036
      %2038 = vrot.lane.b32.xlu0 %v2002, 32
      %v2039 = vpop.permute.xlu0 %2038
      %2040 = vrot.lane.b32.xlu0 %v2003, 32
      %v2041 = vpop.permute.xlu0 %2040
      %2042 = vrot.lane.b32.xlu0 %v2004, 32
      %v2043 = vpop.permute.xlu0 %2042
      %2044 = vrot.lane.b32.xlu0 %v2005, 32
      %v2045 = vpop.permute.xlu0 %2044
      %2046 = vrot.lane.b32.xlu0 %v2006, 32
      %v2047 = vpop.permute.xlu0 %2046
      %2048 = vrot.lane.b32.xlu0 %v2007, 32
      %v2049 = vpop.permute.xlu0 %2048
      %2050 = vrot.lane.b32.xlu0 %v2008, 32
      %v2051 = vpop.permute.xlu0 %2050
      %2052 = vrot.lane.b32.xlu0 %v2009, 32
      %v2053 = vpop.permute.xlu0 %2052
      %2054 = vrot.lane.b32.xlu0 %v2010, 32
      %v2055 = vpop.permute.xlu0 %2054
      %2056 = vrot.lane.b32.xlu0 %v2011, 32
      %v2057 = vpop.permute.xlu0 %2056
      %2058 = vrot.lane.b32.xlu0 %v2012, 32
      %v2059 = vpop.permute.xlu0 %2058
      %2060 = vrot.lane.b32.xlu0 %v2013, 32
      %v2061 = vpop.permute.xlu0 %2060
      %vm2078 = vcmask 523520
      %2079 = vst.msk [vmem:[%s251] sm:$0xff] %vm2078, %v2031
      %2080 = vst.msk [vmem:[%s251 + $0x8] sm:$0xff] %vm2078, %v2033
      %2081 = vst.msk [vmem:[%s251 + $0x10] sm:$0xff] %vm2078, %v2035
      %2082 = vst.msk [vmem:[%s251 + $0x18] sm:$0xff] %vm2078, %v2037
      %2083 = vst.msk [vmem:[%s251 + $0x20] sm:$0xff] %vm2078, %v2039
      %2084 = vst.msk [vmem:[%s251 + $0x28] sm:$0xff] %vm2078, %v2041
      %2085 = vst.msk [vmem:[%s251 + $0x30] sm:$0xff] %vm2078, %v2043
      %2086 = vst.msk [vmem:[%s251 + $0x38] sm:$0xff] %vm2078, %v2045
      %2087 = vst.msk [vmem:[%s251 + $0x40] sm:$0xff] %vm2078, %v2047
      %2088 = vst.msk [vmem:[%s251 + $0x48] sm:$0xff] %vm2078, %v2049
      %2089 = vst.msk [vmem:[%s251 + $0x50] sm:$0xff] %vm2078, %v2051
      %2090 = vst.msk [vmem:[%s251 + $0x58] sm:$0xff] %vm2078, %v2053
      %2091 = vst.msk [vmem:[%s251 + $0x60] sm:$0xff] %vm2078, %v2055
      %2092 = vst.msk [vmem:[%s251 + $0x68] sm:$0xff] %vm2078, %v2057
      %2093 = vst.msk [vmem:[%s251 + $0x70] sm:$0xff] %vm2078, %v2059
      %2094 = vst.msk [vmem:[%s251 + $0x78] sm:$0xff] %vm2078, %v2061
      %s2095 = smul.u32 16, %s16
      %p2096 = scmp.lt.s32.totalorder %s2095, 31
      %s2097 = scalar_select %p2096, %s2095, 31
      %s2098 = smul.addr %s2097, 8
      %s2099 = scalar_lea.vmem %s5, %s2098
      // Predicated region
      $region41: #{gat_forward.5} parent=39 // pred_check
        %p2100 = pneg %p149
      $region42: #{gat_forward.5} parent=39 // pred_check_branch
        %2102 = sbr.rel (%p2100) target = $region44
      $region43: #{gat_forward.5} parent=39 // pred_region
        %s2103 = smul.u32 16, %s16
      $region44: #{gat_forward.5} parent=39 // pred_fallthru
        _
    $region40: #{gat_forward.5} parent=5 // pred_fallthru
      _
    %p2104 = scmp.le.s32.totalorder 2, %s11
    // Predicated region
    $region45: #{gat_forward.5} parent=5 // pred_check
      %p2105 = pneg %p2104
    $region46: #{gat_forward.5} parent=5 // pred_check_branch
      %2107 = sbr.rel (%p2105) target = $region48
    $region47: #{gat_forward.5} parent=5 // pred_region
      %s2108 = ssub.s32 %s11, 2
      // Predicated region
      $region49: #{gat_forward.5} parent=47 // pred_check
        %p2109 = pneg %p155
      $region50: #{gat_forward.5} parent=47 // pred_check_branch
        %2111 = sbr.rel (%p2109) target = $region52
      $region51: #{gat_forward.5} parent=47 // pred_region
        %s2112 = smul.u32 16, %s17
        %p2113 = scmp.lt.s32.totalorder %s2112, 31
        %s2114 = scalar_select %p2113, %s2112, 31
        %s2115 = smul.addr %s2114, 8
        %s2116 = scalar_lea.vmem %s5, %s2115
      $region52: #{gat_forward.5} parent=47 // pred_fallthru
        _
    $region48: #{gat_forward.5} parent=5 // pred_fallthru
      _
  $region6: #{gat_forward.5} parent=0 // loop_footer
    %s15 = sadd.s32 1, %s11
  $region7: #{gat_forward.5} parent=0 // loop_footer_branch
    %10 = sbr.rel target = $region3
  $region8: #{gat_forward.5} parent=0 // loop_exit
    _

</llo_original>
